<compile_context>
chip_gen: v7x
topology: tpu7x:2x2x1
jax: 0.10.0
libtpu: 0.0.40
codegen_flags: <defaults>
</compile_context>

<pallas_src>
import functools

import jax
import jax.numpy as jnp
from jax.experimental import pallas as pl
from jax.experimental.pallas import tpu as pltpu

LANE = 128


def _round_up(x, m):
    return (x + m - 1) // m * m


def _pad_last(a, target):
    pad = target - a.shape[-1]
    if pad == 0:
        return a
    cfg = [(0, 0)] * (a.ndim - 1) + [(0, pad)]
    return jnp.pad(a, cfg)


def _pad2(a, shape):
    return jnp.pad(a, ((0, shape[0] - a.shape[0]), (0, shape[1] - a.shape[1])))


# ---------------------------------------------------------------------------
# 1x1 conv (pointwise) + BN [+ PReLU] [+ residual]  ==  lane-dense GEMM
# ---------------------------------------------------------------------------
def _pw_kernel(x_ref, w_ref, scale_ref, bias_ref, *rest, with_prelu,
               with_residual):
    """One (tm, Cp) tile of:  prelu((x @ w) * scale + bias) [+ residual].

    x_ref:   (tm, Kp)  bf16 activations (channels on lanes)
    w_ref:   (Kp, Cp)  bf16 weights (constant index_map -> resident panel)
    scale/bias/alpha:  (1, Cp) f32 folded-BN / PReLU params
    res_ref: (tm, Cp)  f32 residual tile (final stage only)
    o_ref:   (tm, Cp)  f32, lane-dense (Cp multiple of 128)
    """
    rest = list(rest)
    o_ref = rest.pop()
    alpha_ref = rest.pop(0) if with_prelu else None
    res_ref = rest.pop(0) if with_residual else None

    acc = jnp.dot(x_ref[...], w_ref[...], preferred_element_type=jnp.float32)
    y = acc * scale_ref[...] + bias_ref[...]
    if with_prelu:
        y = jnp.where(y >= 0.0, y, y * alpha_ref[...])
    if with_residual:
        y = y + res_ref[...]
    o_ref[...] = y.astype(o_ref.dtype)


def _choose_tm(m, kp, cp):
    """Largest M tile (<=1024 rows) whose double-buffered working set fits a
    conservative per-step VMEM budget (safe on v7x's 64 MiB physical VMEM)."""
    budget = 12 * 1024 * 1024
    tm = 1024
    while tm > 128:
        need = (2 * tm * kp * 2        # x tile, bf16, double-buffered
                + 2 * kp * cp * 2      # weight panel, bf16
                + 2 * tm * cp * 4      # residual tile, f32
                + 2 * tm * cp * 4)     # output tile, f32
        if need <= budget:
            break
        tm //= 2
    return max(128, min(tm, _round_up(m, 128)))


def _pw_conv_bn(x2d, wmat, scale, bias, alpha=None, residual=None):
    """x2d: (M, Kp) bf16, wmat: (Kp, Cp) bf16, params (1, Cp) f32 -> (M, Cp) f32.
    Kp, Cp are already padded to multiples of 128 (lane-dense output).
    Note: Kp here is <= a few hundred; for very large K*Cp add a K reduction
    grid axis with a VMEM accumulator (standard P1+P3 tiled-matmul structure).
    """
    m, kp = x2d.shape
    cp = wmat.shape[1]
    with_prelu = alpha is not None
    with_residual = residual is not None

    tm = _choose_tm(m, kp, cp)
    m_pad = _round_up(m, tm)            # pad M instead of shrinking the tile
    if m_pad != m:
        x2d = jnp.pad(x2d, ((0, m_pad - m), (0, 0)))
        if with_residual:
            residual = jnp.pad(residual, ((0, m_pad - m), (0, 0)))

    in_specs = [
        pl.BlockSpec((tm, kp), lambda i: (i, 0)),
        pl.BlockSpec((kp, cp), lambda i: (0, 0)),
        pl.BlockSpec((1, cp), lambda i: (0, 0)),
        pl.BlockSpec((1, cp), lambda i: (0, 0)),
    ]
    args = [x2d, wmat, scale, bias]
    if with_prelu:
        in_specs.append(pl.BlockSpec((1, cp), lambda i: (0, 0)))
        args.append(alpha)
    if with_residual:
        in_specs.append(pl.BlockSpec((tm, cp), lambda i: (i, 0)))
        args.append(residual)

    out = pl.pallas_call(
        functools.partial(_pw_kernel, with_prelu=with_prelu,
                          with_residual=with_residual),
        out_shape=jax.ShapeDtypeStruct((m_pad, cp), jnp.float32),
        grid_spec=pltpu.PrefetchScalarGridSpec(
            num_scalar_prefetch=0,
            grid=(m_pad // tm,),
            in_specs=in_specs,
            out_specs=pl.BlockSpec((tm, cp), lambda i: (i, 0)),
        ),
        compiler_params=pltpu.CompilerParams(
            dimension_semantics=("parallel",),
            vmem_limit_bytes=32 * 1024 * 1024,
        ),
    )(*args)
    return out[:m]


# ---------------------------------------------------------------------------
# Depthwise kxk conv + BN + PReLU: VPU kernel, channels on the 128-lane axis
# ---------------------------------------------------------------------------
def _dw_kernel(x_ref, w_ref, scale_ref, bias_ref, alpha_ref, o_ref,
               *, kh, kw, sh, sw, row_chunk):
    """One (batch, 128-channel) tile of the depthwise conv + BN + PReLU.

    x_ref:  (1, HP, WP, CT) f32, spatially zero-padded input
    w_ref:  (kh*kw, CT)     f32 per-channel taps
    scale/bias/alpha: (1, CT) f32
    o_ref:  (1, OH, OW, CT) f32
    Pure VPU: accumulates kh*kw shifted slices; no MXU, no im2col.
    """
    _, oh, ow, ct = o_ref.shape
    scale = scale_ref[...]                       # (1, CT), broadcasts on lanes
    bias = bias_ref[...]
    alpha = alpha_ref[...]
    w_taps = [w_ref[k:k + 1, :][None] for k in range(kh * kw)]   # (1,1,CT)

    r0 = 0
    while r0 < oh:                               # static row-chunk loop
        rt = min(row_chunk, oh - r0)
        acc = jnp.zeros((rt, ow, ct), jnp.float32)
        for i in range(kh):
            for j in range(kw):
                if sh == 1 and sw == 1:
                    tap = x_ref[0, r0 + i:r0 + i + rt, j:j + ow, :]
                else:
                    rows = x_ref[0, r0 * sh + i:(r0 + rt - 1) * sh + i + 1,
                                 j:j + sw * (ow - 1) + 1, :]
                    tap = rows[::sh, ::sw, :]
                acc = acc + tap * w_taps[i * kw + j]
        y = acc * scale + bias
        y = jnp.where(y >= 0.0, y, y * alpha)
        o_ref[0, r0:r0 + rt, :, :] = y.astype(o_ref.dtype)
        r0 += rt


def _dw_conv_bn_prelu(x_nhwc, wmat, scale, bias, alpha, *, kh, kw, sh, sw,
                      pad_h, pad_w):
    n, h, w, cp = x_nhwc.shape
    oh = (h + 2 * pad_h - kh) // sh + 1
    ow = (w + 2 * pad_w - kw) // sw + 1
    xp = jnp.pad(x_nhwc, ((0, 0), (pad_h, pad_h), (pad_w, pad_w), (0, 0)))
    hp, wp = h + 2 * pad_h, w + 2 * pad_w
    ct = LANE
    # TODO(synk): for large feature maps (e.g. 112x112) add a halo-tiled
    # spatial grid axis instead of streaming one whole image per grid step.
    return pl.pallas_call(
        functools.partial(_dw_kernel, kh=kh, kw=kw, sh=sh, sw=sw, row_chunk=8),
        out_shape=jax.ShapeDtypeStruct((n, oh, ow, cp), jnp.float32),
        grid_spec=pltpu.PrefetchScalarGridSpec(
            num_scalar_prefetch=0,
            grid=(n, cp // ct),
            in_specs=[
                pl.BlockSpec((1, hp, wp, ct), lambda b, c: (b, 0, 0, c)),
                pl.BlockSpec((kh * kw, ct), lambda b, c: (0, c)),
                pl.BlockSpec((1, ct), lambda b, c: (0, c)),
                pl.BlockSpec((1, ct), lambda b, c: (0, c)),
                pl.BlockSpec((1, ct), lambda b, c: (0, c)),
            ],
            out_specs=pl.BlockSpec((1, oh, ow, ct), lambda b, c: (b, 0, 0, c)),
        ),
        compiler_params=pltpu.CompilerParams(
            dimension_semantics=("parallel", "parallel"),
            vmem_limit_bytes=32 * 1024 * 1024,
        ),
    )(xp, wmat, scale, bias, alpha)


# ---------------------------------------------------------------------------
# DWResidual forward
# ---------------------------------------------------------------------------
@functools.partial(jax.jit,
                   static_argnames=("kernel", "stride", "padding", "groups"))
def dw_residual(x,
                w1, g1, b1, m1, v1, a1,      # 1x1 ConvBn + PReLU (in_c->groups)
                w2, g2, b2, m2, v2, a2,      # depthwise kxk ConvBn + PReLU
                w3, g3, b3, m3, v3,          # 1x1 ConvBn (groups->out_c)
                *, kernel=(3, 3), stride=(1, 1), padding=(1, 1), groups=8,
                eps=1e-5):
    """DWResidual forward (eval-mode BN): out = ConvBn(dw-bottleneck)(x) + x.

    x: (N, Cin, H, W) NCHW f32;   returns (N, Cout, H, W) NCHW f32.
    """
    # TODO(synk): training-mode BatchNorm (batch statistics + running-stat
    # updates) is not implemented; this matches module.eval() semantics.
    N, Cin, H, W = x.shape
    Cmid = w1.shape[0]
    Cout = w3.shape[0]
    kh, kw = kernel
    sh, sw = stride
    pad_h, pad_w = padding
    assert w1.shape[0] == groups and w2.shape[0] == groups and w2.shape[1] == 1

    cin_p = _round_up(Cin, LANE)
    cmid_p = _round_up(Cmid, LANE)
    cout_p = _round_up(Cout, LANE)

    # Folded eval-mode BN:  bn(conv(x)) = conv(x) * s + t
    s1 = g1 / jnp.sqrt(v1 + eps); t1 = b1 - m1 * s1
    s2 = g2 / jnp.sqrt(v2 + eps); t2 = b2 - m2 * s2
    s3 = g3 / jnp.sqrt(v3 + eps); t3 = b3 - m3 * s3

    # One NCHW -> NHWC transpose; all internal compute is channels-last.
    x_nhwc = jnp.transpose(x, (0, 2, 3, 1))
    M = N * H * W

    # ---- stage 1: 1x1 ConvBn + PReLU (bf16 MXU GEMM, fused epilogue) ----
    x2d = _pad_last(x_nhwc.reshape(M, Cin), cin_p).astype(jnp.bfloat16)
    w1m = _pad2(w1.reshape(Cmid, Cin).T, (cin_p, cmid_p)).astype(jnp.bfloat16)
    y1 = _pw_conv_bn(
        x2d, w1m,
        _pad_last(s1.reshape(1, -1), cmid_p),
        _pad_last(t1.reshape(1, -1), cmid_p),
        alpha=_pad_last(a1.reshape(1, -1), cmid_p),
    ).reshape(N, H, W, cmid_p)

    # ---- stage 2: depthwise kxk ConvBn + PReLU (VPU, channels on lanes) ----
    w2m = _pad_last(w2.reshape(Cmid, kh * kw).T, cmid_p)        # (kh*kw, Cp)
    y2 = _dw_conv_bn_prelu(
        y1, w2m,
        _pad_last(s2.reshape(1, -1), cmid_p),
        _pad_last(t2.reshape(1, -1), cmid_p),
        _pad_last(a2.reshape(1, -1), cmid_p),
        kh=kh, kw=kw, sh=sh, sw=sw, pad_h=pad_h, pad_w=pad_w,
    )
    OH, OW = y2.shape[1], y2.shape[2]

    # ---- stage 3: 1x1 ConvBn with the identity residual fused in ----
    assert (OH, OW) == (H, W) and Cout == Cin, (
        "DWResidual's `+ x` requires stride (1,1) and out_c == in_c")
    M2 = N * OH * OW
    y2d = y2.reshape(M2, cmid_p).astype(jnp.bfloat16)
    w3m = _pad2(w3.reshape(Cout, Cmid).T, (cmid_p, cout_p)).astype(jnp.bfloat16)
    res = _pad_last(x_nhwc.reshape(M2, Cin), cout_p)            # f32 residual
    y3 = _pw_conv_bn(
        y2d, w3m,
        _pad_last(s3.reshape(1, -1), cout_p),
        _pad_last(t3.reshape(1, -1), cout_p),
        residual=res,
    )
    out = y3[:, :Cout].reshape(N, OH, OW, Cout)
    return jnp.transpose(out, (0, 3, 1, 2))


# ---------------------------------------------------------------------------
# Pure-JAX f32 reference (lax conv) for verification
# ---------------------------------------------------------------------------
def _ref_conv_bn(x, w, g, b, m, v, *, stride=(1, 1), padding=(0, 0), groups=1,
                 eps=1e-5):
    y = jax.lax.conv_general_dilated(
        x, w, window_strides=stride,
        padding=((padding[0], padding[0]), (padding[1], padding[1])),
        dimension_numbers=("NCHW", "OIHW", "NCHW"),
        feature_group_count=groups)
    s = (g / jnp.sqrt(v + eps)).reshape(1, -1, 1, 1)
    t = (b - m * g / jnp.sqrt(v + eps)).reshape(1, -1, 1, 1)
    return y * s + t


def _ref_prelu(x, a):
    return jnp.where(x >= 0, x, x * a.reshape(1, -1, 1, 1))


def _ref_dw_residual(x, params, *, stride, padding, groups):
    (w1, g1, b1, m1, v1, a1, w2, g2, b2, m2, v2, a2,
     w3, g3, b3, m3, v3) = params
    y = _ref_prelu(_ref_conv_bn(x, w1, g1, b1, m1, v1), a1)
    y = _ref_prelu(_ref_conv_bn(y, w2, g2, b2, m2, v2, stride=stride,
                                padding=padding, groups=groups), a2)
    y = _ref_conv_bn(y, w3, g3, b3, m3, v3)
    return y + x


if __name__ == "__main__":
    key = jax.random.PRNGKey(0)
    N, C, H, W = 2, 4, 16, 16            # in_c == out_c (required by `+ x`)
    groups = 8                            # bottleneck width of DWResidual
    kernel, stride, padding = (3, 3), (1, 1), (1, 1)

    ks = list(jax.random.split(key, 9))
    x = jax.random.normal(ks[0], (N, C, H, W), jnp.float32)

    def bn_params(k, c):
        k1, k2, k3, k4 = jax.random.split(k, 4)
        g = 1.0 + 0.1 * jax.random.normal(k1, (c,), jnp.float32)
        b = 0.1 * jax.random.normal(k2, (c,), jnp.float32)
        m = 0.1 * jax.random.normal(k3, (c,), jnp.float32)
        v = jax.nn.softplus(jax.random.normal(k4, (c,), jnp.float32)) + 0.5
        return g, b, m, v

    w1 = 0.2 * jax.random.normal(ks[1], (groups, C, 1, 1), jnp.float32)
    g1, b1, m1, v1 = bn_params(ks[2], groups)
    a1 = 0.25 + 0.05 * jax.random.normal(ks[3], (groups,), jnp.float32)

    w2 = 0.2 * jax.random.normal(ks[4], (groups, 1, *kernel), jnp.float32)
    g2, b2, m2, v2 = bn_params(ks[5], groups)
    a2 = 0.25 + 0.05 * jax.random.normal(ks[6], (groups,), jnp.float32)

    w3 = 0.2 * jax.random.normal(ks[7], (C, groups, 1, 1), jnp.float32)
    g3, b3, m3, v3 = bn_params(ks[8], C)

    out = dw_residual(x,
                      w1, g1, b1, m1, v1, a1,
                      w2, g2, b2, m2, v2, a2,
                      w3, g3, b3, m3, v3,
                      kernel=kernel, stride=stride, padding=padding,
                      groups=groups)
    out = jax.block_until_ready(out)

    ref = _ref_dw_residual(
        x, (w1, g1, b1, m1, v1, a1, w2, g2, b2, m2, v2, a2,
            w3, g3, b3, m3, v3),
        stride=stride, padding=padding, groups=groups)

    assert out.shape == (N, C, H, W), out.shape
    # bf16 MXU inputs with f32 accumulation -> looser tolerance vs f32 reference
    assert jnp.allclose(out, ref, atol=5e-2, rtol=5e-2), float(
        jnp.abs(out - ref).max())
    print("KERNEL_OK")
</pallas_src>

<mosaic_0001>
module attributes {stable_mosaic.version = 11 : i64} {
  func.func @_pw_kernel(%arg0: i32, %arg1: memref<512x128xbf16, #tpu.memory_space<vmem>>, %arg2: memref<128x128xbf16, #tpu.memory_space<vmem>>, %arg3: memref<1x128xf32, #tpu.memory_space<vmem>>, %arg4: memref<1x128xf32, #tpu.memory_space<vmem>>, %arg5: memref<1x128xf32, #tpu.memory_space<vmem>>, %arg6: memref<512x128xf32, #tpu.memory_space<vmem>>) attributes {dimension_semantics = [#tpu.dimension_semantics<parallel>], iteration_bounds = array<i64: 1>, scalar_prefetch = 0 : i64, scratch_operands = 0 : i64, tpu.core_type = #tpu.core_type<tc>, window_params = [{transform_indices = @transform_0, window_bounds = array<i64: 512, 128>}, {pipeline_mode = #tpu.pipeline_mode<synchronous>, transform_indices = @transform_1, window_bounds = array<i64: 128, 128>}, {pipeline_mode = #tpu.pipeline_mode<synchronous>, transform_indices = @transform_2, window_bounds = array<i64: 1, 128>}, {pipeline_mode = #tpu.pipeline_mode<synchronous>, transform_indices = @transform_3, window_bounds = array<i64: 1, 128>}, {pipeline_mode = #tpu.pipeline_mode<synchronous>, transform_indices = @transform_4, window_bounds = array<i64: 1, 128>}, {transform_indices = @transform_5, window_bounds = array<i64: 512, 128>}]} {
    %c0 = arith.constant 0 : index
    %c0_0 = arith.constant 0 : index
    %0 = vector.load %arg1[%c0, %c0_0] : memref<512x128xbf16, #tpu.memory_space<vmem>>, vector<512x128xbf16>
    %c0_1 = arith.constant 0 : index
    %c0_2 = arith.constant 0 : index
    %1 = vector.load %arg2[%c0_1, %c0_2] : memref<128x128xbf16, #tpu.memory_space<vmem>>, vector<128x128xbf16>
    %cst = arith.constant dense<0.000000e+00> : vector<512x128xf32>
    %2 = tpu.matmul %0, %1, %cst {dimension_numbers = #tpu.dot_dimension_numbers<[1], [0], [0], [1], [0, 0, 1, 1], [], []>} : vector<512x128xbf16>, vector<128x128xbf16>, vector<512x128xf32> -> vector<512x128xf32>
    %c0_3 = arith.constant 0 : index
    %c0_4 = arith.constant 0 : index
    %3 = vector.load %arg3[%c0_3, %c0_4] : memref<1x128xf32, #tpu.memory_space<vmem>>, vector<1x128xf32>
    %4 = vector.broadcast %3 : vector<1x128xf32> to vector<512x128xf32>
    %5 = arith.mulf %2, %4 : vector<512x128xf32>
    %c0_5 = arith.constant 0 : index
    %c0_6 = arith.constant 0 : index
    %6 = vector.load %arg4[%c0_5, %c0_6] : memref<1x128xf32, #tpu.memory_space<vmem>>, vector<1x128xf32>
    %7 = vector.broadcast %6 : vector<1x128xf32> to vector<512x128xf32>
    %8 = arith.addf %5, %7 : vector<512x128xf32>
    %cst_7 = arith.constant 0.000000e+00 : f32
    %9 = vector.broadcast %cst_7 : f32 to vector<512x128xf32>
    %10 = arith.cmpf oge, %8, %9 : vector<512x128xf32>
    %c0_8 = arith.constant 0 : index
    %c0_9 = arith.constant 0 : index
    %11 = vector.load %arg5[%c0_8, %c0_9] : memref<1x128xf32, #tpu.memory_space<vmem>>, vector<1x128xf32>
    %12 = vector.broadcast %11 : vector<1x128xf32> to vector<512x128xf32>
    %13 = arith.mulf %8, %12 : vector<512x128xf32>
    %14 = arith.select %10, %8, %13 : vector<512x128xi1>, vector<512x128xf32>
    %c0_10 = arith.constant 0 : index
    %c0_11 = arith.constant 0 : index
    %15 = vector.load %arg6[%c0_10, %c0_11] : memref<512x128xf32, #tpu.memory_space<vmem>>, vector<512x128xf32>
    tpu.vector_store %arg6[%c0_10, %c0_11], %14 {strides = array<i32>} : memref<512x128xf32, #tpu.memory_space<vmem>>, vector<512x128xf32>,
    return
  }
  func.func @transform_0(%arg0: i32) -> (i32, i32) {
    %c0_i32 = arith.constant 0 : i32
    %c0_i32_0 = arith.constant 0 : i32
    return %arg0, %c0_i32 : i32, i32
  }
  func.func @transform_1(%arg0: i32) -> (i32, i32) {
    %c0_i32 = arith.constant 0 : i32
    %c0_i32_0 = arith.constant 0 : i32
    %c0_i32_1 = arith.constant 0 : i32
    return %c0_i32, %c0_i32_0 : i32, i32
  }
  func.func @transform_2(%arg0: i32) -> (i32, i32) {
    %c0_i32 = arith.constant 0 : i32
    %c0_i32_0 = arith.constant 0 : i32
    %c0_i32_1 = arith.constant 0 : i32
    return %c0_i32, %c0_i32_0 : i32, i32
  }
  func.func @transform_3(%arg0: i32) -> (i32, i32) {
    %c0_i32 = arith.constant 0 : i32
    %c0_i32_0 = arith.constant 0 : i32
    %c0_i32_1 = arith.constant 0 : i32
    return %c0_i32, %c0_i32_0 : i32, i32
  }
  func.func @transform_4(%arg0: i32) -> (i32, i32) {
    %c0_i32 = arith.constant 0 : i32
    %c0_i32_0 = arith.constant 0 : i32
    %c0_i32_1 = arith.constant 0 : i32
    return %c0_i32, %c0_i32_0 : i32, i32
  }
  func.func @transform_5(%arg0: i32) -> (i32, i32) {
    %c0_i32 = arith.constant 0 : i32
    %c0_i32_0 = arith.constant 0 : i32
    return %arg0, %c0_i32 : i32, i32
  }
}

module attributes {stable_mosaic.version = 11 : i64} {
  func.func @_dw_kernel(%arg0: i32, %arg1: i32, %arg2: memref<1x18x18x128xf32, #tpu.memory_space<vmem>>, %arg3: memref<9x128xf32, #tpu.memory_space<vmem>>, %arg4: memref<1x128xf32, #tpu.memory_space<vmem>>, %arg5: memref<1x128xf32, #tpu.memory_space<vmem>>, %arg6: memref<1x128xf32, #tpu.memory_space<vmem>>, %arg7: memref<1x16x16x128xf32, #tpu.memory_space<vmem>>) attributes {dimension_semantics = [#tpu.dimension_semantics<parallel>, #tpu.dimension_semantics<parallel>], iteration_bounds = array<i64: 2, 1>, scalar_prefetch = 0 : i64, scratch_operands = 0 : i64, tpu.core_type = #tpu.core_type<tc>, window_params = [{transform_indices = @transform_0, window_bounds = array<i64: 1, 18, 18, 128>}, {transform_indices = @transform_1, window_bounds = array<i64: 9, 128>}, {transform_indices = @transform_2, window_bounds = array<i64: 1, 128>}, {transform_indices = @transform_3, window_bounds = array<i64: 1, 128>}, {transform_indices = @transform_4, window_bounds = array<i64: 1, 128>}, {transform_indices = @transform_5, window_bounds = array<i64: 1, 16, 16, 128>}]} {
    %c0 = arith.constant 0 : index
    %c0_0 = arith.constant 0 : index
    %0 = vector.load %arg4[%c0, %c0_0] : memref<1x128xf32, #tpu.memory_space<vmem>>, vector<1x128xf32>
    %c0_1 = arith.constant 0 : index
    %c0_2 = arith.constant 0 : index
    %1 = vector.load %arg5[%c0_1, %c0_2] : memref<1x128xf32, #tpu.memory_space<vmem>>, vector<1x128xf32>
    %c0_3 = arith.constant 0 : index
    %c0_4 = arith.constant 0 : index
    %2 = vector.load %arg6[%c0_3, %c0_4] : memref<1x128xf32, #tpu.memory_space<vmem>>, vector<1x128xf32>
    %c0_5 = arith.constant 0 : index
    %c0_6 = arith.constant 0 : index
    %3 = vector.load %arg3[%c0_5, %c0_6] : memref<9x128xf32, #tpu.memory_space<vmem>>, vector<1x128xf32>
    %4 = vector.shape_cast %3 : vector<1x128xf32> to vector<1x1x128xf32>
    %c1 = arith.constant 1 : index
    %c0_7 = arith.constant 0 : index
    %5 = vector.load %arg3[%c1, %c0_7] : memref<9x128xf32, #tpu.memory_space<vmem>>, vector<1x128xf32>
    %6 = vector.shape_cast %5 : vector<1x128xf32> to vector<1x1x128xf32>
    %c2 = arith.constant 2 : index
    %c0_8 = arith.constant 0 : index
    %7 = vector.load %arg3[%c2, %c0_8] : memref<9x128xf32, #tpu.memory_space<vmem>>, vector<1x128xf32>
    %8 = vector.shape_cast %7 : vector<1x128xf32> to vector<1x1x128xf32>
    %c3 = arith.constant 3 : index
    %c0_9 = arith.constant 0 : index
    %9 = vector.load %arg3[%c3, %c0_9] : memref<9x128xf32, #tpu.memory_space<vmem>>, vector<1x128xf32>
    %10 = vector.shape_cast %9 : vector<1x128xf32> to vector<1x1x128xf32>
    %c4 = arith.constant 4 : index
    %c0_10 = arith.constant 0 : index
    %11 = vector.load %arg3[%c4, %c0_10] : memref<9x128xf32, #tpu.memory_space<vmem>>, vector<1x128xf32>
    %12 = vector.shape_cast %11 : vector<1x128xf32> to vector<1x1x128xf32>
    %c5 = arith.constant 5 : index
    %c0_11 = arith.constant 0 : index
    %13 = vector.load %arg3[%c5, %c0_11] : memref<9x128xf32, #tpu.memory_space<vmem>>, vector<1x128xf32>
    %14 = vector.shape_cast %13 : vector<1x128xf32> to vector<1x1x128xf32>
    %c6 = arith.constant 6 : index
    %c0_12 = arith.constant 0 : index
    %15 = vector.load %arg3[%c6, %c0_12] : memref<9x128xf32, #tpu.memory_space<vmem>>, vector<1x128xf32>
    %16 = vector.shape_cast %15 : vector<1x128xf32> to vector<1x1x128xf32>
    %c7 = arith.constant 7 : index
    %c0_13 = arith.constant 0 : index
    %17 = vector.load %arg3[%c7, %c0_13] : memref<9x128xf32, #tpu.memory_space<vmem>>, vector<1x128xf32>
    %18 = vector.shape_cast %17 : vector<1x128xf32> to vector<1x1x128xf32>
    %c8 = arith.constant 8 : index
    %c0_14 = arith.constant 0 : index
    %19 = vector.load %arg3[%c8, %c0_14] : memref<9x128xf32, #tpu.memory_space<vmem>>, vector<1x128xf32>
    %20 = vector.shape_cast %19 : vector<1x128xf32> to vector<1x1x128xf32>
    %cst = arith.constant 0.000000e+00 : f32
    %21 = vector.broadcast %cst : f32 to vector<8x16x128xf32>
    %c0_15 = arith.constant 0 : index
    %c0_16 = arith.constant 0 : index
    %c0_17 = arith.constant 0 : index
    %c0_18 = arith.constant 0 : index
    %22 = vector.load %arg2[%c0_15, %c0_16, %c0_17, %c0_18] : memref<1x18x18x128xf32, #tpu.memory_space<vmem>>, vector<1x8x16x128xf32>
    %23 = vector.shape_cast %22 : vector<1x8x16x128xf32> to vector<8x16x128xf32>
    %24 = vector.broadcast %4 : vector<1x1x128xf32> to vector<8x16x128xf32>
    %25 = arith.mulf %23, %24 : vector<8x16x128xf32>
    %26 = arith.addf %21, %25 : vector<8x16x128xf32>
    %c0_19 = arith.constant 0 : index
    %c0_20 = arith.constant 0 : index
    %c1_21 = arith.constant 1 : index
    %c0_22 = arith.constant 0 : index
    %27 = vector.load %arg2[%c0_19, %c0_20, %c1_21, %c0_22] : memref<1x18x18x128xf32, #tpu.memory_space<vmem>>, vector<1x8x16x128xf32>
    %28 = vector.shape_cast %27 : vector<1x8x16x128xf32> to vector<8x16x128xf32>
    %29 = vector.broadcast %6 : vector<1x1x128xf32> to vector<8x16x128xf32>
    %30 = arith.mulf %28, %29 : vector<8x16x128xf32>
    %31 = arith.addf %26, %30 : vector<8x16x128xf32>
    %c0_23 = arith.constant 0 : index
    %c0_24 = arith.constant 0 : index
    %c2_25 = arith.constant 2 : index
    %c0_26 = arith.constant 0 : index
    %32 = vector.load %arg2[%c0_23, %c0_24, %c2_25, %c0_26] : memref<1x18x18x128xf32, #tpu.memory_space<vmem>>, vector<1x8x16x128xf32>
    %33 = vector.shape_cast %32 : vector<1x8x16x128xf32> to vector<8x16x128xf32>
    %34 = vector.broadcast %8 : vector<1x1x128xf32> to vector<8x16x128xf32>
    %35 = arith.mulf %33, %34 : vector<8x16x128xf32>
    %36 = arith.addf %31, %35 : vector<8x16x128xf32>
    %c0_27 = arith.constant 0 : index
    %c1_28 = arith.constant 1 : index
    %c0_29 = arith.constant 0 : index
    %c0_30 = arith.constant 0 : index
    %37 = vector.load %arg2[%c0_27, %c1_28, %c0_29, %c0_30] : memref<1x18x18x128xf32, #tpu.memory_space<vmem>>, vector<1x8x16x128xf32>
    %38 = vector.shape_cast %37 : vector<1x8x16x128xf32> to vector<8x16x128xf32>
    %39 = vector.broadcast %10 : vector<1x1x128xf32> to vector<8x16x128xf32>
    %40 = arith.mulf %38, %39 : vector<8x16x128xf32>
    %41 = arith.addf %36, %40 : vector<8x16x128xf32>
    %c0_31 = arith.constant 0 : index
    %c1_32 = arith.constant 1 : index
    %c1_33 = arith.constant 1 : index
    %c0_34 = arith.constant 0 : index
    %42 = vector.load %arg2[%c0_31, %c1_32, %c1_33, %c0_34] : memref<1x18x18x128xf32, #tpu.memory_space<vmem>>, vector<1x8x16x128xf32>
    %43 = vector.shape_cast %42 : vector<1x8x16x128xf32> to vector<8x16x128xf32>
    %44 = vector.broadcast %12 : vector<1x1x128xf32> to vector<8x16x128xf32>
    %45 = arith.mulf %43, %44 : vector<8x16x128xf32>
    %46 = arith.addf %41, %45 : vector<8x16x128xf32>
    %c0_35 = arith.constant 0 : index
    %c1_36 = arith.constant 1 : index
    %c2_37 = arith.constant 2 : index
    %c0_38 = arith.constant 0 : index
    %47 = vector.load %arg2[%c0_35, %c1_36, %c2_37, %c0_38] : memref<1x18x18x128xf32, #tpu.memory_space<vmem>>, vector<1x8x16x128xf32>
    %48 = vector.shape_cast %47 : vector<1x8x16x128xf32> to vector<8x16x128xf32>
    %49 = vector.broadcast %14 : vector<1x1x128xf32> to vector<8x16x128xf32>
    %50 = arith.mulf %48, %49 : vector<8x16x128xf32>
    %51 = arith.addf %46, %50 : vector<8x16x128xf32>
    %c0_39 = arith.constant 0 : index
    %c2_40 = arith.constant 2 : index
    %c0_41 = arith.constant 0 : index
    %c0_42 = arith.constant 0 : index
    %52 = vector.load %arg2[%c0_39, %c2_40, %c0_41, %c0_42] : memref<1x18x18x128xf32, #tpu.memory_space<vmem>>, vector<1x8x16x128xf32>
    %53 = vector.shape_cast %52 : vector<1x8x16x128xf32> to vector<8x16x128xf32>
    %54 = vector.broadcast %16 : vector<1x1x128xf32> to vector<8x16x128xf32>
    %55 = arith.mulf %53, %54 : vector<8x16x128xf32>
    %56 = arith.addf %51, %55 : vector<8x16x128xf32>
    %c0_43 = arith.constant 0 : index
    %c2_44 = arith.constant 2 : index
    %c1_45 = arith.constant 1 : index
    %c0_46 = arith.constant 0 : index
    %57 = vector.load %arg2[%c0_43, %c2_44, %c1_45, %c0_46] : memref<1x18x18x128xf32, #tpu.memory_space<vmem>>, vector<1x8x16x128xf32>
    %58 = vector.shape_cast %57 : vector<1x8x16x128xf32> to vector<8x16x128xf32>
    %59 = vector.broadcast %18 : vector<1x1x128xf32> to vector<8x16x128xf32>
    %60 = arith.mulf %58, %59 : vector<8x16x128xf32>
    %61 = arith.addf %56, %60 : vector<8x16x128xf32>
    %c0_47 = arith.constant 0 : index
    %c2_48 = arith.constant 2 : index
    %c2_49 = arith.constant 2 : index
    %c0_50 = arith.constant 0 : index
    %62 = vector.load %arg2[%c0_47, %c2_48, %c2_49, %c0_50] : memref<1x18x18x128xf32, #tpu.memory_space<vmem>>, vector<1x8x16x128xf32>
    %63 = vector.shape_cast %62 : vector<1x8x16x128xf32> to vector<8x16x128xf32>
    %64 = vector.broadcast %20 : vector<1x1x128xf32> to vector<8x16x128xf32>
    %65 = arith.mulf %63, %64 : vector<8x16x128xf32>
    %66 = arith.addf %61, %65 : vector<8x16x128xf32>
    %67 = vector.shape_cast %0 : vector<1x128xf32> to vector<1x1x128xf32>
    %68 = vector.broadcast %67 : vector<1x1x128xf32> to vector<8x16x128xf32>
    %69 = arith.mulf %66, %68 : vector<8x16x128xf32>
    %70 = vector.shape_cast %1 : vector<1x128xf32> to vector<1x1x128xf32>
    %71 = vector.broadcast %70 : vector<1x1x128xf32> to vector<8x16x128xf32>
    %72 = arith.addf %69, %71 : vector<8x16x128xf32>
    %cst_51 = arith.constant 0.000000e+00 : f32
    %73 = vector.broadcast %cst_51 : f32 to vector<8x16x128xf32>
    %74 = arith.cmpf oge, %72, %73 : vector<8x16x128xf32>
    %75 = vector.shape_cast %2 : vector<1x128xf32> to vector<1x1x128xf32>
    %76 = vector.broadcast %75 : vector<1x1x128xf32> to vector<8x16x128xf32>
    %77 = arith.mulf %72, %76 : vector<8x16x128xf32>
    %78 = arith.select %74, %72, %77 : vector<8x16x128xi1>, vector<8x16x128xf32>
    %c0_52 = arith.constant 0 : index
    %c0_53 = arith.constant 0 : index
    %c0_54 = arith.constant 0 : index
    %c0_55 = arith.constant 0 : index
    %79 = vector.load %arg7[%c0_52, %c0_53, %c0_54, %c0_55] : memref<1x16x16x128xf32, #tpu.memory_space<vmem>>, vector<1x8x16x128xf32>
    %80 = vector.shape_cast %79 : vector<1x8x16x128xf32> to vector<8x16x128xf32>
    %81 = vector.shape_cast %78 : vector<8x16x128xf32> to vector<1x8x16x128xf32>
    tpu.vector_store %arg7[%c0_52, %c0_53, %c0_54, %c0_55], %81 {strides = array<i32>} : memref<1x16x16x128xf32, #tpu.memory_space<vmem>>, vector<1x8x16x128xf32>,
    %cst_56 = arith.constant 0.000000e+00 : f32
    %82 = vector.broadcast %cst_56 : f32 to vector<8x16x128xf32>
    %c0_57 = arith.constant 0 : index
    %c8_58 = arith.constant 8 : index
    %c0_59 = arith.constant 0 : index
    %c0_60 = arith.constant 0 : index
    %83 = vector.load %arg2[%c0_57, %c8_58, %c0_59, %c0_60] : memref<1x18x18x128xf32, #tpu.memory_space<vmem>>, vector<1x8x16x128xf32>
    %84 = vector.shape_cast %83 : vector<1x8x16x128xf32> to vector<8x16x128xf32>
    %85 = vector.broadcast %4 : vector<1x1x128xf32> to vector<8x16x128xf32>
    %86 = arith.mulf %84, %85 : vector<8x16x128xf32>
    %87 = arith.addf %82, %86 : vector<8x16x128xf32>
    %c0_61 = arith.constant 0 : index
    %c8_62 = arith.constant 8 : index
    %c1_63 = arith.constant 1 : index
    %c0_64 = arith.constant 0 : index
    %88 = vector.load %arg2[%c0_61, %c8_62, %c1_63, %c0_64] : memref<1x18x18x128xf32, #tpu.memory_space<vmem>>, vector<1x8x16x128xf32>
    %89 = vector.shape_cast %88 : vector<1x8x16x128xf32> to vector<8x16x128xf32>
    %90 = vector.broadcast %6 : vector<1x1x128xf32> to vector<8x16x128xf32>
    %91 = arith.mulf %89, %90 : vector<8x16x128xf32>
    %92 = arith.addf %87, %91 : vector<8x16x128xf32>
    %c0_65 = arith.constant 0 : index
    %c8_66 = arith.constant 8 : index
    %c2_67 = arith.constant 2 : index
    %c0_68 = arith.constant 0 : index
    %93 = vector.load %arg2[%c0_65, %c8_66, %c2_67, %c0_68] : memref<1x18x18x128xf32, #tpu.memory_space<vmem>>, vector<1x8x16x128xf32>
    %94 = vector.shape_cast %93 : vector<1x8x16x128xf32> to vector<8x16x128xf32>
    %95 = vector.broadcast %8 : vector<1x1x128xf32> to vector<8x16x128xf32>
    %96 = arith.mulf %94, %95 : vector<8x16x128xf32>
    %97 = arith.addf %92, %96 : vector<8x16x128xf32>
    %c0_69 = arith.constant 0 : index
    %c9 = arith.constant 9 : index
    %c0_70 = arith.constant 0 : index
    %c0_71 = arith.constant 0 : index
    %98 = vector.load %arg2[%c0_69, %c9, %c0_70, %c0_71] : memref<1x18x18x128xf32, #tpu.memory_space<vmem>>, vector<1x8x16x128xf32>
    %99 = vector.shape_cast %98 : vector<1x8x16x128xf32> to vector<8x16x128xf32>
    %100 = vector.broadcast %10 : vector<1x1x128xf32> to vector<8x16x128xf32>
    %101 = arith.mulf %99, %100 : vector<8x16x128xf32>
    %102 = arith.addf %97, %101 : vector<8x16x128xf32>
    %c0_72 = arith.constant 0 : index
    %c9_73 = arith.constant 9 : index
    %c1_74 = arith.constant 1 : index
    %c0_75 = arith.constant 0 : index
    %103 = vector.load %arg2[%c0_72, %c9_73, %c1_74, %c0_75] : memref<1x18x18x128xf32, #tpu.memory_space<vmem>>, vector<1x8x16x128xf32>
    %104 = vector.shape_cast %103 : vector<1x8x16x128xf32> to vector<8x16x128xf32>
    %105 = vector.broadcast %12 : vector<1x1x128xf32> to vector<8x16x128xf32>
    %106 = arith.mulf %104, %105 : vector<8x16x128xf32>
    %107 = arith.addf %102, %106 : vector<8x16x128xf32>
    %c0_76 = arith.constant 0 : index
    %c9_77 = arith.constant 9 : index
    %c2_78 = arith.constant 2 : index
    %c0_79 = arith.constant 0 : index
    %108 = vector.load %arg2[%c0_76, %c9_77, %c2_78, %c0_79] : memref<1x18x18x128xf32, #tpu.memory_space<vmem>>, vector<1x8x16x128xf32>
    %109 = vector.shape_cast %108 : vector<1x8x16x128xf32> to vector<8x16x128xf32>
    %110 = vector.broadcast %14 : vector<1x1x128xf32> to vector<8x16x128xf32>
    %111 = arith.mulf %109, %110 : vector<8x16x128xf32>
    %112 = arith.addf %107, %111 : vector<8x16x128xf32>
    %c0_80 = arith.constant 0 : index
    %c10 = arith.constant 10 : index
    %c0_81 = arith.constant 0 : index
    %c0_82 = arith.constant 0 : index
    %113 = vector.load %arg2[%c0_80, %c10, %c0_81, %c0_82] : memref<1x18x18x128xf32, #tpu.memory_space<vmem>>, vector<1x8x16x128xf32>
    %114 = vector.shape_cast %113 : vector<1x8x16x128xf32> to vector<8x16x128xf32>
    %115 = vector.broadcast %16 : vector<1x1x128xf32> to vector<8x16x128xf32>
    %116 = arith.mulf %114, %115 : vector<8x16x128xf32>
    %117 = arith.addf %112, %116 : vector<8x16x128xf32>
    %c0_83 = arith.constant 0 : index
    %c10_84 = arith.constant 10 : index
    %c1_85 = arith.constant 1 : index
    %c0_86 = arith.constant 0 : index
    %118 = vector.load %arg2[%c0_83, %c10_84, %c1_85, %c0_86] : memref<1x18x18x128xf32, #tpu.memory_space<vmem>>, vector<1x8x16x128xf32>
    %119 = vector.shape_cast %118 : vector<1x8x16x128xf32> to vector<8x16x128xf32>
    %120 = vector.broadcast %18 : vector<1x1x128xf32> to vector<8x16x128xf32>
    %121 = arith.mulf %119, %120 : vector<8x16x128xf32>
    %122 = arith.addf %117, %121 : vector<8x16x128xf32>
    %c0_87 = arith.constant 0 : index
    %c10_88 = arith.constant 10 : index
    %c2_89 = arith.constant 2 : index
    %c0_90 = arith.constant 0 : index
    %123 = vector.load %arg2[%c0_87, %c10_88, %c2_89, %c0_90] : memref<1x18x18x128xf32, #tpu.memory_space<vmem>>, vector<1x8x16x128xf32>
    %124 = vector.shape_cast %123 : vector<1x8x16x128xf32> to vector<8x16x128xf32>
    %125 = vector.broadcast %20 : vector<1x1x128xf32> to vector<8x16x128xf32>
    %126 = arith.mulf %124, %125 : vector<8x16x128xf32>
    %127 = arith.addf %122, %126 : vector<8x16x128xf32>
    %128 = vector.shape_cast %0 : vector<1x128xf32> to vector<1x1x128xf32>
    %129 = vector.broadcast %128 : vector<1x1x128xf32> to vector<8x16x128xf32>
    %130 = arith.mulf %127, %129 : vector<8x16x128xf32>
    %131 = vector.shape_cast %1 : vector<1x128xf32> to vector<1x1x128xf32>
    %132 = vector.broadcast %131 : vector<1x1x128xf32> to vector<8x16x128xf32>
    %133 = arith.addf %130, %132 : vector<8x16x128xf32>
    %cst_91 = arith.constant 0.000000e+00 : f32
    %134 = vector.broadcast %cst_91 : f32 to vector<8x16x128xf32>
    %135 = arith.cmpf oge, %133, %134 : vector<8x16x128xf32>
    %136 = vector.shape_cast %2 : vector<1x128xf32> to vector<1x1x128xf32>
    %137 = vector.broadcast %136 : vector<1x1x128xf32> to vector<8x16x128xf32>
    %138 = arith.mulf %133, %137 : vector<8x16x128xf32>
    %139 = arith.select %135, %133, %138 : vector<8x16x128xi1>, vector<8x16x128xf32>
    %c0_92 = arith.constant 0 : index
    %c8_93 = arith.constant 8 : index
    %c0_94 = arith.constant 0 : index
    %c0_95 = arith.constant 0 : index
    %140 = vector.load %arg7[%c0_92, %c8_93, %c0_94, %c0_95] : memref<1x16x16x128xf32, #tpu.memory_space<vmem>>, vector<1x8x16x128xf32>
    %141 = vector.shape_cast %140 : vector<1x8x16x128xf32> to vector<8x16x128xf32>
    %142 = vector.shape_cast %139 : vector<8x16x128xf32> to vector<1x8x16x128xf32>
    tpu.vector_store %arg7[%c0_92, %c8_93, %c0_94, %c0_95], %142 {strides = array<i32>} : memref<1x16x16x128xf32, #tpu.memory_space<vmem>>, vector<1x8x16x128xf32>,
    return
  }
  func.func @transform_0(%arg0: i32, %arg1: i32) -> (i32, i32, i32, i32) {
    %c0_i32 = arith.constant 0 : i32
    %c0_i32_0 = arith.constant 0 : i32
    %c0_i32_1 = arith.constant 0 : i32
    return %arg0, %c0_i32, %c0_i32_0, %arg1 : i32, i32, i32, i32
  }
  func.func @transform_1(%arg0: i32, %arg1: i32) -> (i32, i32) {
    %c0_i32 = arith.constant 0 : i32
    %c0_i32_0 = arith.constant 0 : i32
    return %c0_i32, %arg1 : i32, i32
  }
  func.func @transform_2(%arg0: i32, %arg1: i32) -> (i32, i32) {
    %c0_i32 = arith.constant 0 : i32
    %c0_i32_0 = arith.constant 0 : i32
    return %c0_i32, %arg1 : i32, i32
  }
  func.func @transform_3(%arg0: i32, %arg1: i32) -> (i32, i32) {
    %c0_i32 = arith.constant 0 : i32
    %c0_i32_0 = arith.constant 0 : i32
    return %c0_i32, %arg1 : i32, i32
  }
  func.func @transform_4(%arg0: i32, %arg1: i32) -> (i32, i32) {
    %c0_i32 = arith.constant 0 : i32
    %c0_i32_0 = arith.constant 0 : i32
    return %c0_i32, %arg1 : i32, i32
  }
  func.func @transform_5(%arg0: i32, %arg1: i32) -> (i32, i32, i32, i32) {
    %c0_i32 = arith.constant 0 : i32
    %c0_i32_0 = arith.constant 0 : i32
    %c0_i32_1 = arith.constant 0 : i32
    return %arg0, %c0_i32, %c0_i32_0, %arg1 : i32, i32, i32, i32
  }
}

module attributes {stable_mosaic.version = 11 : i64} {
  func.func @_pw_kernel(%arg0: i32, %arg1: memref<512x128xbf16, #tpu.memory_space<vmem>>, %arg2: memref<128x128xbf16, #tpu.memory_space<vmem>>, %arg3: memref<1x128xf32, #tpu.memory_space<vmem>>, %arg4: memref<1x128xf32, #tpu.memory_space<vmem>>, %arg5: memref<512x128xf32, #tpu.memory_space<vmem>>, %arg6: memref<512x128xf32, #tpu.memory_space<vmem>>) attributes {dimension_semantics = [#tpu.dimension_semantics<parallel>], iteration_bounds = array<i64: 1>, scalar_prefetch = 0 : i64, scratch_operands = 0 : i64, tpu.core_type = #tpu.core_type<tc>, window_params = [{transform_indices = @transform_0, window_bounds = array<i64: 512, 128>}, {pipeline_mode = #tpu.pipeline_mode<synchronous>, transform_indices = @transform_1, window_bounds = array<i64: 128, 128>}, {pipeline_mode = #tpu.pipeline_mode<synchronous>, transform_indices = @transform_2, window_bounds = array<i64: 1, 128>}, {pipeline_mode = #tpu.pipeline_mode<synchronous>, transform_indices = @transform_3, window_bounds = array<i64: 1, 128>}, {transform_indices = @transform_4, window_bounds = array<i64: 512, 128>}, {transform_indices = @transform_5, window_bounds = array<i64: 512, 128>}]} {
    %c0 = arith.constant 0 : index
    %c0_0 = arith.constant 0 : index
    %0 = vector.load %arg1[%c0, %c0_0] : memref<512x128xbf16, #tpu.memory_space<vmem>>, vector<512x128xbf16>
    %c0_1 = arith.constant 0 : index
    %c0_2 = arith.constant 0 : index
    %1 = vector.load %arg2[%c0_1, %c0_2] : memref<128x128xbf16, #tpu.memory_space<vmem>>, vector<128x128xbf16>
    %cst = arith.constant dense<0.000000e+00> : vector<512x128xf32>
    %2 = tpu.matmul %0, %1, %cst {dimension_numbers = #tpu.dot_dimension_numbers<[1], [0], [0], [1], [0, 0, 1, 1], [], []>} : vector<512x128xbf16>, vector<128x128xbf16>, vector<512x128xf32> -> vector<512x128xf32>
    %c0_3 = arith.constant 0 : index
    %c0_4 = arith.constant 0 : index
    %3 = vector.load %arg3[%c0_3, %c0_4] : memref<1x128xf32, #tpu.memory_space<vmem>>, vector<1x128xf32>
    %4 = vector.broadcast %3 : vector<1x128xf32> to vector<512x128xf32>
    %5 = arith.mulf %2, %4 : vector<512x128xf32>
    %c0_5 = arith.constant 0 : index
    %c0_6 = arith.constant 0 : index
    %6 = vector.load %arg4[%c0_5, %c0_6] : memref<1x128xf32, #tpu.memory_space<vmem>>, vector<1x128xf32>
    %7 = vector.broadcast %6 : vector<1x128xf32> to vector<512x128xf32>
    %8 = arith.addf %5, %7 : vector<512x128xf32>
    %c0_7 = arith.constant 0 : index
    %c0_8 = arith.constant 0 : index
    %9 = vector.load %arg5[%c0_7, %c0_8] : memref<512x128xf32, #tpu.memory_space<vmem>>, vector<512x128xf32>
    %10 = arith.addf %8, %9 : vector<512x128xf32>
    %c0_9 = arith.constant 0 : index
    %c0_10 = arith.constant 0 : index
    %11 = vector.load %arg6[%c0_9, %c0_10] : memref<512x128xf32, #tpu.memory_space<vmem>>, vector<512x128xf32>
    tpu.vector_store %arg6[%c0_9, %c0_10], %10 {strides = array<i32>} : memref<512x128xf32, #tpu.memory_space<vmem>>, vector<512x128xf32>,
    return
  }
  func.func @transform_0(%arg0: i32) -> (i32, i32) {
    %c0_i32 = arith.constant 0 : i32
    %c0_i32_0 = arith.constant 0 : i32
    return %arg0, %c0_i32 : i32, i32
  }
  func.func @transform_1(%arg0: i32) -> (i32, i32) {
    %c0_i32 = arith.constant 0 : i32
    %c0_i32_0 = arith.constant 0 : i32
    %c0_i32_1 = arith.constant 0 : i32
    return %c0_i32, %c0_i32_0 : i32, i32
  }
  func.func @transform_2(%arg0: i32) -> (i32, i32) {
    %c0_i32 = arith.constant 0 : i32
    %c0_i32_0 = arith.constant 0 : i32
    %c0_i32_1 = arith.constant 0 : i32
    return %c0_i32, %c0_i32_0 : i32, i32
  }
  func.func @transform_3(%arg0: i32) -> (i32, i32) {
    %c0_i32 = arith.constant 0 : i32
    %c0_i32_0 = arith.constant 0 : i32
    %c0_i32_1 = arith.constant 0 : i32
    return %c0_i32, %c0_i32_0 : i32, i32
  }
  func.func @transform_4(%arg0: i32) -> (i32, i32) {
    %c0_i32 = arith.constant 0 : i32
    %c0_i32_0 = arith.constant 0 : i32
    return %arg0, %c0_i32 : i32, i32
  }
  func.func @transform_5(%arg0: i32) -> (i32, i32) {
    %c0_i32 = arith.constant 0 : i32
    %c0_i32_0 = arith.constant 0 : i32
    return %arg0, %c0_i32 : i32, i32
  }
}

</mosaic_0001>

<llo_original>
// kernel: dw_residual.3
$region0: #{dw_residual.3}
  #allocation0 [shape = 'u32[]', space=smem, size = 0x4, offset = 0x4, fixed_abs, tag = 'smem constant byte address 0x4 - core index']
  #allocation1 [shape = 'u32[144,128]{1,0:T(1,128)}', space=vmem, size = 0x12000, scoped, tag = 'internal scratch']
  %s0 = inlined_call_operand.vmem [shape: bf16[512,128], index: 0, kind: input, shape index: {}]
  %s1 = inlined_call_operand.vmem [shape: bf16[128,128], index: 1, kind: input, shape index: {}]
  %s2 = inlined_call_operand.vmem [shape: f32[1,128], index: 2, kind: input, shape index: {}]
  %s3 = inlined_call_operand.vmem [shape: f32[1,128], index: 3, kind: input, shape index: {}]
  %s4 = inlined_call_operand.vmem [shape: f32[1,128], index: 4, kind: input, shape index: {}]
  %s5 = inlined_call_operand.vmem [shape: f32[512,128], index: 5, kind: output, shape index: {}]
  %s6 = sld [smem:[#allocation0]]
  $region30: #{dw_residual.3} parent=0
    _
  %s8 = ssub.s32 1, %s6
  %s9 = scalar_select 0, %s8, %s6
  // Predicated region
  $region2: #{dw_residual.3} parent=0 // pred_check
    _
  $region3: #{dw_residual.3} parent=0 // pred_check_branch
    %11 = sbr.rel (0) target = $region5
  $region4: #{dw_residual.3} parent=0 // pred_region
    _
  $region5: #{dw_residual.3} parent=0 // pred_fallthru
    _
  // Predicated region
  $region6: #{dw_residual.3} parent=0 // pred_check
    _
  $region7: #{dw_residual.3} parent=0 // pred_check_branch
    %13 = sbr.rel (0) target = $region9
  $region8: #{dw_residual.3} parent=0 // pred_region
    _
  $region9: #{dw_residual.3} parent=0 // pred_fallthru
    _
  // Predicated region
  $region10: #{dw_residual.3} parent=0 // pred_check
    _
  $region11: #{dw_residual.3} parent=0 // pred_check_branch
    %15 = sbr.rel (0) target = $region13
  $region12: #{dw_residual.3} parent=0 // pred_region
    _
  $region13: #{dw_residual.3} parent=0 // pred_fallthru
    _
  // Predicated region
  $region14: #{dw_residual.3} parent=0 // pred_check
    _
  $region15: #{dw_residual.3} parent=0 // pred_check_branch
    %17 = sbr.rel (0) target = $region17
  $region16: #{dw_residual.3} parent=0 // pred_region
    _
  $region17: #{dw_residual.3} parent=0 // pred_fallthru
    _
  // Predicated region
  $region18: #{dw_residual.3} parent=0 // pred_check
    _
  $region19: #{dw_residual.3} parent=0 // pred_check_branch
    %19 = sbr.rel (0) target = $region21
  $region20: #{dw_residual.3} parent=0 // pred_region
    _
  $region21: #{dw_residual.3} parent=0 // pred_fallthru
    _
  %v21 = vld [vmem:[%s0] sm:$0xf]
  %v22 = vld [vmem:[%s0 + $0x4] sm:$0xf]
  %v23 = vld [vmem:[%s0 + $0x8] sm:$0xf]
  %v24 = vld [vmem:[%s0 + $0xc] sm:$0xf]
  %v25 = vld [vmem:[%s0 + $0x10] sm:$0xf]
  %v26 = vld [vmem:[%s0 + $0x14] sm:$0xf]
  %v27 = vld [vmem:[%s0 + $0x18] sm:$0xf]
  %v28 = vld [vmem:[%s0 + $0x1c] sm:$0xf]
  %v29 = vld [vmem:[%s0 + $0x20] sm:$0xf]
  %v30 = vld [vmem:[%s0 + $0x24] sm:$0xf]
  %v31 = vld [vmem:[%s0 + $0x28] sm:$0xf]
  %v32 = vld [vmem:[%s0 + $0x2c] sm:$0xf]
  %v33 = vld [vmem:[%s0 + $0x30] sm:$0xf]
  %v34 = vld [vmem:[%s0 + $0x34] sm:$0xf]
  %v35 = vld [vmem:[%s0 + $0x38] sm:$0xf]
  %v36 = vld [vmem:[%s0 + $0x3c] sm:$0xf]
  %v37 = vld [vmem:[%s0 + $0x40] sm:$0xf]
  %v38 = vld [vmem:[%s0 + $0x44] sm:$0xf]
  %v39 = vld [vmem:[%s0 + $0x48] sm:$0xf]
  %v40 = vld [vmem:[%s0 + $0x4c] sm:$0xf]
  %v41 = vld [vmem:[%s0 + $0x50] sm:$0xf]
  %v42 = vld [vmem:[%s0 + $0x54] sm:$0xf]
  %v43 = vld [vmem:[%s0 + $0x58] sm:$0xf]
  %v44 = vld [vmem:[%s0 + $0x5c] sm:$0xf]
  %v45 = vld [vmem:[%s0 + $0x60] sm:$0xf]
  %v46 = vld [vmem:[%s0 + $0x64] sm:$0xf]
  %v47 = vld [vmem:[%s0 + $0x68] sm:$0xf]
  %v48 = vld [vmem:[%s0 + $0x6c] sm:$0xf]
  %v49 = vld [vmem:[%s0 + $0x70] sm:$0xf]
  %v50 = vld [vmem:[%s0 + $0x74] sm:$0xf]
  %v51 = vld [vmem:[%s0 + $0x78] sm:$0xf]
  %v52 = vld [vmem:[%s0 + $0x7c] sm:$0xf]
  %v53 = vld [vmem:[%s0 + $0x80] sm:$0xf]
  %v54 = vld [vmem:[%s0 + $0x84] sm:$0xf]
  %v55 = vld [vmem:[%s0 + $0x88] sm:$0xf]
  %v56 = vld [vmem:[%s0 + $0x8c] sm:$0xf]
  %v57 = vld [vmem:[%s0 + $0x90] sm:$0xf]
  %v58 = vld [vmem:[%s0 + $0x94] sm:$0xf]
  %v59 = vld [vmem:[%s0 + $0x98] sm:$0xf]
  %v60 = vld [vmem:[%s0 + $0x9c] sm:$0xf]
  %v61 = vld [vmem:[%s0 + $0xa0] sm:$0xf]
  %v62 = vld [vmem:[%s0 + $0xa4] sm:$0xf]
  %v63 = vld [vmem:[%s0 + $0xa8] sm:$0xf]
  %v64 = vld [vmem:[%s0 + $0xac] sm:$0xf]
  %v65 = vld [vmem:[%s0 + $0xb0] sm:$0xf]
  %v66 = vld [vmem:[%s0 + $0xb4] sm:$0xf]
  %v67 = vld [vmem:[%s0 + $0xb8] sm:$0xf]
  %v68 = vld [vmem:[%s0 + $0xbc] sm:$0xf]
  %v69 = vld [vmem:[%s0 + $0xc0] sm:$0xf]
  %v70 = vld [vmem:[%s0 + $0xc4] sm:$0xf]
  %v71 = vld [vmem:[%s0 + $0xc8] sm:$0xf]
  %v72 = vld [vmem:[%s0 + $0xcc] sm:$0xf]
  %v73 = vld [vmem:[%s0 + $0xd0] sm:$0xf]
  %v74 = vld [vmem:[%s0 + $0xd4] sm:$0xf]
  %v75 = vld [vmem:[%s0 + $0xd8] sm:$0xf]
  %v76 = vld [vmem:[%s0 + $0xdc] sm:$0xf]
  %v77 = vld [vmem:[%s0 + $0xe0] sm:$0xf]
  %v78 = vld [vmem:[%s0 + $0xe4] sm:$0xf]
  %v79 = vld [vmem:[%s0 + $0xe8] sm:$0xf]
  %v80 = vld [vmem:[%s0 + $0xec] sm:$0xf]
  %v81 = vld [vmem:[%s0 + $0xf0] sm:$0xf]
  %v82 = vld [vmem:[%s0 + $0xf4] sm:$0xf]
  %v83 = vld [vmem:[%s0 + $0xf8] sm:$0xf]
  %v84 = vld [vmem:[%s0 + $0xfc] sm:$0xf]
  %v85 = vld [vmem:[%s1] sm:$0xf]
  %v86 = vld [vmem:[%s1 + $0x4] sm:$0xf]
  %v87 = vld [vmem:[%s1 + $0x8] sm:$0xf]
  %v88 = vld [vmem:[%s1 + $0xc] sm:$0xf]
  %v89 = vld [vmem:[%s1 + $0x10] sm:$0xf]
  %v90 = vld [vmem:[%s1 + $0x14] sm:$0xf]
  %v91 = vld [vmem:[%s1 + $0x18] sm:$0xf]
  %v92 = vld [vmem:[%s1 + $0x1c] sm:$0xf]
  %v93 = vld [vmem:[%s1 + $0x20] sm:$0xf]
  %v94 = vld [vmem:[%s1 + $0x24] sm:$0xf]
  %v95 = vld [vmem:[%s1 + $0x28] sm:$0xf]
  %v96 = vld [vmem:[%s1 + $0x2c] sm:$0xf]
  %v97 = vld [vmem:[%s1 + $0x30] sm:$0xf]
  %v98 = vld [vmem:[%s1 + $0x34] sm:$0xf]
  %v99 = vld [vmem:[%s1 + $0x38] sm:$0xf]
  %v100 = vld [vmem:[%s1 + $0x3c] sm:$0xf]
  %v165 = vunpack.c.l.b16 %v21
  %v166 = vunpack.c.l.b16 %v22
  %v167 = vunpack.c.l.b16 %v23
  %v168 = vunpack.c.l.b16 %v24
  %v169 = vunpack.c.l.b16 %v25
  %v170 = vunpack.c.l.b16 %v26
  %v171 = vunpack.c.l.b16 %v27
  %v172 = vunpack.c.l.b16 %v28
  %v173 = vunpack.c.l.b16 %v29
  %v174 = vunpack.c.l.b16 %v30
  %v175 = vunpack.c.l.b16 %v31
  %v176 = vunpack.c.l.b16 %v32
  %v177 = vunpack.c.l.b16 %v33
  %v178 = vunpack.c.l.b16 %v34
  %v179 = vunpack.c.l.b16 %v35
  %v180 = vunpack.c.l.b16 %v36
  %v181 = vunpack.c.l.b16 %v37
  %v182 = vunpack.c.l.b16 %v38
  %v183 = vunpack.c.l.b16 %v39
  %v184 = vunpack.c.l.b16 %v40
  %v185 = vunpack.c.l.b16 %v41
  %v186 = vunpack.c.l.b16 %v42
  %v187 = vunpack.c.l.b16 %v43
  %v188 = vunpack.c.l.b16 %v44
  %v189 = vunpack.c.l.b16 %v45
  %v190 = vunpack.c.l.b16 %v46
  %v191 = vunpack.c.l.b16 %v47
  %v192 = vunpack.c.l.b16 %v48
  %v193 = vunpack.c.l.b16 %v49
  %v194 = vunpack.c.l.b16 %v50
  %v195 = vunpack.c.l.b16 %v51
  %v196 = vunpack.c.l.b16 %v52
  %v197 = vunpack.c.l.b16 %v53
  %v198 = vunpack.c.l.b16 %v54
  %v199 = vunpack.c.l.b16 %v55
  %v200 = vunpack.c.l.b16 %v56
  %v201 = vunpack.c.l.b16 %v57
  %v202 = vunpack.c.l.b16 %v58
  %v203 = vunpack.c.l.b16 %v59
  %v204 = vunpack.c.l.b16 %v60
  %v205 = vunpack.c.l.b16 %v61
  %v206 = vunpack.c.l.b16 %v62
  %v207 = vunpack.c.l.b16 %v63
  %v208 = vunpack.c.l.b16 %v64
  %v209 = vunpack.c.l.b16 %v65
  %v210 = vunpack.c.l.b16 %v66
  %v211 = vunpack.c.l.b16 %v67
  %v212 = vunpack.c.l.b16 %v68
  %v213 = vunpack.c.l.b16 %v69
  %v214 = vunpack.c.l.b16 %v70
  %v215 = vunpack.c.l.b16 %v71
  %v216 = vunpack.c.l.b16 %v72
  %v217 = vunpack.c.l.b16 %v73
  %v218 = vunpack.c.l.b16 %v74
  %v219 = vunpack.c.l.b16 %v75
  %v220 = vunpack.c.l.b16 %v76
  %v221 = vunpack.c.l.b16 %v77
  %v222 = vunpack.c.l.b16 %v78
  %v223 = vunpack.c.l.b16 %v79
  %v224 = vunpack.c.l.b16 %v80
  %v225 = vunpack.c.l.b16 %v81
  %v226 = vunpack.c.l.b16 %v82
  %v227 = vunpack.c.l.b16 %v83
  %v228 = vunpack.c.l.b16 %v84
  %v229 = vpack.c.b16 %v166, %v165
  %v230 = vpack.c.b16 %v168, %v167
  %v231 = vpack.c.b16 %v170, %v169
  %v232 = vpack.c.b16 %v172, %v171
  %v233 = vpack.c.b16 %v174, %v173
  %v234 = vpack.c.b16 %v176, %v175
  %v235 = vpack.c.b16 %v178, %v177
  %v236 = vpack.c.b16 %v180, %v179
  %v237 = vpack.c.b16 %v182, %v181
  %v238 = vpack.c.b16 %v184, %v183
  %v239 = vpack.c.b16 %v186, %v185
  %v240 = vpack.c.b16 %v188, %v187
  %v241 = vpack.c.b16 %v190, %v189
  %v242 = vpack.c.b16 %v192, %v191
  %v243 = vpack.c.b16 %v194, %v193
  %v244 = vpack.c.b16 %v196, %v195
  %v245 = vpack.c.b16 %v198, %v197
  %v246 = vpack.c.b16 %v200, %v199
  %v247 = vpack.c.b16 %v202, %v201
  %v248 = vpack.c.b16 %v204, %v203
  %v249 = vpack.c.b16 %v206, %v205
  %v250 = vpack.c.b16 %v208, %v207
  %v251 = vpack.c.b16 %v210, %v209
  %v252 = vpack.c.b16 %v212, %v211
  %v253 = vpack.c.b16 %v214, %v213
  %v254 = vpack.c.b16 %v216, %v215
  %v255 = vpack.c.b16 %v218, %v217
  %v256 = vpack.c.b16 %v220, %v219
  %v257 = vpack.c.b16 %v222, %v221
  %v258 = vpack.c.b16 %v224, %v223
  %v259 = vpack.c.b16 %v226, %v225
  %v260 = vpack.c.b16 %v228, %v227
  %v309 = vunpack.c.l.b16 %v85
  %v310 = vunpack.c.l.b16 %v86
  %v311 = vunpack.c.l.b16 %v87
  %v312 = vunpack.c.l.b16 %v88
  %v313 = vunpack.c.l.b16 %v89
  %v314 = vunpack.c.l.b16 %v90
  %v315 = vunpack.c.l.b16 %v91
  %v316 = vunpack.c.l.b16 %v92
  %v317 = vunpack.c.l.b16 %v93
  %v318 = vunpack.c.l.b16 %v94
  %v319 = vunpack.c.l.b16 %v95
  %v320 = vunpack.c.l.b16 %v96
  %v321 = vunpack.c.l.b16 %v97
  %v322 = vunpack.c.l.b16 %v98
  %v323 = vunpack.c.l.b16 %v99
  %v324 = vunpack.c.l.b16 %v100
  %v325 = vpack.c.b16 %v310, %v309
  %v326 = vpack.c.b16 %v312, %v311
  %v327 = vpack.c.b16 %v314, %v313
  %v328 = vpack.c.b16 %v316, %v315
  %v329 = vpack.c.b16 %v318, %v317
  %v330 = vpack.c.b16 %v320, %v319
  %v331 = vpack.c.b16 %v322, %v321
  %v332 = vpack.c.b16 %v324, %v323
  %341 = vmatprep.subr.bf16.mxu0 0
  %342 = vmatpush1.bf16.msra.mxu0 %v325
  %343 = vmatprep.subr.bf16.mxu0 0
  %344 = vmatpush1.bf16.msra.mxu0 %v326
  %345 = vmatprep.subr.bf16.mxu0 0
  %346 = vmatpush1.bf16.msra.mxu0 %v327
  %347 = vmatprep.subr.bf16.mxu0 0
  %348 = vmatpush1.bf16.msra.mxu0 %v328
  %349 = vmatprep.subr.bf16.mxu0 0
  %350 = vmatpush1.bf16.msra.mxu0 %v329
  %351 = vmatprep.subr.bf16.mxu0 0
  %352 = vmatpush1.bf16.msra.mxu0 %v330
  %353 = vmatprep.subr.bf16.mxu0 0
  %354 = vmatpush1.bf16.msra.mxu0 %v331
  %355 = vmatprep.subr.bf16.mxu0 0
  %356 = vmatpush1.bf16.msra.mxu0 %v332
  %357 = vmatprep.subr.bf16.mxu0 0
  %358 = vmatpush1.bf16.msra.mxu0 0
  %359 = vmatprep.subr.bf16.mxu0 0
  %360 = vmatpush1.bf16.msra.mxu0 0
  %361 = vmatprep.subr.bf16.mxu0 0
  %362 = vmatpush1.bf16.msra.mxu0 0
  %363 = vmatprep.subr.bf16.mxu0 0
  %364 = vmatpush1.bf16.msra.mxu0 0
  %365 = vmatprep.subr.bf16.mxu0 0
  %366 = vmatpush1.bf16.msra.mxu0 0
  %367 = vmatprep.subr.bf16.mxu0 0
  %368 = vmatpush1.bf16.msra.mxu0 0
  %369 = vmatprep.subr.bf16.mxu0 0
  %370 = vmatpush1.bf16.msra.mxu0 0
  %371 = vmatprep.subr.bf16.mxu0 0
  %372 = vmatpush1.bf16.msra.mxu0 0
  %373 = vmatprep.mubr.bf16.mxu0 0
  %374 = vmatmul.mubr.bf16.gmra.mrb[0].mxu0 %v229
  %v375 = vpop.f32.mrb[0].mxu0
  %v376 = vadd.f32 0.0, %v375
  %v377 = vpop.f32.mrb[0].mxu0
  %v378 = vpop.f32.mrb[0].mxu0
  %v379 = vadd.f32 0.0, %v378
  %v380 = vpop.f32.mrb[0].mxu0
  %381 = vmatprep.mubr.bf16.mxu0 0
  %382 = vmatmul.mubr.bf16.gmra.mrb[0].mxu0 %v230
  %v383 = vpop.f32.mrb[0].mxu0
  %v384 = vadd.f32 0.0, %v383
  %v385 = vpop.f32.mrb[0].mxu0
  %v386 = vpop.f32.mrb[0].mxu0
  %v387 = vadd.f32 0.0, %v386
  %v388 = vpop.f32.mrb[0].mxu0
  %389 = vmatprep.mubr.bf16.mxu0 0
  %390 = vmatmul.mubr.bf16.gmra.mrb[0].mxu0 %v231
  %v391 = vpop.f32.mrb[0].mxu0
  %v392 = vadd.f32 0.0, %v391
  %v393 = vpop.f32.mrb[0].mxu0
  %v394 = vpop.f32.mrb[0].mxu0
  %v395 = vadd.f32 0.0, %v394
  %v396 = vpop.f32.mrb[0].mxu0
  %397 = vmatprep.mubr.bf16.mxu0 0
  %398 = vmatmul.mubr.bf16.gmra.mrb[0].mxu0 %v232
  %v399 = vpop.f32.mrb[0].mxu0
  %v400 = vadd.f32 0.0, %v399
  %v401 = vpop.f32.mrb[0].mxu0
  %v402 = vpop.f32.mrb[0].mxu0
  %v403 = vadd.f32 0.0, %v402
  %v404 = vpop.f32.mrb[0].mxu0
  %405 = vmatprep.mubr.bf16.mxu0 0
  %406 = vmatmul.mubr.bf16.gmra.mrb[0].mxu0 %v233
  %v407 = vpop.f32.mrb[0].mxu0
  %v408 = vadd.f32 0.0, %v407
  %v409 = vpop.f32.mrb[0].mxu0
  %v410 = vpop.f32.mrb[0].mxu0
  %v411 = vadd.f32 0.0, %v410
  %v412 = vpop.f32.mrb[0].mxu0
  %413 = vmatprep.mubr.bf16.mxu0 0
  %414 = vmatmul.mubr.bf16.gmra.mrb[0].mxu0 %v234
  %v415 = vpop.f32.mrb[0].mxu0
  %v416 = vadd.f32 0.0, %v415
  %v417 = vpop.f32.mrb[0].mxu0
  %v418 = vpop.f32.mrb[0].mxu0
  %v419 = vadd.f32 0.0, %v418
  %v420 = vpop.f32.mrb[0].mxu0
  %421 = vmatprep.mubr.bf16.mxu0 0
  %422 = vmatmul.mubr.bf16.gmra.mrb[0].mxu0 %v235
  %v423 = vpop.f32.mrb[0].mxu0
  %v424 = vadd.f32 0.0, %v423
  %v425 = vpop.f32.mrb[0].mxu0
  %v426 = vpop.f32.mrb[0].mxu0
  %v427 = vadd.f32 0.0, %v426
  %v428 = vpop.f32.mrb[0].mxu0
  %429 = vmatprep.mubr.bf16.mxu0 0
  %430 = vmatmul.mubr.bf16.gmra.mrb[0].mxu0 %v236
  %v431 = vpop.f32.mrb[0].mxu0
  %v432 = vadd.f32 0.0, %v431
  %v433 = vpop.f32.mrb[0].mxu0
  %v434 = vpop.f32.mrb[0].mxu0
  %v435 = vadd.f32 0.0, %v434
  %v436 = vpop.f32.mrb[0].mxu0
  %437 = vmatprep.mubr.bf16.mxu0 0
  %438 = vmatmul.mubr.bf16.gmra.mrb[0].mxu0 %v237
  %v439 = vpop.f32.mrb[0].mxu0
  %v440 = vadd.f32 0.0, %v439
  %v441 = vpop.f32.mrb[0].mxu0
  %v442 = vpop.f32.mrb[0].mxu0
  %v443 = vadd.f32 0.0, %v442
  %v444 = vpop.f32.mrb[0].mxu0
  %445 = vmatprep.mubr.bf16.mxu0 0
  %446 = vmatmul.mubr.bf16.gmra.mrb[0].mxu0 %v238
  %v447 = vpop.f32.mrb[0].mxu0
  %v448 = vadd.f32 0.0, %v447
  %v449 = vpop.f32.mrb[0].mxu0
  %v450 = vpop.f32.mrb[0].mxu0
  %v451 = vadd.f32 0.0, %v450
  %v452 = vpop.f32.mrb[0].mxu0
  %453 = vmatprep.mubr.bf16.mxu0 0
  %454 = vmatmul.mubr.bf16.gmra.mrb[0].mxu0 %v239
  %v455 = vpop.f32.mrb[0].mxu0
  %v456 = vadd.f32 0.0, %v455
  %v457 = vpop.f32.mrb[0].mxu0
  %v458 = vpop.f32.mrb[0].mxu0
  %v459 = vadd.f32 0.0, %v458
  %v460 = vpop.f32.mrb[0].mxu0
  %461 = vmatprep.mubr.bf16.mxu0 0
  %462 = vmatmul.mubr.bf16.gmra.mrb[0].mxu0 %v240
  %v463 = vpop.f32.mrb[0].mxu0
  %v464 = vadd.f32 0.0, %v463
  %v465 = vpop.f32.mrb[0].mxu0
  %v466 = vpop.f32.mrb[0].mxu0
  %v467 = vadd.f32 0.0, %v466
  %v468 = vpop.f32.mrb[0].mxu0
  %469 = vmatprep.mubr.bf16.mxu0 0
  %470 = vmatmul.mubr.bf16.gmra.mrb[0].mxu0 %v241
  %v471 = vpop.f32.mrb[0].mxu0
  %v472 = vadd.f32 0.0, %v471
  %v473 = vpop.f32.mrb[0].mxu0
  %v474 = vpop.f32.mrb[0].mxu0
  %v475 = vadd.f32 0.0, %v474
  %v476 = vpop.f32.mrb[0].mxu0
  %477 = vmatprep.mubr.bf16.mxu0 0
  %478 = vmatmul.mubr.bf16.gmra.mrb[0].mxu0 %v242
  %v479 = vpop.f32.mrb[0].mxu0
  %v480 = vadd.f32 0.0, %v479
  %v481 = vpop.f32.mrb[0].mxu0
  %v482 = vpop.f32.mrb[0].mxu0
  %v483 = vadd.f32 0.0, %v482
  %v484 = vpop.f32.mrb[0].mxu0
  %485 = vmatprep.mubr.bf16.mxu0 0
  %486 = vmatmul.mubr.bf16.gmra.mrb[0].mxu0 %v243
  %v487 = vpop.f32.mrb[0].mxu0
  %v488 = vadd.f32 0.0, %v487
  %v489 = vpop.f32.mrb[0].mxu0
  %v490 = vpop.f32.mrb[0].mxu0
  %v491 = vadd.f32 0.0, %v490
  %v492 = vpop.f32.mrb[0].mxu0
  %493 = vmatprep.mubr.bf16.mxu0 0
  %494 = vmatmul.mubr.bf16.gmra.mrb[0].mxu0 %v244
  %v495 = vpop.f32.mrb[0].mxu0
  %v496 = vadd.f32 0.0, %v495
  %v497 = vpop.f32.mrb[0].mxu0
  %v498 = vpop.f32.mrb[0].mxu0
  %v499 = vadd.f32 0.0, %v498
  %v500 = vpop.f32.mrb[0].mxu0
  %501 = vmatprep.mubr.bf16.mxu0 0
  %502 = vmatmul.mubr.bf16.gmra.mrb[0].mxu0 %v245
  %v503 = vpop.f32.mrb[0].mxu0
  %v504 = vadd.f32 0.0, %v503
  %v505 = vpop.f32.mrb[0].mxu0
  %v506 = vpop.f32.mrb[0].mxu0
  %v507 = vadd.f32 0.0, %v506
  %v508 = vpop.f32.mrb[0].mxu0
  %509 = vmatprep.mubr.bf16.mxu0 0
  %510 = vmatmul.mubr.bf16.gmra.mrb[0].mxu0 %v246
  %v511 = vpop.f32.mrb[0].mxu0
  %v512 = vadd.f32 0.0, %v511
  %v513 = vpop.f32.mrb[0].mxu0
  %v514 = vpop.f32.mrb[0].mxu0
  %v515 = vadd.f32 0.0, %v514
  %v516 = vpop.f32.mrb[0].mxu0
  %517 = vmatprep.mubr.bf16.mxu0 0
  %518 = vmatmul.mubr.bf16.gmra.mrb[0].mxu0 %v247
  %v519 = vpop.f32.mrb[0].mxu0
  %v520 = vadd.f32 0.0, %v519
  %v521 = vpop.f32.mrb[0].mxu0
  %v522 = vpop.f32.mrb[0].mxu0
  %v523 = vadd.f32 0.0, %v522
  %v524 = vpop.f32.mrb[0].mxu0
  %525 = vmatprep.mubr.bf16.mxu0 0
  %526 = vmatmul.mubr.bf16.gmra.mrb[0].mxu0 %v248
  %v527 = vpop.f32.mrb[0].mxu0
  %v528 = vadd.f32 0.0, %v527
  %v529 = vpop.f32.mrb[0].mxu0
  %v530 = vpop.f32.mrb[0].mxu0
  %v531 = vadd.f32 0.0, %v530
  %v532 = vpop.f32.mrb[0].mxu0
  %533 = vmatprep.mubr.bf16.mxu0 0
  %534 = vmatmul.mubr.bf16.gmra.mrb[0].mxu0 %v249
  %v535 = vpop.f32.mrb[0].mxu0
  %v536 = vadd.f32 0.0, %v535
  %v537 = vpop.f32.mrb[0].mxu0
  %v538 = vpop.f32.mrb[0].mxu0
  %v539 = vadd.f32 0.0, %v538
  %v540 = vpop.f32.mrb[0].mxu0
  %541 = vmatprep.mubr.bf16.mxu0 0
  %542 = vmatmul.mubr.bf16.gmra.mrb[0].mxu0 %v250
  %v543 = vpop.f32.mrb[0].mxu0
  %v544 = vadd.f32 0.0, %v543
  %v545 = vpop.f32.mrb[0].mxu0
  %v546 = vpop.f32.mrb[0].mxu0
  %v547 = vadd.f32 0.0, %v546
  %v548 = vpop.f32.mrb[0].mxu0
  %549 = vmatprep.mubr.bf16.mxu0 0
  %550 = vmatmul.mubr.bf16.gmra.mrb[0].mxu0 %v251
  %v551 = vpop.f32.mrb[0].mxu0
  %v552 = vadd.f32 0.0, %v551
  %v553 = vpop.f32.mrb[0].mxu0
  %v554 = vpop.f32.mrb[0].mxu0
  %v555 = vadd.f32 0.0, %v554
  %v556 = vpop.f32.mrb[0].mxu0
  %557 = vmatprep.mubr.bf16.mxu0 0
  %558 = vmatmul.mubr.bf16.gmra.mrb[0].mxu0 %v252
  %v559 = vpop.f32.mrb[0].mxu0
  %v560 = vadd.f32 0.0, %v559
  %v561 = vpop.f32.mrb[0].mxu0
  %v562 = vpop.f32.mrb[0].mxu0
  %v563 = vadd.f32 0.0, %v562
  %v564 = vpop.f32.mrb[0].mxu0
  %565 = vmatprep.mubr.bf16.mxu0 0
  %566 = vmatmul.mubr.bf16.gmra.mrb[0].mxu0 %v253
  %v567 = vpop.f32.mrb[0].mxu0
  %v568 = vadd.f32 0.0, %v567
  %v569 = vpop.f32.mrb[0].mxu0
  %v570 = vpop.f32.mrb[0].mxu0
  %v571 = vadd.f32 0.0, %v570
  %v572 = vpop.f32.mrb[0].mxu0
  %573 = vmatprep.mubr.bf16.mxu0 0
  %574 = vmatmul.mubr.bf16.gmra.mrb[0].mxu0 %v254
  %v575 = vpop.f32.mrb[0].mxu0
  %v576 = vadd.f32 0.0, %v575
  %v577 = vpop.f32.mrb[0].mxu0
  %v578 = vpop.f32.mrb[0].mxu0
  %v579 = vadd.f32 0.0, %v578
  %v580 = vpop.f32.mrb[0].mxu0
  %581 = vmatprep.mubr.bf16.mxu0 0
  %582 = vmatmul.mubr.bf16.gmra.mrb[0].mxu0 %v255
  %v583 = vpop.f32.mrb[0].mxu0
  %v584 = vadd.f32 0.0, %v583
  %v585 = vpop.f32.mrb[0].mxu0
  %v586 = vpop.f32.mrb[0].mxu0
  %v587 = vadd.f32 0.0, %v586
  %v588 = vpop.f32.mrb[0].mxu0
  %589 = vmatprep.mubr.bf16.mxu0 0
  %590 = vmatmul.mubr.bf16.gmra.mrb[0].mxu0 %v256
  %v591 = vpop.f32.mrb[0].mxu0
  %v592 = vadd.f32 0.0, %v591
  %v593 = vpop.f32.mrb[0].mxu0
  %v594 = vpop.f32.mrb[0].mxu0
  %v595 = vadd.f32 0.0, %v594
  %v596 = vpop.f32.mrb[0].mxu0
  %597 = vmatprep.mubr.bf16.mxu0 0
  %598 = vmatmul.mubr.bf16.gmra.mrb[0].mxu0 %v257
  %v599 = vpop.f32.mrb[0].mxu0
  %v600 = vadd.f32 0.0, %v599
  %v601 = vpop.f32.mrb[0].mxu0
  %v602 = vpop.f32.mrb[0].mxu0
  %v603 = vadd.f32 0.0, %v602
  %v604 = vpop.f32.mrb[0].mxu0
  %605 = vmatprep.mubr.bf16.mxu0 0
  %606 = vmatmul.mubr.bf16.gmra.mrb[0].mxu0 %v258
  %v607 = vpop.f32.mrb[0].mxu0
  %v608 = vadd.f32 0.0, %v607
  %v609 = vpop.f32.mrb[0].mxu0
  %v610 = vpop.f32.mrb[0].mxu0
  %v611 = vadd.f32 0.0, %v610
  %v612 = vpop.f32.mrb[0].mxu0
  %613 = vmatprep.mubr.bf16.mxu0 0
  %614 = vmatmul.mubr.bf16.gmra.mrb[0].mxu0 %v259
  %v615 = vpop.f32.mrb[0].mxu0
  %v616 = vadd.f32 0.0, %v615
  %v617 = vpop.f32.mrb[0].mxu0
  %v618 = vpop.f32.mrb[0].mxu0
  %v619 = vadd.f32 0.0, %v618
  %v620 = vpop.f32.mrb[0].mxu0
  %621 = vmatprep.mubr.bf16.mxu0 0
  %622 = vmatmul.mubr.bf16.gmra.mrb[0].mxu0 %v260
  %v623 = vpop.f32.mrb[0].mxu0
  %v624 = vadd.f32 0.0, %v623
  %v625 = vpop.f32.mrb[0].mxu0
  %v626 = vpop.f32.mrb[0].mxu0
  %v627 = vadd.f32 0.0, %v626
  %v628 = vpop.f32.mrb[0].mxu0
  %629 = vdwg.mxu0
  %v630 = vld [vmem:[%s2] sm:$0x1]
  %v632 = vlaneseq
  %v633 = vshrl.u32 %v632, 7
  %v634 = vsub.s32 0, %v633
  %v635 = vrot.slane %v630, %v634
  %v637 = vmul.f32 %v376, %v635
  %v638 = vmul.f32 %v379, %v635
  %v639 = vmul.f32 %v384, %v635
  %v640 = vmul.f32 %v387, %v635
  %v641 = vmul.f32 %v392, %v635
  %v642 = vmul.f32 %v395, %v635
  %v643 = vmul.f32 %v400, %v635
  %v644 = vmul.f32 %v403, %v635
  %v645 = vmul.f32 %v408, %v635
  %v646 = vmul.f32 %v411, %v635
  %v647 = vmul.f32 %v416, %v635
  %v648 = vmul.f32 %v419, %v635
  %v649 = vmul.f32 %v424, %v635
  %v650 = vmul.f32 %v427, %v635
  %v651 = vmul.f32 %v432, %v635
  %v652 = vmul.f32 %v435, %v635
  %v653 = vmul.f32 %v440, %v635
  %v654 = vmul.f32 %v443, %v635
  %v655 = vmul.f32 %v448, %v635
  %v656 = vmul.f32 %v451, %v635
  %v657 = vmul.f32 %v456, %v635
  %v658 = vmul.f32 %v459, %v635
  %v659 = vmul.f32 %v464, %v635
  %v660 = vmul.f32 %v467, %v635
  %v661 = vmul.f32 %v472, %v635
  %v662 = vmul.f32 %v475, %v635
  %v663 = vmul.f32 %v480, %v635
  %v664 = vmul.f32 %v483, %v635
  %v665 = vmul.f32 %v488, %v635
  %v666 = vmul.f32 %v491, %v635
  %v667 = vmul.f32 %v496, %v635
  %v668 = vmul.f32 %v499, %v635
  %v669 = vmul.f32 %v504, %v635
  %v670 = vmul.f32 %v507, %v635
  %v671 = vmul.f32 %v512, %v635
  %v672 = vmul.f32 %v515, %v635
  %v673 = vmul.f32 %v520, %v635
  %v674 = vmul.f32 %v523, %v635
  %v675 = vmul.f32 %v528, %v635
  %v676 = vmul.f32 %v531, %v635
  %v677 = vmul.f32 %v536, %v635
  %v678 = vmul.f32 %v539, %v635
  %v679 = vmul.f32 %v544, %v635
  %v680 = vmul.f32 %v547, %v635
  %v681 = vmul.f32 %v552, %v635
  %v682 = vmul.f32 %v555, %v635
  %v683 = vmul.f32 %v560, %v635
  %v684 = vmul.f32 %v563, %v635
  %v685 = vmul.f32 %v568, %v635
  %v686 = vmul.f32 %v571, %v635
  %v687 = vmul.f32 %v576, %v635
  %v688 = vmul.f32 %v579, %v635
  %v689 = vmul.f32 %v584, %v635
  %v690 = vmul.f32 %v587, %v635
  %v691 = vmul.f32 %v592, %v635
  %v692 = vmul.f32 %v595, %v635
  %v693 = vmul.f32 %v600, %v635
  %v694 = vmul.f32 %v603, %v635
  %v695 = vmul.f32 %v608, %v635
  %v696 = vmul.f32 %v611, %v635
  %v697 = vmul.f32 %v616, %v635
  %v698 = vmul.f32 %v619, %v635
  %v699 = vmul.f32 %v624, %v635
  %v700 = vmul.f32 %v627, %v635
  %v701 = vld [vmem:[%s3] sm:$0x1]
  %v703 = vlaneseq
  %v704 = vshrl.u32 %v703, 7
  %v705 = vsub.s32 0, %v704
  %v706 = vrot.slane %v701, %v705
  %v708 = vadd.f32 %v637, %v706
  %v709 = vadd.f32 %v638, %v706
  %v710 = vadd.f32 %v639, %v706
  %v711 = vadd.f32 %v640, %v706
  %v712 = vadd.f32 %v641, %v706
  %v713 = vadd.f32 %v642, %v706
  %v714 = vadd.f32 %v643, %v706
  %v715 = vadd.f32 %v644, %v706
  %v716 = vadd.f32 %v645, %v706
  %v717 = vadd.f32 %v646, %v706
  %v718 = vadd.f32 %v647, %v706
  %v719 = vadd.f32 %v648, %v706
  %v720 = vadd.f32 %v649, %v706
  %v721 = vadd.f32 %v650, %v706
  %v722 = vadd.f32 %v651, %v706
  %v723 = vadd.f32 %v652, %v706
  %v724 = vadd.f32 %v653, %v706
  %v725 = vadd.f32 %v654, %v706
  %v726 = vadd.f32 %v655, %v706
  %v727 = vadd.f32 %v656, %v706
  %v728 = vadd.f32 %v657, %v706
  %v729 = vadd.f32 %v658, %v706
  %v730 = vadd.f32 %v659, %v706
  %v731 = vadd.f32 %v660, %v706
  %v732 = vadd.f32 %v661, %v706
  %v733 = vadd.f32 %v662, %v706
  %v734 = vadd.f32 %v663, %v706
  %v735 = vadd.f32 %v664, %v706
  %v736 = vadd.f32 %v665, %v706
  %v737 = vadd.f32 %v666, %v706
  %v738 = vadd.f32 %v667, %v706
  %v739 = vadd.f32 %v668, %v706
  %v740 = vadd.f32 %v669, %v706
  %v741 = vadd.f32 %v670, %v706
  %v742 = vadd.f32 %v671, %v706
  %v743 = vadd.f32 %v672, %v706
  %v744 = vadd.f32 %v673, %v706
  %v745 = vadd.f32 %v674, %v706
  %v746 = vadd.f32 %v675, %v706
  %v747 = vadd.f32 %v676, %v706
  %v748 = vadd.f32 %v677, %v706
  %v749 = vadd.f32 %v678, %v706
  %v750 = vadd.f32 %v679, %v706
  %v751 = vadd.f32 %v680, %v706
  %v752 = vadd.f32 %v681, %v706
  %v753 = vadd.f32 %v682, %v706
  %v754 = vadd.f32 %v683, %v706
  %v755 = vadd.f32 %v684, %v706
  %v756 = vadd.f32 %v685, %v706
  %v757 = vadd.f32 %v686, %v706
  %v758 = vadd.f32 %v687, %v706
  %v759 = vadd.f32 %v688, %v706
  %v760 = vadd.f32 %v689, %v706
  %v761 = vadd.f32 %v690, %v706
  %v762 = vadd.f32 %v691, %v706
  %v763 = vadd.f32 %v692, %v706
  %v764 = vadd.f32 %v693, %v706
  %v765 = vadd.f32 %v694, %v706
  %v766 = vadd.f32 %v695, %v706
  %v767 = vadd.f32 %v696, %v706
  %v768 = vadd.f32 %v697, %v706
  %v769 = vadd.f32 %v698, %v706
  %v770 = vadd.f32 %v699, %v706
  %v771 = vadd.f32 %v700, %v706
  %vm772 = vcmp.ge.f32.partialorder %v708, 0.0
  %vm773 = vcmp.ge.f32.partialorder %v709, 0.0
  %vm774 = vcmp.ge.f32.partialorder %v710, 0.0
  %vm775 = vcmp.ge.f32.partialorder %v711, 0.0
  %vm776 = vcmp.ge.f32.partialorder %v712, 0.0
  %vm777 = vcmp.ge.f32.partialorder %v713, 0.0
  %vm778 = vcmp.ge.f32.partialorder %v714, 0.0
  %vm779 = vcmp.ge.f32.partialorder %v715, 0.0
  %vm780 = vcmp.ge.f32.partialorder %v716, 0.0
  %vm781 = vcmp.ge.f32.partialorder %v717, 0.0
  %vm782 = vcmp.ge.f32.partialorder %v718, 0.0
  %vm783 = vcmp.ge.f32.partialorder %v719, 0.0
  %vm784 = vcmp.ge.f32.partialorder %v720, 0.0
  %vm785 = vcmp.ge.f32.partialorder %v721, 0.0
  %vm786 = vcmp.ge.f32.partialorder %v722, 0.0
  %vm787 = vcmp.ge.f32.partialorder %v723, 0.0
  %vm788 = vcmp.ge.f32.partialorder %v724, 0.0
  %vm789 = vcmp.ge.f32.partialorder %v725, 0.0
  %vm790 = vcmp.ge.f32.partialorder %v726, 0.0
  %vm791 = vcmp.ge.f32.partialorder %v727, 0.0
  %vm792 = vcmp.ge.f32.partialorder %v728, 0.0
  %vm793 = vcmp.ge.f32.partialorder %v729, 0.0
  %vm794 = vcmp.ge.f32.partialorder %v730, 0.0
  %vm795 = vcmp.ge.f32.partialorder %v731, 0.0
  %vm796 = vcmp.ge.f32.partialorder %v732, 0.0
  %vm797 = vcmp.ge.f32.partialorder %v733, 0.0
  %vm798 = vcmp.ge.f32.partialorder %v734, 0.0
  %vm799 = vcmp.ge.f32.partialorder %v735, 0.0
  %vm800 = vcmp.ge.f32.partialorder %v736, 0.0
  %vm801 = vcmp.ge.f32.partialorder %v737, 0.0
  %vm802 = vcmp.ge.f32.partialorder %v738, 0.0
  %vm803 = vcmp.ge.f32.partialorder %v739, 0.0
  %vm804 = vcmp.ge.f32.partialorder %v740, 0.0
  %vm805 = vcmp.ge.f32.partialorder %v741, 0.0
  %vm806 = vcmp.ge.f32.partialorder %v742, 0.0
  %vm807 = vcmp.ge.f32.partialorder %v743, 0.0
  %vm808 = vcmp.ge.f32.partialorder %v744, 0.0
  %vm809 = vcmp.ge.f32.partialorder %v745, 0.0
  %vm810 = vcmp.ge.f32.partialorder %v746, 0.0
  %vm811 = vcmp.ge.f32.partialorder %v747, 0.0
  %vm812 = vcmp.ge.f32.partialorder %v748, 0.0
  %vm813 = vcmp.ge.f32.partialorder %v749, 0.0
  %vm814 = vcmp.ge.f32.partialorder %v750, 0.0
  %vm815 = vcmp.ge.f32.partialorder %v751, 0.0
  %vm816 = vcmp.ge.f32.partialorder %v752, 0.0
  %vm817 = vcmp.ge.f32.partialorder %v753, 0.0
  %vm818 = vcmp.ge.f32.partialorder %v754, 0.0
  %vm819 = vcmp.ge.f32.partialorder %v755, 0.0
  %vm820 = vcmp.ge.f32.partialorder %v756, 0.0
  %vm821 = vcmp.ge.f32.partialorder %v757, 0.0
  %vm822 = vcmp.ge.f32.partialorder %v758, 0.0
  %vm823 = vcmp.ge.f32.partialorder %v759, 0.0
  %vm824 = vcmp.ge.f32.partialorder %v760, 0.0
  %vm825 = vcmp.ge.f32.partialorder %v761, 0.0
  %vm826 = vcmp.ge.f32.partialorder %v762, 0.0
  %vm827 = vcmp.ge.f32.partialorder %v763, 0.0
  %vm828 = vcmp.ge.f32.partialorder %v764, 0.0
  %vm829 = vcmp.ge.f32.partialorder %v765, 0.0
  %vm830 = vcmp.ge.f32.partialorder %v766, 0.0
  %vm831 = vcmp.ge.f32.partialorder %v767, 0.0
  %vm832 = vcmp.ge.f32.partialorder %v768, 0.0
  %vm833 = vcmp.ge.f32.partialorder %v769, 0.0
  %vm834 = vcmp.ge.f32.partialorder %v770, 0.0
  %vm835 = vcmp.ge.f32.partialorder %v771, 0.0
  %v836 = vld [vmem:[%s4] sm:$0x1]
  %v838 = vlaneseq
  %v839 = vshrl.u32 %v838, 7
  %v840 = vsub.s32 0, %v839
  %v841 = vrot.slane %v836, %v840
  %v843 = vmul.f32 %v708, %v841
  %v844 = vmul.f32 %v709, %v841
  %v845 = vmul.f32 %v710, %v841
  %v846 = vmul.f32 %v711, %v841
  %v847 = vmul.f32 %v712, %v841
  %v848 = vmul.f32 %v713, %v841
  %v849 = vmul.f32 %v714, %v841
  %v850 = vmul.f32 %v715, %v841
  %v851 = vmul.f32 %v716, %v841
  %v852 = vmul.f32 %v717, %v841
  %v853 = vmul.f32 %v718, %v841
  %v854 = vmul.f32 %v719, %v841
  %v855 = vmul.f32 %v720, %v841
  %v856 = vmul.f32 %v721, %v841
  %v857 = vmul.f32 %v722, %v841
  %v858 = vmul.f32 %v723, %v841
  %v859 = vmul.f32 %v724, %v841
  %v860 = vmul.f32 %v725, %v841
  %v861 = vmul.f32 %v726, %v841
  %v862 = vmul.f32 %v727, %v841
  %v863 = vmul.f32 %v728, %v841
  %v864 = vmul.f32 %v729, %v841
  %v865 = vmul.f32 %v730, %v841
  %v866 = vmul.f32 %v731, %v841
  %v867 = vmul.f32 %v732, %v841
  %v868 = vmul.f32 %v733, %v841
  %v869 = vmul.f32 %v734, %v841
  %v870 = vmul.f32 %v735, %v841
  %v871 = vmul.f32 %v736, %v841
  %v872 = vmul.f32 %v737, %v841
  %v873 = vmul.f32 %v738, %v841
  %v874 = vmul.f32 %v739, %v841
  %v875 = vmul.f32 %v740, %v841
  %v876 = vmul.f32 %v741, %v841
  %v877 = vmul.f32 %v742, %v841
  %v878 = vmul.f32 %v743, %v841
  %v879 = vmul.f32 %v744, %v841
  %v880 = vmul.f32 %v745, %v841
  %v881 = vmul.f32 %v746, %v841
  %v882 = vmul.f32 %v747, %v841
  %v883 = vmul.f32 %v748, %v841
  %v884 = vmul.f32 %v749, %v841
  %v885 = vmul.f32 %v750, %v841
  %v886 = vmul.f32 %v751, %v841
  %v887 = vmul.f32 %v752, %v841
  %v888 = vmul.f32 %v753, %v841
  %v889 = vmul.f32 %v754, %v841
  %v890 = vmul.f32 %v755, %v841
  %v891 = vmul.f32 %v756, %v841
  %v892 = vmul.f32 %v757, %v841
  %v893 = vmul.f32 %v758, %v841
  %v894 = vmul.f32 %v759, %v841
  %v895 = vmul.f32 %v760, %v841
  %v896 = vmul.f32 %v761, %v841
  %v897 = vmul.f32 %v762, %v841
  %v898 = vmul.f32 %v763, %v841
  %v899 = vmul.f32 %v764, %v841
  %v900 = vmul.f32 %v765, %v841
  %v901 = vmul.f32 %v766, %v841
  %v902 = vmul.f32 %v767, %v841
  %v903 = vmul.f32 %v768, %v841
  %v904 = vmul.f32 %v769, %v841
  %v905 = vmul.f32 %v770, %v841
  %v906 = vmul.f32 %v771, %v841
  %v907 = vsel %vm772, %v708, %v843
  %v908 = vsel %vm773, %v709, %v844
  %v909 = vsel %vm774, %v710, %v845
  %v910 = vsel %vm775, %v711, %v846
  %v911 = vsel %vm776, %v712, %v847
  %v912 = vsel %vm777, %v713, %v848
  %v913 = vsel %vm778, %v714, %v849
  %v914 = vsel %vm779, %v715, %v850
  %v915 = vsel %vm780, %v716, %v851
  %v916 = vsel %vm781, %v717, %v852
  %v917 = vsel %vm782, %v718, %v853
  %v918 = vsel %vm783, %v719, %v854
  %v919 = vsel %vm784, %v720, %v855
  %v920 = vsel %vm785, %v721, %v856
  %v921 = vsel %vm786, %v722, %v857
  %v922 = vsel %vm787, %v723, %v858
  %v923 = vsel %vm788, %v724, %v859
  %v924 = vsel %vm789, %v725, %v860
  %v925 = vsel %vm790, %v726, %v861
  %v926 = vsel %vm791, %v727, %v862
  %v927 = vsel %vm792, %v728, %v863
  %v928 = vsel %vm793, %v729, %v864
  %v929 = vsel %vm794, %v730, %v865
  %v930 = vsel %vm795, %v731, %v866
  %v931 = vsel %vm796, %v732, %v867
  %v932 = vsel %vm797, %v733, %v868
  %v933 = vsel %vm798, %v734, %v869
  %v934 = vsel %vm799, %v735, %v870
  %v935 = vsel %vm800, %v736, %v871
  %v936 = vsel %vm801, %v737, %v872
  %v937 = vsel %vm802, %v738, %v873
  %v938 = vsel %vm803, %v739, %v874
  %v939 = vsel %vm804, %v740, %v875
  %v940 = vsel %vm805, %v741, %v876
  %v941 = vsel %vm806, %v742, %v877
  %v942 = vsel %vm807, %v743, %v878
  %v943 = vsel %vm808, %v744, %v879
  %v944 = vsel %vm809, %v745, %v880
  %v945 = vsel %vm810, %v746, %v881
  %v946 = vsel %vm811, %v747, %v882
  %v947 = vsel %vm812, %v748, %v883
  %v948 = vsel %vm813, %v749, %v884
  %v949 = vsel %vm814, %v750, %v885
  %v950 = vsel %vm815, %v751, %v886
  %v951 = vsel %vm816, %v752, %v887
  %v952 = vsel %vm817, %v753, %v888
  %v953 = vsel %vm818, %v754, %v889
  %v954 = vsel %vm819, %v755, %v890
  %v955 = vsel %vm820, %v756, %v891
  %v956 = vsel %vm821, %v757, %v892
  %v957 = vsel %vm822, %v758, %v893
  %v958 = vsel %vm823, %v759, %v894
  %v959 = vsel %vm824, %v760, %v895
  %v960 = vsel %vm825, %v761, %v896
  %v961 = vsel %vm826, %v762, %v897
  %v962 = vsel %vm827, %v763, %v898
  %v963 = vsel %vm828, %v764, %v899
  %v964 = vsel %vm829, %v765, %v900
  %v965 = vsel %vm830, %v766, %v901
  %v966 = vsel %vm831, %v767, %v902
  %v967 = vsel %vm832, %v768, %v903
  %v968 = vsel %vm833, %v769, %v904
  %v969 = vsel %vm834, %v770, %v905
  %v970 = vsel %vm835, %v771, %v906
  %971 = vst [vmem:[%s5] sm:$0xff] %v907
  %972 = vst [vmem:[%s5 + $0x8] sm:$0xff] %v908
  %973 = vst [vmem:[%s5 + $0x10] sm:$0xff] %v909
  %974 = vst [vmem:[%s5 + $0x18] sm:$0xff] %v910
  %975 = vst [vmem:[%s5 + $0x20] sm:$0xff] %v911
  %976 = vst [vmem:[%s5 + $0x28] sm:$0xff] %v912
  %977 = vst [vmem:[%s5 + $0x30] sm:$0xff] %v913
  %978 = vst [vmem:[%s5 + $0x38] sm:$0xff] %v914
  %979 = vst [vmem:[%s5 + $0x40] sm:$0xff] %v915
  %980 = vst [vmem:[%s5 + $0x48] sm:$0xff] %v916
  %981 = vst [vmem:[%s5 + $0x50] sm:$0xff] %v917
  %982 = vst [vmem:[%s5 + $0x58] sm:$0xff] %v918
  %983 = vst [vmem:[%s5 + $0x60] sm:$0xff] %v919
  %984 = vst [vmem:[%s5 + $0x68] sm:$0xff] %v920
  %985 = vst [vmem:[%s5 + $0x70] sm:$0xff] %v921
  %986 = vst [vmem:[%s5 + $0x78] sm:$0xff] %v922
  %987 = vst [vmem:[%s5 + $0x80] sm:$0xff] %v923
  %988 = vst [vmem:[%s5 + $0x88] sm:$0xff] %v924
  %989 = vst [vmem:[%s5 + $0x90] sm:$0xff] %v925
  %990 = vst [vmem:[%s5 + $0x98] sm:$0xff] %v926
  %991 = vst [vmem:[%s5 + $0xa0] sm:$0xff] %v927
  %992 = vst [vmem:[%s5 + $0xa8] sm:$0xff] %v928
  %993 = vst [vmem:[%s5 + $0xb0] sm:$0xff] %v929
  %994 = vst [vmem:[%s5 + $0xb8] sm:$0xff] %v930
  %995 = vst [vmem:[%s5 + $0xc0] sm:$0xff] %v931
  %996 = vst [vmem:[%s5 + $0xc8] sm:$0xff] %v932
  %997 = vst [vmem:[%s5 + $0xd0] sm:$0xff] %v933
  %998 = vst [vmem:[%s5 + $0xd8] sm:$0xff] %v934
  %999 = vst [vmem:[%s5 + $0xe0] sm:$0xff] %v935
  %1000 = vst [vmem:[%s5 + $0xe8] sm:$0xff] %v936
  %1001 = vst [vmem:[%s5 + $0xf0] sm:$0xff] %v937
  %1002 = vst [vmem:[%s5 + $0xf8] sm:$0xff] %v938
  %1003 = vst [vmem:[%s5 + $0x100] sm:$0xff] %v939
  %1004 = vst [vmem:[%s5 + $0x108] sm:$0xff] %v940
  %1005 = vst [vmem:[%s5 + $0x110] sm:$0xff] %v941
  %1006 = vst [vmem:[%s5 + $0x118] sm:$0xff] %v942
  %1007 = vst [vmem:[%s5 + $0x120] sm:$0xff] %v943
  %1008 = vst [vmem:[%s5 + $0x128] sm:$0xff] %v944
  %1009 = vst [vmem:[%s5 + $0x130] sm:$0xff] %v945
  %1010 = vst [vmem:[%s5 + $0x138] sm:$0xff] %v946
  %1011 = vst [vmem:[%s5 + $0x140] sm:$0xff] %v947
  %1012 = vst [vmem:[%s5 + $0x148] sm:$0xff] %v948
  %1013 = vst [vmem:[%s5 + $0x150] sm:$0xff] %v949
  %1014 = vst [vmem:[%s5 + $0x158] sm:$0xff] %v950
  %1015 = vst [vmem:[%s5 + $0x160] sm:$0xff] %v951
  %1016 = vst [vmem:[%s5 + $0x168] sm:$0xff] %v952
  %1017 = vst [vmem:[%s5 + $0x170] sm:$0xff] %v953
  %1018 = vst [vmem:[%s5 + $0x178] sm:$0xff] %v954
  %1019 = vst [vmem:[%s5 + $0x180] sm:$0xff] %v955
  %1020 = vst [vmem:[%s5 + $0x188] sm:$0xff] %v956
  %1021 = vst [vmem:[%s5 + $0x190] sm:$0xff] %v957
  %1022 = vst [vmem:[%s5 + $0x198] sm:$0xff] %v958
  %1023 = vst [vmem:[%s5 + $0x1a0] sm:$0xff] %v959
  %1024 = vst [vmem:[%s5 + $0x1a8] sm:$0xff] %v960
  %1025 = vst [vmem:[%s5 + $0x1b0] sm:$0xff] %v961
  %1026 = vst [vmem:[%s5 + $0x1b8] sm:$0xff] %v962
  %1027 = vst [vmem:[%s5 + $0x1c0] sm:$0xff] %v963
  %1028 = vst [vmem:[%s5 + $0x1c8] sm:$0xff] %v964
  %1029 = vst [vmem:[%s5 + $0x1d0] sm:$0xff] %v965
  %1030 = vst [vmem:[%s5 + $0x1d8] sm:$0xff] %v966
  %1031 = vst [vmem:[%s5 + $0x1e0] sm:$0xff] %v967
  %1032 = vst [vmem:[%s5 + $0x1e8] sm:$0xff] %v968
  %1033 = vst [vmem:[%s5 + $0x1f0] sm:$0xff] %v969
  %1034 = vst [vmem:[%s5 + $0x1f8] sm:$0xff] %v970
  // Predicated region
  $region22: #{dw_residual.3} parent=0 // pred_check
    _
  $region23: #{dw_residual.3} parent=0 // pred_check_branch
    %1036 = sbr.rel (0) target = $region25
  $region24: #{dw_residual.3} parent=0 // pred_region
    _
  $region25: #{dw_residual.3} parent=0 // pred_fallthru
    _
  // Predicated region
  $region26: #{dw_residual.3} parent=0 // pred_check
    _
  $region27: #{dw_residual.3} parent=0 // pred_check_branch
    %1038 = sbr.rel (0) target = $region29
  $region28: #{dw_residual.3} parent=0 // pred_region
    _
  $region29: #{dw_residual.3} parent=0 // pred_fallthru
    _

// kernel: dw_residual.5
$region0: #{dw_residual.5}
  #allocation0 [shape = 'u32[]', space=smem, size = 0x4, offset = 0x4, fixed_abs, tag = 'smem constant byte address 0x4 - core index']
  #allocation1 [shape = 'u32[144,128]{1,0:T(1,128)}', space=vmem, size = 0x12000, scoped, tag = 'internal scratch']
  %s0 = inlined_call_operand.vmem [shape: bf16[512,128], index: 0, kind: input, shape index: {}]
  %s1 = inlined_call_operand.vmem [shape: bf16[128,128], index: 1, kind: input, shape index: {}]
  %s2 = inlined_call_operand.vmem [shape: f32[1,128], index: 2, kind: input, shape index: {}]
  %s3 = inlined_call_operand.vmem [shape: f32[1,128], index: 3, kind: input, shape index: {}]
  %s4 = inlined_call_operand.vmem [shape: f32[512,128], index: 4, kind: input, shape index: {}]
  %s5 = inlined_call_operand.vmem [shape: f32[512,128], index: 5, kind: output, shape index: {}]
  %s6 = sld [smem:[#allocation0]]
  $region30: #{dw_residual.5} parent=0
    _
  %s8 = ssub.s32 1, %s6
  %s9 = scalar_select 0, %s8, %s6
  // Predicated region
  $region2: #{dw_residual.5} parent=0 // pred_check
    _
  $region3: #{dw_residual.5} parent=0 // pred_check_branch
    %11 = sbr.rel (0) target = $region5
  $region4: #{dw_residual.5} parent=0 // pred_region
    _
  $region5: #{dw_residual.5} parent=0 // pred_fallthru
    _
  // Predicated region
  $region6: #{dw_residual.5} parent=0 // pred_check
    _
  $region7: #{dw_residual.5} parent=0 // pred_check_branch
    %13 = sbr.rel (0) target = $region9
  $region8: #{dw_residual.5} parent=0 // pred_region
    _
  $region9: #{dw_residual.5} parent=0 // pred_fallthru
    _
  // Predicated region
  $region10: #{dw_residual.5} parent=0 // pred_check
    _
  $region11: #{dw_residual.5} parent=0 // pred_check_branch
    %15 = sbr.rel (0) target = $region13
  $region12: #{dw_residual.5} parent=0 // pred_region
    _
  $region13: #{dw_residual.5} parent=0 // pred_fallthru
    _
  // Predicated region
  $region14: #{dw_residual.5} parent=0 // pred_check
    _
  $region15: #{dw_residual.5} parent=0 // pred_check_branch
    %17 = sbr.rel (0) target = $region17
  $region16: #{dw_residual.5} parent=0 // pred_region
    _
  $region17: #{dw_residual.5} parent=0 // pred_fallthru
    _
  // Predicated region
  $region18: #{dw_residual.5} parent=0 // pred_check
    _
  $region19: #{dw_residual.5} parent=0 // pred_check_branch
    %19 = sbr.rel (0) target = $region21
  $region20: #{dw_residual.5} parent=0 // pred_region
    _
  $region21: #{dw_residual.5} parent=0 // pred_fallthru
    _
  %v21 = vld [vmem:[%s0] sm:$0xf]
  %v22 = vld [vmem:[%s0 + $0x4] sm:$0xf]
  %v23 = vld [vmem:[%s0 + $0x8] sm:$0xf]
  %v24 = vld [vmem:[%s0 + $0xc] sm:$0xf]
  %v25 = vld [vmem:[%s0 + $0x10] sm:$0xf]
  %v26 = vld [vmem:[%s0 + $0x14] sm:$0xf]
  %v27 = vld [vmem:[%s0 + $0x18] sm:$0xf]
  %v28 = vld [vmem:[%s0 + $0x1c] sm:$0xf]
  %v29 = vld [vmem:[%s0 + $0x20] sm:$0xf]
  %v30 = vld [vmem:[%s0 + $0x24] sm:$0xf]
  %v31 = vld [vmem:[%s0 + $0x28] sm:$0xf]
  %v32 = vld [vmem:[%s0 + $0x2c] sm:$0xf]
  %v33 = vld [vmem:[%s0 + $0x30] sm:$0xf]
  %v34 = vld [vmem:[%s0 + $0x34] sm:$0xf]
  %v35 = vld [vmem:[%s0 + $0x38] sm:$0xf]
  %v36 = vld [vmem:[%s0 + $0x3c] sm:$0xf]
  %v37 = vld [vmem:[%s0 + $0x40] sm:$0xf]
  %v38 = vld [vmem:[%s0 + $0x44] sm:$0xf]
  %v39 = vld [vmem:[%s0 + $0x48] sm:$0xf]
  %v40 = vld [vmem:[%s0 + $0x4c] sm:$0xf]
  %v41 = vld [vmem:[%s0 + $0x50] sm:$0xf]
  %v42 = vld [vmem:[%s0 + $0x54] sm:$0xf]
  %v43 = vld [vmem:[%s0 + $0x58] sm:$0xf]
  %v44 = vld [vmem:[%s0 + $0x5c] sm:$0xf]
  %v45 = vld [vmem:[%s0 + $0x60] sm:$0xf]
  %v46 = vld [vmem:[%s0 + $0x64] sm:$0xf]
  %v47 = vld [vmem:[%s0 + $0x68] sm:$0xf]
  %v48 = vld [vmem:[%s0 + $0x6c] sm:$0xf]
  %v49 = vld [vmem:[%s0 + $0x70] sm:$0xf]
  %v50 = vld [vmem:[%s0 + $0x74] sm:$0xf]
  %v51 = vld [vmem:[%s0 + $0x78] sm:$0xf]
  %v52 = vld [vmem:[%s0 + $0x7c] sm:$0xf]
  %v53 = vld [vmem:[%s0 + $0x80] sm:$0xf]
  %v54 = vld [vmem:[%s0 + $0x84] sm:$0xf]
  %v55 = vld [vmem:[%s0 + $0x88] sm:$0xf]
  %v56 = vld [vmem:[%s0 + $0x8c] sm:$0xf]
  %v57 = vld [vmem:[%s0 + $0x90] sm:$0xf]
  %v58 = vld [vmem:[%s0 + $0x94] sm:$0xf]
  %v59 = vld [vmem:[%s0 + $0x98] sm:$0xf]
  %v60 = vld [vmem:[%s0 + $0x9c] sm:$0xf]
  %v61 = vld [vmem:[%s0 + $0xa0] sm:$0xf]
  %v62 = vld [vmem:[%s0 + $0xa4] sm:$0xf]
  %v63 = vld [vmem:[%s0 + $0xa8] sm:$0xf]
  %v64 = vld [vmem:[%s0 + $0xac] sm:$0xf]
  %v65 = vld [vmem:[%s0 + $0xb0] sm:$0xf]
  %v66 = vld [vmem:[%s0 + $0xb4] sm:$0xf]
  %v67 = vld [vmem:[%s0 + $0xb8] sm:$0xf]
  %v68 = vld [vmem:[%s0 + $0xbc] sm:$0xf]
  %v69 = vld [vmem:[%s0 + $0xc0] sm:$0xf]
  %v70 = vld [vmem:[%s0 + $0xc4] sm:$0xf]
  %v71 = vld [vmem:[%s0 + $0xc8] sm:$0xf]
  %v72 = vld [vmem:[%s0 + $0xcc] sm:$0xf]
  %v73 = vld [vmem:[%s0 + $0xd0] sm:$0xf]
  %v74 = vld [vmem:[%s0 + $0xd4] sm:$0xf]
  %v75 = vld [vmem:[%s0 + $0xd8] sm:$0xf]
  %v76 = vld [vmem:[%s0 + $0xdc] sm:$0xf]
  %v77 = vld [vmem:[%s0 + $0xe0] sm:$0xf]
  %v78 = vld [vmem:[%s0 + $0xe4] sm:$0xf]
  %v79 = vld [vmem:[%s0 + $0xe8] sm:$0xf]
  %v80 = vld [vmem:[%s0 + $0xec] sm:$0xf]
  %v81 = vld [vmem:[%s0 + $0xf0] sm:$0xf]
  %v82 = vld [vmem:[%s0 + $0xf4] sm:$0xf]
  %v83 = vld [vmem:[%s0 + $0xf8] sm:$0xf]
  %v84 = vld [vmem:[%s0 + $0xfc] sm:$0xf]
  %v85 = vld [vmem:[%s1] sm:$0xf]
  %v86 = vld [vmem:[%s1 + $0x4] sm:$0xf]
  %v87 = vld [vmem:[%s1 + $0x8] sm:$0xf]
  %v88 = vld [vmem:[%s1 + $0xc] sm:$0xf]
  %v89 = vld [vmem:[%s1 + $0x10] sm:$0xf]
  %v90 = vld [vmem:[%s1 + $0x14] sm:$0xf]
  %v91 = vld [vmem:[%s1 + $0x18] sm:$0xf]
  %v92 = vld [vmem:[%s1 + $0x1c] sm:$0xf]
  %v93 = vld [vmem:[%s1 + $0x20] sm:$0xf]
  %v94 = vld [vmem:[%s1 + $0x24] sm:$0xf]
  %v95 = vld [vmem:[%s1 + $0x28] sm:$0xf]
  %v96 = vld [vmem:[%s1 + $0x2c] sm:$0xf]
  %v97 = vld [vmem:[%s1 + $0x30] sm:$0xf]
  %v98 = vld [vmem:[%s1 + $0x34] sm:$0xf]
  %v99 = vld [vmem:[%s1 + $0x38] sm:$0xf]
  %v100 = vld [vmem:[%s1 + $0x3c] sm:$0xf]
  %v165 = vunpack.c.l.b16 %v21
  %v166 = vunpack.c.l.b16 %v22
  %v167 = vunpack.c.l.b16 %v23
  %v168 = vunpack.c.l.b16 %v24
  %v169 = vunpack.c.l.b16 %v25
  %v170 = vunpack.c.l.b16 %v26
  %v171 = vunpack.c.l.b16 %v27
  %v172 = vunpack.c.l.b16 %v28
  %v173 = vunpack.c.l.b16 %v29
  %v174 = vunpack.c.l.b16 %v30
  %v175 = vunpack.c.l.b16 %v31
  %v176 = vunpack.c.l.b16 %v32
  %v177 = vunpack.c.l.b16 %v33
  %v178 = vunpack.c.l.b16 %v34
  %v179 = vunpack.c.l.b16 %v35
  %v180 = vunpack.c.l.b16 %v36
  %v181 = vunpack.c.l.b16 %v37
  %v182 = vunpack.c.l.b16 %v38
  %v183 = vunpack.c.l.b16 %v39
  %v184 = vunpack.c.l.b16 %v40
  %v185 = vunpack.c.l.b16 %v41
  %v186 = vunpack.c.l.b16 %v42
  %v187 = vunpack.c.l.b16 %v43
  %v188 = vunpack.c.l.b16 %v44
  %v189 = vunpack.c.l.b16 %v45
  %v190 = vunpack.c.l.b16 %v46
  %v191 = vunpack.c.l.b16 %v47
  %v192 = vunpack.c.l.b16 %v48
  %v193 = vunpack.c.l.b16 %v49
  %v194 = vunpack.c.l.b16 %v50
  %v195 = vunpack.c.l.b16 %v51
  %v196 = vunpack.c.l.b16 %v52
  %v197 = vunpack.c.l.b16 %v53
  %v198 = vunpack.c.l.b16 %v54
  %v199 = vunpack.c.l.b16 %v55
  %v200 = vunpack.c.l.b16 %v56
  %v201 = vunpack.c.l.b16 %v57
  %v202 = vunpack.c.l.b16 %v58
  %v203 = vunpack.c.l.b16 %v59
  %v204 = vunpack.c.l.b16 %v60
  %v205 = vunpack.c.l.b16 %v61
  %v206 = vunpack.c.l.b16 %v62
  %v207 = vunpack.c.l.b16 %v63
  %v208 = vunpack.c.l.b16 %v64
  %v209 = vunpack.c.l.b16 %v65
  %v210 = vunpack.c.l.b16 %v66
  %v211 = vunpack.c.l.b16 %v67
  %v212 = vunpack.c.l.b16 %v68
  %v213 = vunpack.c.l.b16 %v69
  %v214 = vunpack.c.l.b16 %v70
  %v215 = vunpack.c.l.b16 %v71
  %v216 = vunpack.c.l.b16 %v72
  %v217 = vunpack.c.l.b16 %v73
  %v218 = vunpack.c.l.b16 %v74
  %v219 = vunpack.c.l.b16 %v75
  %v220 = vunpack.c.l.b16 %v76
  %v221 = vunpack.c.l.b16 %v77
  %v222 = vunpack.c.l.b16 %v78
  %v223 = vunpack.c.l.b16 %v79
  %v224 = vunpack.c.l.b16 %v80
  %v225 = vunpack.c.l.b16 %v81
  %v226 = vunpack.c.l.b16 %v82
  %v227 = vunpack.c.l.b16 %v83
  %v228 = vunpack.c.l.b16 %v84
  %v229 = vpack.c.b16 %v166, %v165
  %v230 = vpack.c.b16 %v168, %v167
  %v231 = vpack.c.b16 %v170, %v169
  %v232 = vpack.c.b16 %v172, %v171
  %v233 = vpack.c.b16 %v174, %v173
  %v234 = vpack.c.b16 %v176, %v175
  %v235 = vpack.c.b16 %v178, %v177
  %v236 = vpack.c.b16 %v180, %v179
  %v237 = vpack.c.b16 %v182, %v181
  %v238 = vpack.c.b16 %v184, %v183
  %v239 = vpack.c.b16 %v186, %v185
  %v240 = vpack.c.b16 %v188, %v187
  %v241 = vpack.c.b16 %v190, %v189
  %v242 = vpack.c.b16 %v192, %v191
  %v243 = vpack.c.b16 %v194, %v193
  %v244 = vpack.c.b16 %v196, %v195
  %v245 = vpack.c.b16 %v198, %v197
  %v246 = vpack.c.b16 %v200, %v199
  %v247 = vpack.c.b16 %v202, %v201
  %v248 = vpack.c.b16 %v204, %v203
  %v249 = vpack.c.b16 %v206, %v205
  %v250 = vpack.c.b16 %v208, %v207
  %v251 = vpack.c.b16 %v210, %v209
  %v252 = vpack.c.b16 %v212, %v211
  %v253 = vpack.c.b16 %v214, %v213
  %v254 = vpack.c.b16 %v216, %v215
  %v255 = vpack.c.b16 %v218, %v217
  %v256 = vpack.c.b16 %v220, %v219
  %v257 = vpack.c.b16 %v222, %v221
  %v258 = vpack.c.b16 %v224, %v223
  %v259 = vpack.c.b16 %v226, %v225
  %v260 = vpack.c.b16 %v228, %v227
  %v309 = vunpack.c.l.b16 %v85
  %v310 = vunpack.c.l.b16 %v86
  %v311 = vunpack.c.l.b16 %v87
  %v312 = vunpack.c.l.b16 %v88
  %v313 = vunpack.c.l.b16 %v89
  %v314 = vunpack.c.l.b16 %v90
  %v315 = vunpack.c.l.b16 %v91
  %v316 = vunpack.c.l.b16 %v92
  %v317 = vunpack.c.l.b16 %v93
  %v318 = vunpack.c.l.b16 %v94
  %v319 = vunpack.c.l.b16 %v95
  %v320 = vunpack.c.l.b16 %v96
  %v321 = vunpack.c.l.b16 %v97
  %v322 = vunpack.c.l.b16 %v98
  %v323 = vunpack.c.l.b16 %v99
  %v324 = vunpack.c.l.b16 %v100
  %v325 = vpack.c.b16 %v310, %v309
  %v326 = vpack.c.b16 %v312, %v311
  %v327 = vpack.c.b16 %v314, %v313
  %v328 = vpack.c.b16 %v316, %v315
  %v329 = vpack.c.b16 %v318, %v317
  %v330 = vpack.c.b16 %v320, %v319
  %v331 = vpack.c.b16 %v322, %v321
  %v332 = vpack.c.b16 %v324, %v323
  %341 = vmatprep.subr.bf16.mxu0 0
  %342 = vmatpush1.bf16.msra.mxu0 %v325
  %343 = vmatprep.subr.bf16.mxu0 0
  %344 = vmatpush1.bf16.msra.mxu0 %v326
  %345 = vmatprep.subr.bf16.mxu0 0
  %346 = vmatpush1.bf16.msra.mxu0 %v327
  %347 = vmatprep.subr.bf16.mxu0 0
  %348 = vmatpush1.bf16.msra.mxu0 %v328
  %349 = vmatprep.subr.bf16.mxu0 0
  %350 = vmatpush1.bf16.msra.mxu0 %v329
  %351 = vmatprep.subr.bf16.mxu0 0
  %352 = vmatpush1.bf16.msra.mxu0 %v330
  %353 = vmatprep.subr.bf16.mxu0 0
  %354 = vmatpush1.bf16.msra.mxu0 %v331
  %355 = vmatprep.subr.bf16.mxu0 0
  %356 = vmatpush1.bf16.msra.mxu0 %v332
  %357 = vmatprep.subr.bf16.mxu0 0
  %358 = vmatpush1.bf16.msra.mxu0 0
  %359 = vmatprep.subr.bf16.mxu0 0
  %360 = vmatpush1.bf16.msra.mxu0 0
  %361 = vmatprep.subr.bf16.mxu0 0
  %362 = vmatpush1.bf16.msra.mxu0 0
  %363 = vmatprep.subr.bf16.mxu0 0
  %364 = vmatpush1.bf16.msra.mxu0 0
  %365 = vmatprep.subr.bf16.mxu0 0
  %366 = vmatpush1.bf16.msra.mxu0 0
  %367 = vmatprep.subr.bf16.mxu0 0
  %368 = vmatpush1.bf16.msra.mxu0 0
  %369 = vmatprep.subr.bf16.mxu0 0
  %370 = vmatpush1.bf16.msra.mxu0 0
  %371 = vmatprep.subr.bf16.mxu0 0
  %372 = vmatpush1.bf16.msra.mxu0 0
  %373 = vmatprep.mubr.bf16.mxu0 0
  %374 = vmatmul.mubr.bf16.gmra.mrb[0].mxu0 %v229
  %v375 = vpop.f32.mrb[0].mxu0
  %v376 = vadd.f32 0.0, %v375
  %v377 = vpop.f32.mrb[0].mxu0
  %v378 = vpop.f32.mrb[0].mxu0
  %v379 = vadd.f32 0.0, %v378
  %v380 = vpop.f32.mrb[0].mxu0
  %381 = vmatprep.mubr.bf16.mxu0 0
  %382 = vmatmul.mubr.bf16.gmra.mrb[0].mxu0 %v230
  %v383 = vpop.f32.mrb[0].mxu0
  %v384 = vadd.f32 0.0, %v383
  %v385 = vpop.f32.mrb[0].mxu0
  %v386 = vpop.f32.mrb[0].mxu0
  %v387 = vadd.f32 0.0, %v386
  %v388 = vpop.f32.mrb[0].mxu0
  %389 = vmatprep.mubr.bf16.mxu0 0
  %390 = vmatmul.mubr.bf16.gmra.mrb[0].mxu0 %v231
  %v391 = vpop.f32.mrb[0].mxu0
  %v392 = vadd.f32 0.0, %v391
  %v393 = vpop.f32.mrb[0].mxu0
  %v394 = vpop.f32.mrb[0].mxu0
  %v395 = vadd.f32 0.0, %v394
  %v396 = vpop.f32.mrb[0].mxu0
  %397 = vmatprep.mubr.bf16.mxu0 0
  %398 = vmatmul.mubr.bf16.gmra.mrb[0].mxu0 %v232
  %v399 = vpop.f32.mrb[0].mxu0
  %v400 = vadd.f32 0.0, %v399
  %v401 = vpop.f32.mrb[0].mxu0
  %v402 = vpop.f32.mrb[0].mxu0
  %v403 = vadd.f32 0.0, %v402
  %v404 = vpop.f32.mrb[0].mxu0
  %405 = vmatprep.mubr.bf16.mxu0 0
  %406 = vmatmul.mubr.bf16.gmra.mrb[0].mxu0 %v233
  %v407 = vpop.f32.mrb[0].mxu0
  %v408 = vadd.f32 0.0, %v407
  %v409 = vpop.f32.mrb[0].mxu0
  %v410 = vpop.f32.mrb[0].mxu0
  %v411 = vadd.f32 0.0, %v410
  %v412 = vpop.f32.mrb[0].mxu0
  %413 = vmatprep.mubr.bf16.mxu0 0
  %414 = vmatmul.mubr.bf16.gmra.mrb[0].mxu0 %v234
  %v415 = vpop.f32.mrb[0].mxu0
  %v416 = vadd.f32 0.0, %v415
  %v417 = vpop.f32.mrb[0].mxu0
  %v418 = vpop.f32.mrb[0].mxu0
  %v419 = vadd.f32 0.0, %v418
  %v420 = vpop.f32.mrb[0].mxu0
  %421 = vmatprep.mubr.bf16.mxu0 0
  %422 = vmatmul.mubr.bf16.gmra.mrb[0].mxu0 %v235
  %v423 = vpop.f32.mrb[0].mxu0
  %v424 = vadd.f32 0.0, %v423
  %v425 = vpop.f32.mrb[0].mxu0
  %v426 = vpop.f32.mrb[0].mxu0
  %v427 = vadd.f32 0.0, %v426
  %v428 = vpop.f32.mrb[0].mxu0
  %429 = vmatprep.mubr.bf16.mxu0 0
  %430 = vmatmul.mubr.bf16.gmra.mrb[0].mxu0 %v236
  %v431 = vpop.f32.mrb[0].mxu0
  %v432 = vadd.f32 0.0, %v431
  %v433 = vpop.f32.mrb[0].mxu0
  %v434 = vpop.f32.mrb[0].mxu0
  %v435 = vadd.f32 0.0, %v434
  %v436 = vpop.f32.mrb[0].mxu0
  %437 = vmatprep.mubr.bf16.mxu0 0
  %438 = vmatmul.mubr.bf16.gmra.mrb[0].mxu0 %v237
  %v439 = vpop.f32.mrb[0].mxu0
  %v440 = vadd.f32 0.0, %v439
  %v441 = vpop.f32.mrb[0].mxu0
  %v442 = vpop.f32.mrb[0].mxu0
  %v443 = vadd.f32 0.0, %v442
  %v444 = vpop.f32.mrb[0].mxu0
  %445 = vmatprep.mubr.bf16.mxu0 0
  %446 = vmatmul.mubr.bf16.gmra.mrb[0].mxu0 %v238
  %v447 = vpop.f32.mrb[0].mxu0
  %v448 = vadd.f32 0.0, %v447
  %v449 = vpop.f32.mrb[0].mxu0
  %v450 = vpop.f32.mrb[0].mxu0
  %v451 = vadd.f32 0.0, %v450
  %v452 = vpop.f32.mrb[0].mxu0
  %453 = vmatprep.mubr.bf16.mxu0 0
  %454 = vmatmul.mubr.bf16.gmra.mrb[0].mxu0 %v239
  %v455 = vpop.f32.mrb[0].mxu0
  %v456 = vadd.f32 0.0, %v455
  %v457 = vpop.f32.mrb[0].mxu0
  %v458 = vpop.f32.mrb[0].mxu0
  %v459 = vadd.f32 0.0, %v458
  %v460 = vpop.f32.mrb[0].mxu0
  %461 = vmatprep.mubr.bf16.mxu0 0
  %462 = vmatmul.mubr.bf16.gmra.mrb[0].mxu0 %v240
  %v463 = vpop.f32.mrb[0].mxu0
  %v464 = vadd.f32 0.0, %v463
  %v465 = vpop.f32.mrb[0].mxu0
  %v466 = vpop.f32.mrb[0].mxu0
  %v467 = vadd.f32 0.0, %v466
  %v468 = vpop.f32.mrb[0].mxu0
  %469 = vmatprep.mubr.bf16.mxu0 0
  %470 = vmatmul.mubr.bf16.gmra.mrb[0].mxu0 %v241
  %v471 = vpop.f32.mrb[0].mxu0
  %v472 = vadd.f32 0.0, %v471
  %v473 = vpop.f32.mrb[0].mxu0
  %v474 = vpop.f32.mrb[0].mxu0
  %v475 = vadd.f32 0.0, %v474
  %v476 = vpop.f32.mrb[0].mxu0
  %477 = vmatprep.mubr.bf16.mxu0 0
  %478 = vmatmul.mubr.bf16.gmra.mrb[0].mxu0 %v242
  %v479 = vpop.f32.mrb[0].mxu0
  %v480 = vadd.f32 0.0, %v479
  %v481 = vpop.f32.mrb[0].mxu0
  %v482 = vpop.f32.mrb[0].mxu0
  %v483 = vadd.f32 0.0, %v482
  %v484 = vpop.f32.mrb[0].mxu0
  %485 = vmatprep.mubr.bf16.mxu0 0
  %486 = vmatmul.mubr.bf16.gmra.mrb[0].mxu0 %v243
  %v487 = vpop.f32.mrb[0].mxu0
  %v488 = vadd.f32 0.0, %v487
  %v489 = vpop.f32.mrb[0].mxu0
  %v490 = vpop.f32.mrb[0].mxu0
  %v491 = vadd.f32 0.0, %v490
  %v492 = vpop.f32.mrb[0].mxu0
  %493 = vmatprep.mubr.bf16.mxu0 0
  %494 = vmatmul.mubr.bf16.gmra.mrb[0].mxu0 %v244
  %v495 = vpop.f32.mrb[0].mxu0
  %v496 = vadd.f32 0.0, %v495
  %v497 = vpop.f32.mrb[0].mxu0
  %v498 = vpop.f32.mrb[0].mxu0
  %v499 = vadd.f32 0.0, %v498
  %v500 = vpop.f32.mrb[0].mxu0
  %501 = vmatprep.mubr.bf16.mxu0 0
  %502 = vmatmul.mubr.bf16.gmra.mrb[0].mxu0 %v245
  %v503 = vpop.f32.mrb[0].mxu0
  %v504 = vadd.f32 0.0, %v503
  %v505 = vpop.f32.mrb[0].mxu0
  %v506 = vpop.f32.mrb[0].mxu0
  %v507 = vadd.f32 0.0, %v506
  %v508 = vpop.f32.mrb[0].mxu0
  %509 = vmatprep.mubr.bf16.mxu0 0
  %510 = vmatmul.mubr.bf16.gmra.mrb[0].mxu0 %v246
  %v511 = vpop.f32.mrb[0].mxu0
  %v512 = vadd.f32 0.0, %v511
  %v513 = vpop.f32.mrb[0].mxu0
  %v514 = vpop.f32.mrb[0].mxu0
  %v515 = vadd.f32 0.0, %v514
  %v516 = vpop.f32.mrb[0].mxu0
  %517 = vmatprep.mubr.bf16.mxu0 0
  %518 = vmatmul.mubr.bf16.gmra.mrb[0].mxu0 %v247
  %v519 = vpop.f32.mrb[0].mxu0
  %v520 = vadd.f32 0.0, %v519
  %v521 = vpop.f32.mrb[0].mxu0
  %v522 = vpop.f32.mrb[0].mxu0
  %v523 = vadd.f32 0.0, %v522
  %v524 = vpop.f32.mrb[0].mxu0
  %525 = vmatprep.mubr.bf16.mxu0 0
  %526 = vmatmul.mubr.bf16.gmra.mrb[0].mxu0 %v248
  %v527 = vpop.f32.mrb[0].mxu0
  %v528 = vadd.f32 0.0, %v527
  %v529 = vpop.f32.mrb[0].mxu0
  %v530 = vpop.f32.mrb[0].mxu0
  %v531 = vadd.f32 0.0, %v530
  %v532 = vpop.f32.mrb[0].mxu0
  %533 = vmatprep.mubr.bf16.mxu0 0
  %534 = vmatmul.mubr.bf16.gmra.mrb[0].mxu0 %v249
  %v535 = vpop.f32.mrb[0].mxu0
  %v536 = vadd.f32 0.0, %v535
  %v537 = vpop.f32.mrb[0].mxu0
  %v538 = vpop.f32.mrb[0].mxu0
  %v539 = vadd.f32 0.0, %v538
  %v540 = vpop.f32.mrb[0].mxu0
  %541 = vmatprep.mubr.bf16.mxu0 0
  %542 = vmatmul.mubr.bf16.gmra.mrb[0].mxu0 %v250
  %v543 = vpop.f32.mrb[0].mxu0
  %v544 = vadd.f32 0.0, %v543
  %v545 = vpop.f32.mrb[0].mxu0
  %v546 = vpop.f32.mrb[0].mxu0
  %v547 = vadd.f32 0.0, %v546
  %v548 = vpop.f32.mrb[0].mxu0
  %549 = vmatprep.mubr.bf16.mxu0 0
  %550 = vmatmul.mubr.bf16.gmra.mrb[0].mxu0 %v251
  %v551 = vpop.f32.mrb[0].mxu0
  %v552 = vadd.f32 0.0, %v551
  %v553 = vpop.f32.mrb[0].mxu0
  %v554 = vpop.f32.mrb[0].mxu0
  %v555 = vadd.f32 0.0, %v554
  %v556 = vpop.f32.mrb[0].mxu0
  %557 = vmatprep.mubr.bf16.mxu0 0
  %558 = vmatmul.mubr.bf16.gmra.mrb[0].mxu0 %v252
  %v559 = vpop.f32.mrb[0].mxu0
  %v560 = vadd.f32 0.0, %v559
  %v561 = vpop.f32.mrb[0].mxu0
  %v562 = vpop.f32.mrb[0].mxu0
  %v563 = vadd.f32 0.0, %v562
  %v564 = vpop.f32.mrb[0].mxu0
  %565 = vmatprep.mubr.bf16.mxu0 0
  %566 = vmatmul.mubr.bf16.gmra.mrb[0].mxu0 %v253
  %v567 = vpop.f32.mrb[0].mxu0
  %v568 = vadd.f32 0.0, %v567
  %v569 = vpop.f32.mrb[0].mxu0
  %v570 = vpop.f32.mrb[0].mxu0
  %v571 = vadd.f32 0.0, %v570
  %v572 = vpop.f32.mrb[0].mxu0
  %573 = vmatprep.mubr.bf16.mxu0 0
  %574 = vmatmul.mubr.bf16.gmra.mrb[0].mxu0 %v254
  %v575 = vpop.f32.mrb[0].mxu0
  %v576 = vadd.f32 0.0, %v575
  %v577 = vpop.f32.mrb[0].mxu0
  %v578 = vpop.f32.mrb[0].mxu0
  %v579 = vadd.f32 0.0, %v578
  %v580 = vpop.f32.mrb[0].mxu0
  %581 = vmatprep.mubr.bf16.mxu0 0
  %582 = vmatmul.mubr.bf16.gmra.mrb[0].mxu0 %v255
  %v583 = vpop.f32.mrb[0].mxu0
  %v584 = vadd.f32 0.0, %v583
  %v585 = vpop.f32.mrb[0].mxu0
  %v586 = vpop.f32.mrb[0].mxu0
  %v587 = vadd.f32 0.0, %v586
  %v588 = vpop.f32.mrb[0].mxu0
  %589 = vmatprep.mubr.bf16.mxu0 0
  %590 = vmatmul.mubr.bf16.gmra.mrb[0].mxu0 %v256
  %v591 = vpop.f32.mrb[0].mxu0
  %v592 = vadd.f32 0.0, %v591
  %v593 = vpop.f32.mrb[0].mxu0
  %v594 = vpop.f32.mrb[0].mxu0
  %v595 = vadd.f32 0.0, %v594
  %v596 = vpop.f32.mrb[0].mxu0
  %597 = vmatprep.mubr.bf16.mxu0 0
  %598 = vmatmul.mubr.bf16.gmra.mrb[0].mxu0 %v257
  %v599 = vpop.f32.mrb[0].mxu0
  %v600 = vadd.f32 0.0, %v599
  %v601 = vpop.f32.mrb[0].mxu0
  %v602 = vpop.f32.mrb[0].mxu0
  %v603 = vadd.f32 0.0, %v602
  %v604 = vpop.f32.mrb[0].mxu0
  %605 = vmatprep.mubr.bf16.mxu0 0
  %606 = vmatmul.mubr.bf16.gmra.mrb[0].mxu0 %v258
  %v607 = vpop.f32.mrb[0].mxu0
  %v608 = vadd.f32 0.0, %v607
  %v609 = vpop.f32.mrb[0].mxu0
  %v610 = vpop.f32.mrb[0].mxu0
  %v611 = vadd.f32 0.0, %v610
  %v612 = vpop.f32.mrb[0].mxu0
  %613 = vmatprep.mubr.bf16.mxu0 0
  %614 = vmatmul.mubr.bf16.gmra.mrb[0].mxu0 %v259
  %v615 = vpop.f32.mrb[0].mxu0
  %v616 = vadd.f32 0.0, %v615
  %v617 = vpop.f32.mrb[0].mxu0
  %v618 = vpop.f32.mrb[0].mxu0
  %v619 = vadd.f32 0.0, %v618
  %v620 = vpop.f32.mrb[0].mxu0
  %621 = vmatprep.mubr.bf16.mxu0 0
  %622 = vmatmul.mubr.bf16.gmra.mrb[0].mxu0 %v260
  %v623 = vpop.f32.mrb[0].mxu0
  %v624 = vadd.f32 0.0, %v623
  %v625 = vpop.f32.mrb[0].mxu0
  %v626 = vpop.f32.mrb[0].mxu0
  %v627 = vadd.f32 0.0, %v626
  %v628 = vpop.f32.mrb[0].mxu0
  %629 = vdwg.mxu0
  %v630 = vld [vmem:[%s2] sm:$0x1]
  %v632 = vlaneseq
  %v633 = vshrl.u32 %v632, 7
  %v634 = vsub.s32 0, %v633
  %v635 = vrot.slane %v630, %v634
  %v637 = vmul.f32 %v376, %v635
  %v638 = vmul.f32 %v379, %v635
  %v639 = vmul.f32 %v384, %v635
  %v640 = vmul.f32 %v387, %v635
  %v641 = vmul.f32 %v392, %v635
  %v642 = vmul.f32 %v395, %v635
  %v643 = vmul.f32 %v400, %v635
  %v644 = vmul.f32 %v403, %v635
  %v645 = vmul.f32 %v408, %v635
  %v646 = vmul.f32 %v411, %v635
  %v647 = vmul.f32 %v416, %v635
  %v648 = vmul.f32 %v419, %v635
  %v649 = vmul.f32 %v424, %v635
  %v650 = vmul.f32 %v427, %v635
  %v651 = vmul.f32 %v432, %v635
  %v652 = vmul.f32 %v435, %v635
  %v653 = vmul.f32 %v440, %v635
  %v654 = vmul.f32 %v443, %v635
  %v655 = vmul.f32 %v448, %v635
  %v656 = vmul.f32 %v451, %v635
  %v657 = vmul.f32 %v456, %v635
  %v658 = vmul.f32 %v459, %v635
  %v659 = vmul.f32 %v464, %v635
  %v660 = vmul.f32 %v467, %v635
  %v661 = vmul.f32 %v472, %v635
  %v662 = vmul.f32 %v475, %v635
  %v663 = vmul.f32 %v480, %v635
  %v664 = vmul.f32 %v483, %v635
  %v665 = vmul.f32 %v488, %v635
  %v666 = vmul.f32 %v491, %v635
  %v667 = vmul.f32 %v496, %v635
  %v668 = vmul.f32 %v499, %v635
  %v669 = vmul.f32 %v504, %v635
  %v670 = vmul.f32 %v507, %v635
  %v671 = vmul.f32 %v512, %v635
  %v672 = vmul.f32 %v515, %v635
  %v673 = vmul.f32 %v520, %v635
  %v674 = vmul.f32 %v523, %v635
  %v675 = vmul.f32 %v528, %v635
  %v676 = vmul.f32 %v531, %v635
  %v677 = vmul.f32 %v536, %v635
  %v678 = vmul.f32 %v539, %v635
  %v679 = vmul.f32 %v544, %v635
  %v680 = vmul.f32 %v547, %v635
  %v681 = vmul.f32 %v552, %v635
  %v682 = vmul.f32 %v555, %v635
  %v683 = vmul.f32 %v560, %v635
  %v684 = vmul.f32 %v563, %v635
  %v685 = vmul.f32 %v568, %v635
  %v686 = vmul.f32 %v571, %v635
  %v687 = vmul.f32 %v576, %v635
  %v688 = vmul.f32 %v579, %v635
  %v689 = vmul.f32 %v584, %v635
  %v690 = vmul.f32 %v587, %v635
  %v691 = vmul.f32 %v592, %v635
  %v692 = vmul.f32 %v595, %v635
  %v693 = vmul.f32 %v600, %v635
  %v694 = vmul.f32 %v603, %v635
  %v695 = vmul.f32 %v608, %v635
  %v696 = vmul.f32 %v611, %v635
  %v697 = vmul.f32 %v616, %v635
  %v698 = vmul.f32 %v619, %v635
  %v699 = vmul.f32 %v624, %v635
  %v700 = vmul.f32 %v627, %v635
  %v701 = vld [vmem:[%s3] sm:$0x1]
  %v703 = vlaneseq
  %v704 = vshrl.u32 %v703, 7
  %v705 = vsub.s32 0, %v704
  %v706 = vrot.slane %v701, %v705
  %v708 = vadd.f32 %v637, %v706
  %v709 = vadd.f32 %v638, %v706
  %v710 = vadd.f32 %v639, %v706
  %v711 = vadd.f32 %v640, %v706
  %v712 = vadd.f32 %v641, %v706
  %v713 = vadd.f32 %v642, %v706
  %v714 = vadd.f32 %v643, %v706
  %v715 = vadd.f32 %v644, %v706
  %v716 = vadd.f32 %v645, %v706
  %v717 = vadd.f32 %v646, %v706
  %v718 = vadd.f32 %v647, %v706
  %v719 = vadd.f32 %v648, %v706
  %v720 = vadd.f32 %v649, %v706
  %v721 = vadd.f32 %v650, %v706
  %v722 = vadd.f32 %v651, %v706
  %v723 = vadd.f32 %v652, %v706
  %v724 = vadd.f32 %v653, %v706
  %v725 = vadd.f32 %v654, %v706
  %v726 = vadd.f32 %v655, %v706
  %v727 = vadd.f32 %v656, %v706
  %v728 = vadd.f32 %v657, %v706
  %v729 = vadd.f32 %v658, %v706
  %v730 = vadd.f32 %v659, %v706
  %v731 = vadd.f32 %v660, %v706
  %v732 = vadd.f32 %v661, %v706
  %v733 = vadd.f32 %v662, %v706
  %v734 = vadd.f32 %v663, %v706
  %v735 = vadd.f32 %v664, %v706
  %v736 = vadd.f32 %v665, %v706
  %v737 = vadd.f32 %v666, %v706
  %v738 = vadd.f32 %v667, %v706
  %v739 = vadd.f32 %v668, %v706
  %v740 = vadd.f32 %v669, %v706
  %v741 = vadd.f32 %v670, %v706
  %v742 = vadd.f32 %v671, %v706
  %v743 = vadd.f32 %v672, %v706
  %v744 = vadd.f32 %v673, %v706
  %v745 = vadd.f32 %v674, %v706
  %v746 = vadd.f32 %v675, %v706
  %v747 = vadd.f32 %v676, %v706
  %v748 = vadd.f32 %v677, %v706
  %v749 = vadd.f32 %v678, %v706
  %v750 = vadd.f32 %v679, %v706
  %v751 = vadd.f32 %v680, %v706
  %v752 = vadd.f32 %v681, %v706
  %v753 = vadd.f32 %v682, %v706
  %v754 = vadd.f32 %v683, %v706
  %v755 = vadd.f32 %v684, %v706
  %v756 = vadd.f32 %v685, %v706
  %v757 = vadd.f32 %v686, %v706
  %v758 = vadd.f32 %v687, %v706
  %v759 = vadd.f32 %v688, %v706
  %v760 = vadd.f32 %v689, %v706
  %v761 = vadd.f32 %v690, %v706
  %v762 = vadd.f32 %v691, %v706
  %v763 = vadd.f32 %v692, %v706
  %v764 = vadd.f32 %v693, %v706
  %v765 = vadd.f32 %v694, %v706
  %v766 = vadd.f32 %v695, %v706
  %v767 = vadd.f32 %v696, %v706
  %v768 = vadd.f32 %v697, %v706
  %v769 = vadd.f32 %v698, %v706
  %v770 = vadd.f32 %v699, %v706
  %v771 = vadd.f32 %v700, %v706
  %v772 = vld [vmem:[%s4] sm:$0xff]
  %v773 = vld [vmem:[%s4 + $0x8] sm:$0xff]
  %v774 = vld [vmem:[%s4 + $0x10] sm:$0xff]
  %v775 = vld [vmem:[%s4 + $0x18] sm:$0xff]
  %v776 = vld [vmem:[%s4 + $0x20] sm:$0xff]
  %v777 = vld [vmem:[%s4 + $0x28] sm:$0xff]
  %v778 = vld [vmem:[%s4 + $0x30] sm:$0xff]
  %v779 = vld [vmem:[%s4 + $0x38] sm:$0xff]
  %v780 = vld [vmem:[%s4 + $0x40] sm:$0xff]
  %v781 = vld [vmem:[%s4 + $0x48] sm:$0xff]
  %v782 = vld [vmem:[%s4 + $0x50] sm:$0xff]
  %v783 = vld [vmem:[%s4 + $0x58] sm:$0xff]
  %v784 = vld [vmem:[%s4 + $0x60] sm:$0xff]
  %v785 = vld [vmem:[%s4 + $0x68] sm:$0xff]
  %v786 = vld [vmem:[%s4 + $0x70] sm:$0xff]
  %v787 = vld [vmem:[%s4 + $0x78] sm:$0xff]
  %v788 = vld [vmem:[%s4 + $0x80] sm:$0xff]
  %v789 = vld [vmem:[%s4 + $0x88] sm:$0xff]
  %v790 = vld [vmem:[%s4 + $0x90] sm:$0xff]
  %v791 = vld [vmem:[%s4 + $0x98] sm:$0xff]
  %v792 = vld [vmem:[%s4 + $0xa0] sm:$0xff]
  %v793 = vld [vmem:[%s4 + $0xa8] sm:$0xff]
  %v794 = vld [vmem:[%s4 + $0xb0] sm:$0xff]
  %v795 = vld [vmem:[%s4 + $0xb8] sm:$0xff]
  %v796 = vld [vmem:[%s4 + $0xc0] sm:$0xff]
  %v797 = vld [vmem:[%s4 + $0xc8] sm:$0xff]
  %v798 = vld [vmem:[%s4 + $0xd0] sm:$0xff]
  %v799 = vld [vmem:[%s4 + $0xd8] sm:$0xff]
  %v800 = vld [vmem:[%s4 + $0xe0] sm:$0xff]
  %v801 = vld [vmem:[%s4 + $0xe8] sm:$0xff]
  %v802 = vld [vmem:[%s4 + $0xf0] sm:$0xff]
  %v803 = vld [vmem:[%s4 + $0xf8] sm:$0xff]
  %v804 = vld [vmem:[%s4 + $0x100] sm:$0xff]
  %v805 = vld [vmem:[%s4 + $0x108] sm:$0xff]
  %v806 = vld [vmem:[%s4 + $0x110] sm:$0xff]
  %v807 = vld [vmem:[%s4 + $0x118] sm:$0xff]
  %v808 = vld [vmem:[%s4 + $0x120] sm:$0xff]
  %v809 = vld [vmem:[%s4 + $0x128] sm:$0xff]
  %v810 = vld [vmem:[%s4 + $0x130] sm:$0xff]
  %v811 = vld [vmem:[%s4 + $0x138] sm:$0xff]
  %v812 = vld [vmem:[%s4 + $0x140] sm:$0xff]
  %v813 = vld [vmem:[%s4 + $0x148] sm:$0xff]
  %v814 = vld [vmem:[%s4 + $0x150] sm:$0xff]
  %v815 = vld [vmem:[%s4 + $0x158] sm:$0xff]
  %v816 = vld [vmem:[%s4 + $0x160] sm:$0xff]
  %v817 = vld [vmem:[%s4 + $0x168] sm:$0xff]
  %v818 = vld [vmem:[%s4 + $0x170] sm:$0xff]
  %v819 = vld [vmem:[%s4 + $0x178] sm:$0xff]
  %v820 = vld [vmem:[%s4 + $0x180] sm:$0xff]
  %v821 = vld [vmem:[%s4 + $0x188] sm:$0xff]
  %v822 = vld [vmem:[%s4 + $0x190] sm:$0xff]
  %v823 = vld [vmem:[%s4 + $0x198] sm:$0xff]
  %v824 = vld [vmem:[%s4 + $0x1a0] sm:$0xff]
  %v825 = vld [vmem:[%s4 + $0x1a8] sm:$0xff]
  %v826 = vld [vmem:[%s4 + $0x1b0] sm:$0xff]
  %v827 = vld [vmem:[%s4 + $0x1b8] sm:$0xff]
  %v828 = vld [vmem:[%s4 + $0x1c0] sm:$0xff]
  %v829 = vld [vmem:[%s4 + $0x1c8] sm:$0xff]
  %v830 = vld [vmem:[%s4 + $0x1d0] sm:$0xff]
  %v831 = vld [vmem:[%s4 + $0x1d8] sm:$0xff]
  %v832 = vld [vmem:[%s4 + $0x1e0] sm:$0xff]
  %v833 = vld [vmem:[%s4 + $0x1e8] sm:$0xff]
  %v834 = vld [vmem:[%s4 + $0x1f0] sm:$0xff]
  %v835 = vld [vmem:[%s4 + $0x1f8] sm:$0xff]
  %v836 = vadd.f32 %v708, %v772
  %v837 = vadd.f32 %v709, %v773
  %v838 = vadd.f32 %v710, %v774
  %v839 = vadd.f32 %v711, %v775
  %v840 = vadd.f32 %v712, %v776
  %v841 = vadd.f32 %v713, %v777
  %v842 = vadd.f32 %v714, %v778
  %v843 = vadd.f32 %v715, %v779
  %v844 = vadd.f32 %v716, %v780
  %v845 = vadd.f32 %v717, %v781
  %v846 = vadd.f32 %v718, %v782
  %v847 = vadd.f32 %v719, %v783
  %v848 = vadd.f32 %v720, %v784
  %v849 = vadd.f32 %v721, %v785
  %v850 = vadd.f32 %v722, %v786
  %v851 = vadd.f32 %v723, %v787
  %v852 = vadd.f32 %v724, %v788
  %v853 = vadd.f32 %v725, %v789
  %v854 = vadd.f32 %v726, %v790
  %v855 = vadd.f32 %v727, %v791
  %v856 = vadd.f32 %v728, %v792
  %v857 = vadd.f32 %v729, %v793
  %v858 = vadd.f32 %v730, %v794
  %v859 = vadd.f32 %v731, %v795
  %v860 = vadd.f32 %v732, %v796
  %v861 = vadd.f32 %v733, %v797
  %v862 = vadd.f32 %v734, %v798
  %v863 = vadd.f32 %v735, %v799
  %v864 = vadd.f32 %v736, %v800
  %v865 = vadd.f32 %v737, %v801
  %v866 = vadd.f32 %v738, %v802
  %v867 = vadd.f32 %v739, %v803
  %v868 = vadd.f32 %v740, %v804
  %v869 = vadd.f32 %v741, %v805
  %v870 = vadd.f32 %v742, %v806
  %v871 = vadd.f32 %v743, %v807
  %v872 = vadd.f32 %v744, %v808
  %v873 = vadd.f32 %v745, %v809
  %v874 = vadd.f32 %v746, %v810
  %v875 = vadd.f32 %v747, %v811
  %v876 = vadd.f32 %v748, %v812
  %v877 = vadd.f32 %v749, %v813
  %v878 = vadd.f32 %v750, %v814
  %v879 = vadd.f32 %v751, %v815
  %v880 = vadd.f32 %v752, %v816
  %v881 = vadd.f32 %v753, %v817
  %v882 = vadd.f32 %v754, %v818
  %v883 = vadd.f32 %v755, %v819
  %v884 = vadd.f32 %v756, %v820
  %v885 = vadd.f32 %v757, %v821
  %v886 = vadd.f32 %v758, %v822
  %v887 = vadd.f32 %v759, %v823
  %v888 = vadd.f32 %v760, %v824
  %v889 = vadd.f32 %v761, %v825
  %v890 = vadd.f32 %v762, %v826
  %v891 = vadd.f32 %v763, %v827
  %v892 = vadd.f32 %v764, %v828
  %v893 = vadd.f32 %v765, %v829
  %v894 = vadd.f32 %v766, %v830
  %v895 = vadd.f32 %v767, %v831
  %v896 = vadd.f32 %v768, %v832
  %v897 = vadd.f32 %v769, %v833
  %v898 = vadd.f32 %v770, %v834
  %v899 = vadd.f32 %v771, %v835
  %900 = vst [vmem:[%s5] sm:$0xff] %v836
  %901 = vst [vmem:[%s5 + $0x8] sm:$0xff] %v837
  %902 = vst [vmem:[%s5 + $0x10] sm:$0xff] %v838
  %903 = vst [vmem:[%s5 + $0x18] sm:$0xff] %v839
  %904 = vst [vmem:[%s5 + $0x20] sm:$0xff] %v840
  %905 = vst [vmem:[%s5 + $0x28] sm:$0xff] %v841
  %906 = vst [vmem:[%s5 + $0x30] sm:$0xff] %v842
  %907 = vst [vmem:[%s5 + $0x38] sm:$0xff] %v843
  %908 = vst [vmem:[%s5 + $0x40] sm:$0xff] %v844
  %909 = vst [vmem:[%s5 + $0x48] sm:$0xff] %v845
  %910 = vst [vmem:[%s5 + $0x50] sm:$0xff] %v846
  %911 = vst [vmem:[%s5 + $0x58] sm:$0xff] %v847
  %912 = vst [vmem:[%s5 + $0x60] sm:$0xff] %v848
  %913 = vst [vmem:[%s5 + $0x68] sm:$0xff] %v849
  %914 = vst [vmem:[%s5 + $0x70] sm:$0xff] %v850
  %915 = vst [vmem:[%s5 + $0x78] sm:$0xff] %v851
  %916 = vst [vmem:[%s5 + $0x80] sm:$0xff] %v852
  %917 = vst [vmem:[%s5 + $0x88] sm:$0xff] %v853
  %918 = vst [vmem:[%s5 + $0x90] sm:$0xff] %v854
  %919 = vst [vmem:[%s5 + $0x98] sm:$0xff] %v855
  %920 = vst [vmem:[%s5 + $0xa0] sm:$0xff] %v856
  %921 = vst [vmem:[%s5 + $0xa8] sm:$0xff] %v857
  %922 = vst [vmem:[%s5 + $0xb0] sm:$0xff] %v858
  %923 = vst [vmem:[%s5 + $0xb8] sm:$0xff] %v859
  %924 = vst [vmem:[%s5 + $0xc0] sm:$0xff] %v860
  %925 = vst [vmem:[%s5 + $0xc8] sm:$0xff] %v861
  %926 = vst [vmem:[%s5 + $0xd0] sm:$0xff] %v862
  %927 = vst [vmem:[%s5 + $0xd8] sm:$0xff] %v863
  %928 = vst [vmem:[%s5 + $0xe0] sm:$0xff] %v864
  %929 = vst [vmem:[%s5 + $0xe8] sm:$0xff] %v865
  %930 = vst [vmem:[%s5 + $0xf0] sm:$0xff] %v866
  %931 = vst [vmem:[%s5 + $0xf8] sm:$0xff] %v867
  %932 = vst [vmem:[%s5 + $0x100] sm:$0xff] %v868
  %933 = vst [vmem:[%s5 + $0x108] sm:$0xff] %v869
  %934 = vst [vmem:[%s5 + $0x110] sm:$0xff] %v870
  %935 = vst [vmem:[%s5 + $0x118] sm:$0xff] %v871
  %936 = vst [vmem:[%s5 + $0x120] sm:$0xff] %v872
  %937 = vst [vmem:[%s5 + $0x128] sm:$0xff] %v873
  %938 = vst [vmem:[%s5 + $0x130] sm:$0xff] %v874
  %939 = vst [vmem:[%s5 + $0x138] sm:$0xff] %v875
  %940 = vst [vmem:[%s5 + $0x140] sm:$0xff] %v876
  %941 = vst [vmem:[%s5 + $0x148] sm:$0xff] %v877
  %942 = vst [vmem:[%s5 + $0x150] sm:$0xff] %v878
  %943 = vst [vmem:[%s5 + $0x158] sm:$0xff] %v879
  %944 = vst [vmem:[%s5 + $0x160] sm:$0xff] %v880
  %945 = vst [vmem:[%s5 + $0x168] sm:$0xff] %v881
  %946 = vst [vmem:[%s5 + $0x170] sm:$0xff] %v882
  %947 = vst [vmem:[%s5 + $0x178] sm:$0xff] %v883
  %948 = vst [vmem:[%s5 + $0x180] sm:$0xff] %v884
  %949 = vst [vmem:[%s5 + $0x188] sm:$0xff] %v885
  %950 = vst [vmem:[%s5 + $0x190] sm:$0xff] %v886
  %951 = vst [vmem:[%s5 + $0x198] sm:$0xff] %v887
  %952 = vst [vmem:[%s5 + $0x1a0] sm:$0xff] %v888
  %953 = vst [vmem:[%s5 + $0x1a8] sm:$0xff] %v889
  %954 = vst [vmem:[%s5 + $0x1b0] sm:$0xff] %v890
  %955 = vst [vmem:[%s5 + $0x1b8] sm:$0xff] %v891
  %956 = vst [vmem:[%s5 + $0x1c0] sm:$0xff] %v892
  %957 = vst [vmem:[%s5 + $0x1c8] sm:$0xff] %v893
  %958 = vst [vmem:[%s5 + $0x1d0] sm:$0xff] %v894
  %959 = vst [vmem:[%s5 + $0x1d8] sm:$0xff] %v895
  %960 = vst [vmem:[%s5 + $0x1e0] sm:$0xff] %v896
  %961 = vst [vmem:[%s5 + $0x1e8] sm:$0xff] %v897
  %962 = vst [vmem:[%s5 + $0x1f0] sm:$0xff] %v898
  %963 = vst [vmem:[%s5 + $0x1f8] sm:$0xff] %v899
  // Predicated region
  $region22: #{dw_residual.5} parent=0 // pred_check
    _
  $region23: #{dw_residual.5} parent=0 // pred_check_branch
    %965 = sbr.rel (0) target = $region25
  $region24: #{dw_residual.5} parent=0 // pred_region
    _
  $region25: #{dw_residual.5} parent=0 // pred_fallthru
    _
  // Predicated region
  $region26: #{dw_residual.5} parent=0 // pred_check
    _
  $region27: #{dw_residual.5} parent=0 // pred_check_branch
    %967 = sbr.rel (0) target = $region29
  $region28: #{dw_residual.5} parent=0 // pred_region
    _
  $region29: #{dw_residual.5} parent=0 // pred_fallthru
    _

// kernel: dw_residual.4
$region0: #{dw_residual.4}
  #allocation0 [shape = 'u32[]', space=smem, size = 0x4, offset = 0x4, fixed_abs, tag = 'smem constant byte address 0x4 - core index']
  #allocation1 [shape = 'u32[144,128]{1,0:T(1,128)}', space=vmem, size = 0x12000, scoped, tag = 'internal scratch']
  %s0 = inlined_call_operand.vmem [shape: f32[2,18,18,128], index: 0, kind: input, shape index: {}]
  %s1 = inlined_call_operand.vmem [shape: f32[9,128], index: 1, kind: input, shape index: {}]
  %s2 = inlined_call_operand.vmem [shape: f32[1,128], index: 2, kind: input, shape index: {}]
  %s3 = inlined_call_operand.vmem [shape: f32[1,128], index: 3, kind: input, shape index: {}]
  %s4 = inlined_call_operand.vmem [shape: f32[1,128], index: 4, kind: input, shape index: {}]
  %s5 = inlined_call_operand.vmem [shape: f32[2,16,16,128], index: 5, kind: output, shape index: {}]
  %s6 = sld [smem:[#allocation0]]
  $region53: #{dw_residual.4} parent=0
    _
  %s8 = ssub.s32 1, %s6
  %s9 = scalar_select 0, %s8, %s6
  loop: start=0, step=1, limit=4
  $region2: #{dw_residual.4} parent=0 // loop_pre_header
    _
  $region3: #{dw_residual.4} parent=0 // loop_header
    %s11 = sphi 0, %s15
    %p12 = scmp.ge.s32.totalorder %s11, 4
    %s18 = sphi 0, %s30
    %s19 = sphi 0, %s26
    %s20 = sphi 0, %s18
    %s21 = sphi 0, %s19
    %s22 = sphi 0, %s20
    %s23 = sphi 0, %s21
    %s35 = sphi 0, %s37
    %s38 = sphi 0, %s35
    %s39 = sphi 0, %s38
    %s55 = sphi 0, %s39
    %s61 = sphi 0, %s63
    %s64 = sphi 0, %s61
    %s65 = sphi 0, %s64
    %s81 = sphi 0, %s65
    %s87 = sphi 0, %s89
    %s90 = sphi 0, %s87
    %s91 = sphi 0, %s90
    %s107 = sphi 0, %s91
    %s113 = sphi 0, %s115
    %s116 = sphi 0, %s113
    %s117 = sphi 0, %s116
    %s133 = sphi 0, %s117
    %s139 = sphi 0, %s141
    %s142 = sphi 0, %s139
    %s143 = sphi 0, %s142
    %s159 = sphi 0, %s143
    %s167 = sphi 0, %s169
    %s170 = sphi 0, %s167
    %s171 = sphi 0, %s170
    %s187 = sphi 0, %s171
  $region4: #{dw_residual.4} parent=0 // loop_header_branch
    %14 = sbr.rel (%p12) target = $region8
  $region5: #{dw_residual.4} parent=0 // loop_body
    %s16 = ssub.s32 %s11, 1
    %s17 = ssub.s32 %s11, 2
    %s24 = sadd.s32 1, %s19
    %p25 = scmp.ge.s32.totalorder %s24, 1
    %s26 = scalar_select %p25, 0, %s24
    %s27 = sadd.s32 1, %s18
    %s28 = scalar_select %p25, %s27, %s18
    %p29 = scmp.ge.s32.totalorder %s28, 2
    %s30 = scalar_select %p29, 0, %s28
    %s31 = ssub.s32 %s18, %s30
    %s32 = ssub.s32 %s19, %s26
    %s33 = sor.u32 %s31, %s32
    %p34 = scmp.eq.s32.totalorder %s33, 0
    %s36 = sadd.s32 %s35, 1
    %s37 = scalar_select %p34, %s35, %s36
    %p40 = pneg %p34
    %p41 = scmp.eq.s32.totalorder %s11, 1
    %p42 = por %p40, %p41
    %p43 = scmp.ne.s32.totalorder %s35, %s38
    %p44 = scmp.eq.s32.totalorder %s11, 0
    %p45 = por %p43, %p44
    %p46 = scmp.ne.s32.totalorder %s35, %s38
    %p47 = scmp.eq.s32.totalorder %s16, 1
    %p48 = por %p46, %p47
    %p49 = scmp.ne.s32.totalorder %s38, %s39
    %p50 = scmp.eq.s32.totalorder %s16, 0
    %p51 = por %p49, %p50
    %p52 = scmp.ne.s32.totalorder %s38, %s39
    %p53 = scmp.eq.s32.totalorder %s17, 1
    %p54 = por %p52, %p53
    %p56 = scmp.ne.s32.totalorder %s39, %s55
    %p57 = scmp.eq.s32.totalorder %s17, 0
    %p58 = por %p56, %p57
    %s59 = ssub.s32 %s19, %s26
    %p60 = scmp.eq.s32.totalorder %s59, 0
    %s62 = sadd.s32 %s61, 1
    %s63 = scalar_select %p60, %s61, %s62
    %p66 = pneg %p60
    %p67 = scmp.eq.s32.totalorder %s11, 1
    %p68 = por %p66, %p67
    %p69 = scmp.ne.s32.totalorder %s61, %s64
    %p70 = scmp.eq.s32.totalorder %s11, 0
    %p71 = por %p69, %p70
    %p72 = scmp.ne.s32.totalorder %s61, %s64
    %p73 = scmp.eq.s32.totalorder %s16, 1
    %p74 = por %p72, %p73
    %p75 = scmp.ne.s32.totalorder %s64, %s65
    %p76 = scmp.eq.s32.totalorder %s16, 0
    %p77 = por %p75, %p76
    %p78 = scmp.ne.s32.totalorder %s64, %s65
    %p79 = scmp.eq.s32.totalorder %s17, 1
    %p80 = por %p78, %p79
    %p82 = scmp.ne.s32.totalorder %s65, %s81
    %p83 = scmp.eq.s32.totalorder %s17, 0
    %p84 = por %p82, %p83
    %s85 = ssub.s32 %s19, %s26
    %p86 = scmp.eq.s32.totalorder %s85, 0
    %s88 = sadd.s32 %s87, 1
    %s89 = scalar_select %p86, %s87, %s88
    %p92 = pneg %p86
    %p93 = scmp.eq.s32.totalorder %s11, 1
    %p94 = por %p92, %p93
    %p95 = scmp.ne.s32.totalorder %s87, %s90
    %p96 = scmp.eq.s32.totalorder %s11, 0
    %p97 = por %p95, %p96
    %p98 = scmp.ne.s32.totalorder %s87, %s90
    %p99 = scmp.eq.s32.totalorder %s16, 1
    %p100 = por %p98, %p99
    %p101 = scmp.ne.s32.totalorder %s90, %s91
    %p102 = scmp.eq.s32.totalorder %s16, 0
    %p103 = por %p101, %p102
    %p104 = scmp.ne.s32.totalorder %s90, %s91
    %p105 = scmp.eq.s32.totalorder %s17, 1
    %p106 = por %p104, %p105
    %p108 = scmp.ne.s32.totalorder %s91, %s107
    %p109 = scmp.eq.s32.totalorder %s17, 0
    %p110 = por %p108, %p109
    %s111 = ssub.s32 %s19, %s26
    %p112 = scmp.eq.s32.totalorder %s111, 0
    %s114 = sadd.s32 %s113, 1
    %s115 = scalar_select %p112, %s113, %s114
    %p118 = pneg %p112
    %p119 = scmp.eq.s32.totalorder %s11, 1
    %p120 = por %p118, %p119
    %p121 = scmp.ne.s32.totalorder %s113, %s116
    %p122 = scmp.eq.s32.totalorder %s11, 0
    %p123 = por %p121, %p122
    %p124 = scmp.ne.s32.totalorder %s113, %s116
    %p125 = scmp.eq.s32.totalorder %s16, 1
    %p126 = por %p124, %p125
    %p127 = scmp.ne.s32.totalorder %s116, %s117
    %p128 = scmp.eq.s32.totalorder %s16, 0
    %p129 = por %p127, %p128
    %p130 = scmp.ne.s32.totalorder %s116, %s117
    %p131 = scmp.eq.s32.totalorder %s17, 1
    %p132 = por %p130, %p131
    %p134 = scmp.ne.s32.totalorder %s117, %s133
    %p135 = scmp.eq.s32.totalorder %s17, 0
    %p136 = por %p134, %p135
    %s137 = ssub.s32 %s19, %s26
    %p138 = scmp.eq.s32.totalorder %s137, 0
    %s140 = sadd.s32 %s139, 1
    %s141 = scalar_select %p138, %s139, %s140
    %p144 = pneg %p138
    %p145 = scmp.eq.s32.totalorder %s11, 1
    %p146 = por %p144, %p145
    %p147 = scmp.ne.s32.totalorder %s139, %s142
    %p148 = scmp.eq.s32.totalorder %s11, 0
    %p149 = por %p147, %p148
    %p150 = scmp.ne.s32.totalorder %s139, %s142
    %p151 = scmp.eq.s32.totalorder %s16, 1
    %p152 = por %p150, %p151
    %p153 = scmp.ne.s32.totalorder %s142, %s143
    %p154 = scmp.eq.s32.totalorder %s16, 0
    %p155 = por %p153, %p154
    %p156 = scmp.ne.s32.totalorder %s142, %s143
    %p157 = scmp.eq.s32.totalorder %s17, 1
    %p158 = por %p156, %p157
    %p160 = scmp.ne.s32.totalorder %s143, %s159
    %p161 = scmp.eq.s32.totalorder %s17, 0
    %p162 = por %p160, %p161
    %s163 = ssub.s32 %s18, %s30
    %s164 = ssub.s32 %s19, %s26
    %s165 = sor.u32 %s163, %s164
    %p166 = scmp.eq.s32.totalorder %s165, 0
    %s168 = sadd.s32 %s167, 1
    %s169 = scalar_select %p166, %s167, %s168
    %p172 = pneg %p166
    %p173 = scmp.eq.s32.totalorder %s11, 1
    %p174 = por %p172, %p173
    %p175 = scmp.ne.s32.totalorder %s167, %s170
    %p176 = scmp.eq.s32.totalorder %s11, 0
    %p177 = por %p175, %p176
    %p178 = scmp.ne.s32.totalorder %s167, %s170
    %p179 = scmp.eq.s32.totalorder %s16, 1
    %p180 = por %p178, %p179
    %p181 = scmp.ne.s32.totalorder %s170, %s171
    %p182 = scmp.eq.s32.totalorder %s16, 0
    %p183 = por %p181, %p182
    %p184 = scmp.ne.s32.totalorder %s170, %s171
    %p185 = scmp.eq.s32.totalorder %s17, 1
    %p186 = por %p184, %p185
    %p188 = scmp.ne.s32.totalorder %s171, %s187
    %p189 = scmp.eq.s32.totalorder %s17, 0
    %p190 = por %p188, %p189
    %p191 = scmp.le.s32.totalorder 1, %s11
    %p192 = scmp.lt.s32.totalorder %s11, 3
    %p193 = pnand %p191, %p192
    %p194 = pneg %p193
    // Predicated region
    $region9: #{dw_residual.4} parent=5 // pred_check
      _
    $region10: #{dw_residual.4} parent=5 // pred_check_branch
      %196 = sbr.rel (%p193) target = $region12
    $region11: #{dw_residual.4} parent=5 // pred_region
      %s197 = ssub.s32 %s11, 1
      // Predicated region
      $region13: #{dw_residual.4} parent=11 // pred_check
        %p198 = pneg %p77
      $region14: #{dw_residual.4} parent=11 // pred_check_branch
        %200 = sbr.rel (%p198) target = $region16
      $region15: #{dw_residual.4} parent=11 // pred_region
        %p201 = scmp.lt.s32.totalorder %s21, 0
        %s202 = scalar_select %p201, %s21, 0
        %s203 = smul.addr %s202, 8
        %s204 = scalar_lea.vmem %s1, %s203
      $region16: #{dw_residual.4} parent=11 // pred_fallthru
        _
      // Predicated region
      $region17: #{dw_residual.4} parent=11 // pred_check
        %p205 = pneg %p103
      $region18: #{dw_residual.4} parent=11 // pred_check_branch
        %207 = sbr.rel (%p205) target = $region20
      $region19: #{dw_residual.4} parent=11 // pred_region
        %p208 = scmp.lt.s32.totalorder %s21, 0
        %s209 = scalar_select %p208, %s21, 0
        %s210 = scalar_lea.vmem %s2, %s209
      $region20: #{dw_residual.4} parent=11 // pred_fallthru
        _
      // Predicated region
      $region21: #{dw_residual.4} parent=11 // pred_check
        %p211 = pneg %p129
      $region22: #{dw_residual.4} parent=11 // pred_check_branch
        %213 = sbr.rel (%p211) target = $region24
      $region23: #{dw_residual.4} parent=11 // pred_region
        %p214 = scmp.lt.s32.totalorder %s21, 0
        %s215 = scalar_select %p214, %s21, 0
        %s216 = scalar_lea.vmem %s3, %s215
      $region24: #{dw_residual.4} parent=11 // pred_fallthru
        _
      // Predicated region
      $region25: #{dw_residual.4} parent=11 // pred_check
        %p217 = pneg %p155
      $region26: #{dw_residual.4} parent=11 // pred_check_branch
        %219 = sbr.rel (%p217) target = $region28
      $region27: #{dw_residual.4} parent=11 // pred_region
        %p220 = scmp.lt.s32.totalorder %s21, 0
        %s221 = scalar_select %p220, %s21, 0
        %s222 = scalar_lea.vmem %s4, %s221
      $region28: #{dw_residual.4} parent=11 // pred_fallthru
        _
    $region12: #{dw_residual.4} parent=5 // pred_fallthru
      _
    %p223 = scmp.lt.s32.totalorder %s11, 2
    // Predicated region
    $region29: #{dw_residual.4} parent=5 // pred_check
      %p224 = pneg %p223
    $region30: #{dw_residual.4} parent=5 // pred_check_branch
      %226 = sbr.rel (%p224) target = $region32
    $region31: #{dw_residual.4} parent=5 // pred_region
      // Predicated region
      $region33: #{dw_residual.4} parent=31 // pred_check
        %p227 = pneg %p45
      $region34: #{dw_residual.4} parent=31 // pred_check_branch
        %229 = sbr.rel (%p227) target = $region36
      $region35: #{dw_residual.4} parent=31 // pred_region
        %p230 = scmp.lt.s32.totalorder %s18, 1
        %s231 = scalar_select %p230, %s18, 1
        %p232 = scmp.lt.s32.totalorder %s19, 0
        %s233 = scalar_select %p232, %s19, 0
        %s234 = smul.addr %s231, 54
        %s235 = sadd.s32 %s233, %s234
        %s236 = smul.addr %s235, 8
        %s237 = scalar_lea.vmem %s0, %s236
      $region36: #{dw_residual.4} parent=31 // pred_fallthru
        _
    $region32: #{dw_residual.4} parent=5 // pred_fallthru
      _
    %p238 = scmp.le.s32.totalorder 1, %s11
    %p239 = scmp.lt.s32.totalorder %s11, 3
    %p240 = pnand %p238, %p239
    %p241 = pneg %p240
    // Predicated region
    $region37: #{dw_residual.4} parent=5 // pred_check
      _
    $region38: #{dw_residual.4} parent=5 // pred_check_branch
      %243 = sbr.rel (%p240) target = $region40
    $region39: #{dw_residual.4} parent=5 // pred_region
      %s244 = ssub.s32 %s11, 1
      %p245 = scmp.lt.s32.totalorder %s20, 1
      %s246 = scalar_select %p245, %s20, 1
      %p247 = scmp.lt.s32.totalorder %s21, 0
      %s248 = scalar_select %p247, %s21, 0
      %s249 = smul.addr %s246, 54
      %s250 = sadd.s32 %s248, %s249
      %s251 = smul.addr %s250, 8
      %s252 = scalar_lea.vmem %s0, %s251
      %p253 = pneg %p51
      %p254 = pneg %p48
      %p255 = scmp.lt.s32.totalorder %s21, 0
      %s256 = scalar_select %p255, %s21, 0
      %s257 = smul.addr %s256, 8
      %s258 = scalar_lea.vmem %s1, %s257
      %p259 = pneg %p77
      %p260 = pneg %p74
      %p261 = scmp.lt.s32.totalorder %s21, 0
      %s262 = scalar_select %p261, %s21, 0
      %s263 = scalar_lea.vmem %s2, %s262
      %p264 = pneg %p103
      %p265 = pneg %p100
      %p266 = scmp.lt.s32.totalorder %s21, 0
      %s267 = scalar_select %p266, %s21, 0
      %s268 = scalar_lea.vmem %s3, %s267
      %p269 = pneg %p129
      %p270 = pneg %p126
      %p271 = scmp.lt.s32.totalorder %s21, 0
      %s272 = scalar_select %p271, %s21, 0
      %s273 = scalar_lea.vmem %s4, %s272
      %p274 = pneg %p155
      %p275 = pneg %p152
      %p276 = pneg %p183
      %p277 = pneg %p180
      %p278 = scmp.lt.s32.totalorder %s20, 1
      %s279 = scalar_select %p278, %s20, 1
      %p280 = scmp.lt.s32.totalorder %s21, 0
      %s281 = scalar_select %p280, %s21, 0
      %s282 = smul.addr %s279, 32
      %s283 = sadd.s32 %s281, %s282
      %s284 = smul.addr %s283, 8
      %s285 = scalar_lea.vmem %s5, %s284
      %p286 = scmp.lt.s32.totalorder %s20, 1
      %s287 = scalar_select %p286, %s20, 1
      %p288 = scmp.lt.s32.totalorder %s21, 0
      %s289 = scalar_select %p288, %s21, 0
      %s290 = smul.addr %s287, 54
      %s291 = sadd.s32 %s289, %s290
      %s292 = smul.addr %s291, 8
      %s293 = scalar_lea.vmem %s0, %s292
      %p294 = scmp.lt.s32.totalorder %s21, 0
      %s295 = scalar_select %p294, %s21, 0
      %s296 = smul.addr %s295, 8
      %s297 = scalar_lea.vmem %s1, %s296
      %p298 = scmp.lt.s32.totalorder %s21, 0
      %s299 = scalar_select %p298, %s21, 0
      %s300 = scalar_lea.vmem %s2, %s299
      %p301 = scmp.lt.s32.totalorder %s21, 0
      %s302 = scalar_select %p301, %s21, 0
      %s303 = scalar_lea.vmem %s3, %s302
      %p304 = scmp.lt.s32.totalorder %s21, 0
      %s305 = scalar_select %p304, %s21, 0
      %s306 = scalar_lea.vmem %s4, %s305
      %p307 = scmp.lt.s32.totalorder %s20, 1
      %s308 = scalar_select %p307, %s20, 1
      %p309 = scmp.lt.s32.totalorder %s21, 0
      %s310 = scalar_select %p309, %s21, 0
      %s311 = smul.addr %s308, 32
      %s312 = sadd.s32 %s310, %s311
      %s313 = smul.addr %s312, 8
      %s314 = scalar_lea.vmem %s5, %s313
      %v315 = vld [vmem:[%s300] sm:$0x1]
      %v316 = vld [vmem:[%s303] sm:$0x1]
      %v317 = vld [vmem:[%s306] sm:$0x1]
      %v318 = vld [vmem:[%s297] sm:$0x1]
      %v319 = vld [vmem:[%s297 + $0x1] sm:$0x1]
      %v320 = vld [vmem:[%s297 + $0x2] sm:$0x1]
      %v321 = vld [vmem:[%s297 + $0x3] sm:$0x1]
      %v322 = vld [vmem:[%s297 + $0x4] sm:$0x1]
      %v323 = vld [vmem:[%s297 + $0x5] sm:$0x1]
      %v324 = vld [vmem:[%s297 + $0x6] sm:$0x1]
      %v325 = vld [vmem:[%s297 + $0x7] sm:$0x1]
      %v326 = vld [vmem:[%s297 + $0x8] sm:$0x1]
      %v327 = vld [vmem:[%s293] sm:$0xff]
      %v328 = vld [vmem:[%s293 + $0x8] sm:$0xff]
      %v329 = vld [vmem:[%s293 + $0x18] sm:$0xff]
      %v330 = vld [vmem:[%s293 + $0x20] sm:$0xff]
      %v331 = vld [vmem:[%s293 + $0x30] sm:$0xff]
      %v332 = vld [vmem:[%s293 + $0x38] sm:$0xff]
      %v333 = vld [vmem:[%s293 + $0x48] sm:$0xff]
      %v334 = vld [vmem:[%s293 + $0x50] sm:$0xff]
      %v335 = vld [vmem:[%s293 + $0x60] sm:$0xff]
      %v336 = vld [vmem:[%s293 + $0x68] sm:$0xff]
      %v337 = vld [vmem:[%s293 + $0x78] sm:$0xff]
      %v338 = vld [vmem:[%s293 + $0x80] sm:$0xff]
      %v339 = vld [vmem:[%s293 + $0x90] sm:$0xff]
      %v340 = vld [vmem:[%s293 + $0x98] sm:$0xff]
      %v341 = vld [vmem:[%s293 + $0xa8] sm:$0xff]
      %v342 = vld [vmem:[%s293 + $0xb0] sm:$0xff]
      %v343 = vlaneseq
      %v344 = vshrl.u32 %v343, 7
      %v345 = vsub.s32 0, %v344
      %v346 = vrot.slane %v318, %v345
      %v347 = vmul.f32 %v327, %v346
      %v348 = vmul.f32 %v328, %v346
      %v349 = vmul.f32 %v329, %v346
      %v350 = vmul.f32 %v330, %v346
      %v351 = vmul.f32 %v331, %v346
      %v352 = vmul.f32 %v332, %v346
      %v353 = vmul.f32 %v333, %v346
      %v354 = vmul.f32 %v334, %v346
      %v355 = vmul.f32 %v335, %v346
      %v356 = vmul.f32 %v336, %v346
      %v357 = vmul.f32 %v337, %v346
      %v358 = vmul.f32 %v338, %v346
      %v359 = vmul.f32 %v339, %v346
      %v360 = vmul.f32 %v340, %v346
      %v361 = vmul.f32 %v341, %v346
      %v362 = vmul.f32 %v342, %v346
      %v363 = vadd.f32 %v347, 0.0
      %v364 = vadd.f32 %v348, 0.0
      %v365 = vadd.f32 %v349, 0.0
      %v366 = vadd.f32 %v350, 0.0
      %v367 = vadd.f32 %v351, 0.0
      %v368 = vadd.f32 %v352, 0.0
      %v369 = vadd.f32 %v353, 0.0
      %v370 = vadd.f32 %v354, 0.0
      %v371 = vadd.f32 %v355, 0.0
      %v372 = vadd.f32 %v356, 0.0
      %v373 = vadd.f32 %v357, 0.0
      %v374 = vadd.f32 %v358, 0.0
      %v375 = vadd.f32 %v359, 0.0
      %v376 = vadd.f32 %v360, 0.0
      %v377 = vadd.f32 %v361, 0.0
      %v378 = vadd.f32 %v362, 0.0
      %v379 = vld [vmem:[%s293 + $0x1] sm:$0xff]
      %v380 = vld [vmem:[%s293 + $0x9] sm:$0xff]
      %v381 = vld [vmem:[%s293 + $0x19] sm:$0xff]
      %v382 = vld [vmem:[%s293 + $0x21] sm:$0xff]
      %v383 = vld [vmem:[%s293 + $0x31] sm:$0xff]
      %v384 = vld [vmem:[%s293 + $0x39] sm:$0xff]
      %v385 = vld [vmem:[%s293 + $0x49] sm:$0xff]
      %v386 = vld [vmem:[%s293 + $0x51] sm:$0xff]
      %v387 = vld [vmem:[%s293 + $0x61] sm:$0xff]
      %v388 = vld [vmem:[%s293 + $0x69] sm:$0xff]
      %v389 = vld [vmem:[%s293 + $0x79] sm:$0xff]
      %v390 = vld [vmem:[%s293 + $0x81] sm:$0xff]
      %v391 = vld [vmem:[%s293 + $0x91] sm:$0xff]
      %v392 = vld [vmem:[%s293 + $0x99] sm:$0xff]
      %v393 = vld [vmem:[%s293 + $0xa9] sm:$0xff]
      %v394 = vld [vmem:[%s293 + $0xb1] sm:$0xff]
      %v395 = vlaneseq
      %v396 = vshrl.u32 %v395, 7
      %v397 = vsub.s32 0, %v396
      %v398 = vrot.slane %v319, %v397
      %v399 = vmul.f32 %v379, %v398
      %v400 = vmul.f32 %v380, %v398
      %v401 = vmul.f32 %v381, %v398
      %v402 = vmul.f32 %v382, %v398
      %v403 = vmul.f32 %v383, %v398
      %v404 = vmul.f32 %v384, %v398
      %v405 = vmul.f32 %v385, %v398
      %v406 = vmul.f32 %v386, %v398
      %v407 = vmul.f32 %v387, %v398
      %v408 = vmul.f32 %v388, %v398
      %v409 = vmul.f32 %v389, %v398
      %v410 = vmul.f32 %v390, %v398
      %v411 = vmul.f32 %v391, %v398
      %v412 = vmul.f32 %v392, %v398
      %v413 = vmul.f32 %v393, %v398
      %v414 = vmul.f32 %v394, %v398
      %v415 = vadd.f32 %v363, %v399
      %v416 = vadd.f32 %v364, %v400
      %v417 = vadd.f32 %v365, %v401
      %v418 = vadd.f32 %v366, %v402
      %v419 = vadd.f32 %v367, %v403
      %v420 = vadd.f32 %v368, %v404
      %v421 = vadd.f32 %v369, %v405
      %v422 = vadd.f32 %v370, %v406
      %v423 = vadd.f32 %v371, %v407
      %v424 = vadd.f32 %v372, %v408
      %v425 = vadd.f32 %v373, %v409
      %v426 = vadd.f32 %v374, %v410
      %v427 = vadd.f32 %v375, %v411
      %v428 = vadd.f32 %v376, %v412
      %v429 = vadd.f32 %v377, %v413
      %v430 = vadd.f32 %v378, %v414
      %v431 = vld [vmem:[%s293 + $0x2] sm:$0xff]
      %v432 = vld [vmem:[%s293 + $0xa] sm:$0xff]
      %v433 = vld [vmem:[%s293 + $0x1a] sm:$0xff]
      %v434 = vld [vmem:[%s293 + $0x22] sm:$0xff]
      %v435 = vld [vmem:[%s293 + $0x32] sm:$0xff]
      %v436 = vld [vmem:[%s293 + $0x3a] sm:$0xff]
      %v437 = vld [vmem:[%s293 + $0x4a] sm:$0xff]
      %v438 = vld [vmem:[%s293 + $0x52] sm:$0xff]
      %v439 = vld [vmem:[%s293 + $0x62] sm:$0xff]
      %v440 = vld [vmem:[%s293 + $0x6a] sm:$0xff]
      %v441 = vld [vmem:[%s293 + $0x7a] sm:$0xff]
      %v442 = vld [vmem:[%s293 + $0x82] sm:$0xff]
      %v443 = vld [vmem:[%s293 + $0x92] sm:$0xff]
      %v444 = vld [vmem:[%s293 + $0x9a] sm:$0xff]
      %v445 = vld [vmem:[%s293 + $0xaa] sm:$0xff]
      %v446 = vld [vmem:[%s293 + $0xb2] sm:$0xff]
      %v447 = vlaneseq
      %v448 = vshrl.u32 %v447, 7
      %v449 = vsub.s32 0, %v448
      %v450 = vrot.slane %v320, %v449
      %v451 = vmul.f32 %v431, %v450
      %v452 = vmul.f32 %v432, %v450
      %v453 = vmul.f32 %v433, %v450
      %v454 = vmul.f32 %v434, %v450
      %v455 = vmul.f32 %v435, %v450
      %v456 = vmul.f32 %v436, %v450
      %v457 = vmul.f32 %v437, %v450
      %v458 = vmul.f32 %v438, %v450
      %v459 = vmul.f32 %v439, %v450
      %v460 = vmul.f32 %v440, %v450
      %v461 = vmul.f32 %v441, %v450
      %v462 = vmul.f32 %v442, %v450
      %v463 = vmul.f32 %v443, %v450
      %v464 = vmul.f32 %v444, %v450
      %v465 = vmul.f32 %v445, %v450
      %v466 = vmul.f32 %v446, %v450
      %v467 = vadd.f32 %v415, %v451
      %v468 = vadd.f32 %v416, %v452
      %v469 = vadd.f32 %v417, %v453
      %v470 = vadd.f32 %v418, %v454
      %v471 = vadd.f32 %v419, %v455
      %v472 = vadd.f32 %v420, %v456
      %v473 = vadd.f32 %v421, %v457
      %v474 = vadd.f32 %v422, %v458
      %v475 = vadd.f32 %v423, %v459
      %v476 = vadd.f32 %v424, %v460
      %v477 = vadd.f32 %v425, %v461
      %v478 = vadd.f32 %v426, %v462
      %v479 = vadd.f32 %v427, %v463
      %v480 = vadd.f32 %v428, %v464
      %v481 = vadd.f32 %v429, %v465
      %v482 = vadd.f32 %v430, %v466
      %s483 = scalar_lea.vmem %s293, 24
      %v484 = vld [vmem:[%s483] sm:$0xff]
      %v485 = vld [vmem:[%s483 + $0x8] sm:$0xff]
      %v486 = vld [vmem:[%s483 + $0x18] sm:$0xff]
      %v487 = vld [vmem:[%s483 + $0x20] sm:$0xff]
      %v488 = vld [vmem:[%s483 + $0x30] sm:$0xff]
      %v489 = vld [vmem:[%s483 + $0x38] sm:$0xff]
      %v490 = vld [vmem:[%s483 + $0x48] sm:$0xff]
      %v491 = vld [vmem:[%s483 + $0x50] sm:$0xff]
      %v492 = vld [vmem:[%s483 + $0x60] sm:$0xff]
      %v493 = vld [vmem:[%s483 + $0x68] sm:$0xff]
      %v494 = vld [vmem:[%s483 + $0x78] sm:$0xff]
      %v495 = vld [vmem:[%s483 + $0x80] sm:$0xff]
      %v496 = vld [vmem:[%s483 + $0x90] sm:$0xff]
      %v497 = vld [vmem:[%s483 + $0x98] sm:$0xff]
      %v498 = vld [vmem:[%s483 + $0xa8] sm:$0xff]
      %v499 = vld [vmem:[%s483 + $0xb0] sm:$0xff]
      %v500 = vlaneseq
      %v501 = vshrl.u32 %v500, 7
      %v502 = vsub.s32 0, %v501
      %v503 = vrot.slane %v321, %v502
      %v504 = vmul.f32 %v484, %v503
      %v505 = vmul.f32 %v485, %v503
      %v506 = vmul.f32 %v486, %v503
      %v507 = vmul.f32 %v487, %v503
      %v508 = vmul.f32 %v488, %v503
      %v509 = vmul.f32 %v489, %v503
      %v510 = vmul.f32 %v490, %v503
      %v511 = vmul.f32 %v491, %v503
      %v512 = vmul.f32 %v492, %v503
      %v513 = vmul.f32 %v493, %v503
      %v514 = vmul.f32 %v494, %v503
      %v515 = vmul.f32 %v495, %v503
      %v516 = vmul.f32 %v496, %v503
      %v517 = vmul.f32 %v497, %v503
      %v518 = vmul.f32 %v498, %v503
      %v519 = vmul.f32 %v499, %v503
      %v520 = vadd.f32 %v467, %v504
      %v521 = vadd.f32 %v468, %v505
      %v522 = vadd.f32 %v469, %v506
      %v523 = vadd.f32 %v470, %v507
      %v524 = vadd.f32 %v471, %v508
      %v525 = vadd.f32 %v472, %v509
      %v526 = vadd.f32 %v473, %v510
      %v527 = vadd.f32 %v474, %v511
      %v528 = vadd.f32 %v475, %v512
      %v529 = vadd.f32 %v476, %v513
      %v530 = vadd.f32 %v477, %v514
      %v531 = vadd.f32 %v478, %v515
      %v532 = vadd.f32 %v479, %v516
      %v533 = vadd.f32 %v480, %v517
      %v534 = vadd.f32 %v481, %v518
      %v535 = vadd.f32 %v482, %v519
      %v536 = vld [vmem:[%s483 + $0x1] sm:$0xff]
      %v537 = vld [vmem:[%s483 + $0x9] sm:$0xff]
      %v538 = vld [vmem:[%s483 + $0x19] sm:$0xff]
      %v539 = vld [vmem:[%s483 + $0x21] sm:$0xff]
      %v540 = vld [vmem:[%s483 + $0x31] sm:$0xff]
      %v541 = vld [vmem:[%s483 + $0x39] sm:$0xff]
      %v542 = vld [vmem:[%s483 + $0x49] sm:$0xff]
      %v543 = vld [vmem:[%s483 + $0x51] sm:$0xff]
      %v544 = vld [vmem:[%s483 + $0x61] sm:$0xff]
      %v545 = vld [vmem:[%s483 + $0x69] sm:$0xff]
      %v546 = vld [vmem:[%s483 + $0x79] sm:$0xff]
      %v547 = vld [vmem:[%s483 + $0x81] sm:$0xff]
      %v548 = vld [vmem:[%s483 + $0x91] sm:$0xff]
      %v549 = vld [vmem:[%s483 + $0x99] sm:$0xff]
      %v550 = vld [vmem:[%s483 + $0xa9] sm:$0xff]
      %v551 = vld [vmem:[%s483 + $0xb1] sm:$0xff]
      %v552 = vlaneseq
      %v553 = vshrl.u32 %v552, 7
      %v554 = vsub.s32 0, %v553
      %v555 = vrot.slane %v322, %v554
      %v556 = vmul.f32 %v536, %v555
      %v557 = vmul.f32 %v537, %v555
      %v558 = vmul.f32 %v538, %v555
      %v559 = vmul.f32 %v539, %v555
      %v560 = vmul.f32 %v540, %v555
      %v561 = vmul.f32 %v541, %v555
      %v562 = vmul.f32 %v542, %v555
      %v563 = vmul.f32 %v543, %v555
      %v564 = vmul.f32 %v544, %v555
      %v565 = vmul.f32 %v545, %v555
      %v566 = vmul.f32 %v546, %v555
      %v567 = vmul.f32 %v547, %v555
      %v568 = vmul.f32 %v548, %v555
      %v569 = vmul.f32 %v549, %v555
      %v570 = vmul.f32 %v550, %v555
      %v571 = vmul.f32 %v551, %v555
      %v572 = vadd.f32 %v520, %v556
      %v573 = vadd.f32 %v521, %v557
      %v574 = vadd.f32 %v522, %v558
      %v575 = vadd.f32 %v523, %v559
      %v576 = vadd.f32 %v524, %v560
      %v577 = vadd.f32 %v525, %v561
      %v578 = vadd.f32 %v526, %v562
      %v579 = vadd.f32 %v527, %v563
      %v580 = vadd.f32 %v528, %v564
      %v581 = vadd.f32 %v529, %v565
      %v582 = vadd.f32 %v530, %v566
      %v583 = vadd.f32 %v531, %v567
      %v584 = vadd.f32 %v532, %v568
      %v585 = vadd.f32 %v533, %v569
      %v586 = vadd.f32 %v534, %v570
      %v587 = vadd.f32 %v535, %v571
      %v588 = vld [vmem:[%s483 + $0x2] sm:$0xff]
      %v589 = vld [vmem:[%s483 + $0xa] sm:$0xff]
      %v590 = vld [vmem:[%s483 + $0x1a] sm:$0xff]
      %v591 = vld [vmem:[%s483 + $0x22] sm:$0xff]
      %v592 = vld [vmem:[%s483 + $0x32] sm:$0xff]
      %v593 = vld [vmem:[%s483 + $0x3a] sm:$0xff]
      %v594 = vld [vmem:[%s483 + $0x4a] sm:$0xff]
      %v595 = vld [vmem:[%s483 + $0x52] sm:$0xff]
      %v596 = vld [vmem:[%s483 + $0x62] sm:$0xff]
      %v597 = vld [vmem:[%s483 + $0x6a] sm:$0xff]
      %v598 = vld [vmem:[%s483 + $0x7a] sm:$0xff]
      %v599 = vld [vmem:[%s483 + $0x82] sm:$0xff]
      %v600 = vld [vmem:[%s483 + $0x92] sm:$0xff]
      %v601 = vld [vmem:[%s483 + $0x9a] sm:$0xff]
      %v602 = vld [vmem:[%s483 + $0xaa] sm:$0xff]
      %v603 = vld [vmem:[%s483 + $0xb2] sm:$0xff]
      %v604 = vlaneseq
      %v605 = vshrl.u32 %v604, 7
      %v606 = vsub.s32 0, %v605
      %v607 = vrot.slane %v323, %v606
      %v608 = vmul.f32 %v588, %v607
      %v609 = vmul.f32 %v589, %v607
      %v610 = vmul.f32 %v590, %v607
      %v611 = vmul.f32 %v591, %v607
      %v612 = vmul.f32 %v592, %v607
      %v613 = vmul.f32 %v593, %v607
      %v614 = vmul.f32 %v594, %v607
      %v615 = vmul.f32 %v595, %v607
      %v616 = vmul.f32 %v596, %v607
      %v617 = vmul.f32 %v597, %v607
      %v618 = vmul.f32 %v598, %v607
      %v619 = vmul.f32 %v599, %v607
      %v620 = vmul.f32 %v600, %v607
      %v621 = vmul.f32 %v601, %v607
      %v622 = vmul.f32 %v602, %v607
      %v623 = vmul.f32 %v603, %v607
      %v624 = vadd.f32 %v572, %v608
      %v625 = vadd.f32 %v573, %v609
      %v626 = vadd.f32 %v574, %v610
      %v627 = vadd.f32 %v575, %v611
      %v628 = vadd.f32 %v576, %v612
      %v629 = vadd.f32 %v577, %v613
      %v630 = vadd.f32 %v578, %v614
      %v631 = vadd.f32 %v579, %v615
      %v632 = vadd.f32 %v580, %v616
      %v633 = vadd.f32 %v581, %v617
      %v634 = vadd.f32 %v582, %v618
      %v635 = vadd.f32 %v583, %v619
      %v636 = vadd.f32 %v584, %v620
      %v637 = vadd.f32 %v585, %v621
      %v638 = vadd.f32 %v586, %v622
      %v639 = vadd.f32 %v587, %v623
      %s640 = scalar_lea.vmem %s293, 48
      %v641 = vld [vmem:[%s640] sm:$0xff]
      %v642 = vld [vmem:[%s640 + $0x8] sm:$0xff]
      %v643 = vld [vmem:[%s640 + $0x18] sm:$0xff]
      %v644 = vld [vmem:[%s640 + $0x20] sm:$0xff]
      %v645 = vld [vmem:[%s640 + $0x30] sm:$0xff]
      %v646 = vld [vmem:[%s640 + $0x38] sm:$0xff]
      %v647 = vld [vmem:[%s640 + $0x48] sm:$0xff]
      %v648 = vld [vmem:[%s640 + $0x50] sm:$0xff]
      %v649 = vld [vmem:[%s640 + $0x60] sm:$0xff]
      %v650 = vld [vmem:[%s640 + $0x68] sm:$0xff]
      %v651 = vld [vmem:[%s640 + $0x78] sm:$0xff]
      %v652 = vld [vmem:[%s640 + $0x80] sm:$0xff]
      %v653 = vld [vmem:[%s640 + $0x90] sm:$0xff]
      %v654 = vld [vmem:[%s640 + $0x98] sm:$0xff]
      %v655 = vld [vmem:[%s640 + $0xa8] sm:$0xff]
      %v656 = vld [vmem:[%s640 + $0xb0] sm:$0xff]
      %v657 = vlaneseq
      %v658 = vshrl.u32 %v657, 7
      %v659 = vsub.s32 0, %v658
      %v660 = vrot.slane %v324, %v659
      %v661 = vmul.f32 %v641, %v660
      %v662 = vmul.f32 %v642, %v660
      %v663 = vmul.f32 %v643, %v660
      %v664 = vmul.f32 %v644, %v660
      %v665 = vmul.f32 %v645, %v660
      %v666 = vmul.f32 %v646, %v660
      %v667 = vmul.f32 %v647, %v660
      %v668 = vmul.f32 %v648, %v660
      %v669 = vmul.f32 %v649, %v660
      %v670 = vmul.f32 %v650, %v660
      %v671 = vmul.f32 %v651, %v660
      %v672 = vmul.f32 %v652, %v660
      %v673 = vmul.f32 %v653, %v660
      %v674 = vmul.f32 %v654, %v660
      %v675 = vmul.f32 %v655, %v660
      %v676 = vmul.f32 %v656, %v660
      %v677 = vadd.f32 %v624, %v661
      %v678 = vadd.f32 %v625, %v662
      %v679 = vadd.f32 %v626, %v663
      %v680 = vadd.f32 %v627, %v664
      %v681 = vadd.f32 %v628, %v665
      %v682 = vadd.f32 %v629, %v666
      %v683 = vadd.f32 %v630, %v667
      %v684 = vadd.f32 %v631, %v668
      %v685 = vadd.f32 %v632, %v669
      %v686 = vadd.f32 %v633, %v670
      %v687 = vadd.f32 %v634, %v671
      %v688 = vadd.f32 %v635, %v672
      %v689 = vadd.f32 %v636, %v673
      %v690 = vadd.f32 %v637, %v674
      %v691 = vadd.f32 %v638, %v675
      %v692 = vadd.f32 %v639, %v676
      %v693 = vld [vmem:[%s640 + $0x1] sm:$0xff]
      %v694 = vld [vmem:[%s640 + $0x9] sm:$0xff]
      %v695 = vld [vmem:[%s640 + $0x19] sm:$0xff]
      %v696 = vld [vmem:[%s640 + $0x21] sm:$0xff]
      %v697 = vld [vmem:[%s640 + $0x31] sm:$0xff]
      %v698 = vld [vmem:[%s640 + $0x39] sm:$0xff]
      %v699 = vld [vmem:[%s640 + $0x49] sm:$0xff]
      %v700 = vld [vmem:[%s640 + $0x51] sm:$0xff]
      %v701 = vld [vmem:[%s640 + $0x61] sm:$0xff]
      %v702 = vld [vmem:[%s640 + $0x69] sm:$0xff]
      %v703 = vld [vmem:[%s640 + $0x79] sm:$0xff]
      %v704 = vld [vmem:[%s640 + $0x81] sm:$0xff]
      %v705 = vld [vmem:[%s640 + $0x91] sm:$0xff]
      %v706 = vld [vmem:[%s640 + $0x99] sm:$0xff]
      %v707 = vld [vmem:[%s640 + $0xa9] sm:$0xff]
      %v708 = vld [vmem:[%s640 + $0xb1] sm:$0xff]
      %v709 = vlaneseq
      %v710 = vshrl.u32 %v709, 7
      %v711 = vsub.s32 0, %v710
      %v712 = vrot.slane %v325, %v711
      %v713 = vmul.f32 %v693, %v712
      %v714 = vmul.f32 %v694, %v712
      %v715 = vmul.f32 %v695, %v712
      %v716 = vmul.f32 %v696, %v712
      %v717 = vmul.f32 %v697, %v712
      %v718 = vmul.f32 %v698, %v712
      %v719 = vmul.f32 %v699, %v712
      %v720 = vmul.f32 %v700, %v712
      %v721 = vmul.f32 %v701, %v712
      %v722 = vmul.f32 %v702, %v712
      %v723 = vmul.f32 %v703, %v712
      %v724 = vmul.f32 %v704, %v712
      %v725 = vmul.f32 %v705, %v712
      %v726 = vmul.f32 %v706, %v712
      %v727 = vmul.f32 %v707, %v712
      %v728 = vmul.f32 %v708, %v712
      %v729 = vadd.f32 %v677, %v713
      %v730 = vadd.f32 %v678, %v714
      %v731 = vadd.f32 %v679, %v715
      %v732 = vadd.f32 %v680, %v716
      %v733 = vadd.f32 %v681, %v717
      %v734 = vadd.f32 %v682, %v718
      %v735 = vadd.f32 %v683, %v719
      %v736 = vadd.f32 %v684, %v720
      %v737 = vadd.f32 %v685, %v721
      %v738 = vadd.f32 %v686, %v722
      %v739 = vadd.f32 %v687, %v723
      %v740 = vadd.f32 %v688, %v724
      %v741 = vadd.f32 %v689, %v725
      %v742 = vadd.f32 %v690, %v726
      %v743 = vadd.f32 %v691, %v727
      %v744 = vadd.f32 %v692, %v728
      %v745 = vld [vmem:[%s640 + $0x2] sm:$0xff]
      %v746 = vld [vmem:[%s640 + $0xa] sm:$0xff]
      %v747 = vld [vmem:[%s640 + $0x1a] sm:$0xff]
      %v748 = vld [vmem:[%s640 + $0x22] sm:$0xff]
      %v749 = vld [vmem:[%s640 + $0x32] sm:$0xff]
      %v750 = vld [vmem:[%s640 + $0x3a] sm:$0xff]
      %v751 = vld [vmem:[%s640 + $0x4a] sm:$0xff]
      %v752 = vld [vmem:[%s640 + $0x52] sm:$0xff]
      %v753 = vld [vmem:[%s640 + $0x62] sm:$0xff]
      %v754 = vld [vmem:[%s640 + $0x6a] sm:$0xff]
      %v755 = vld [vmem:[%s640 + $0x7a] sm:$0xff]
      %v756 = vld [vmem:[%s640 + $0x82] sm:$0xff]
      %v757 = vld [vmem:[%s640 + $0x92] sm:$0xff]
      %v758 = vld [vmem:[%s640 + $0x9a] sm:$0xff]
      %v759 = vld [vmem:[%s640 + $0xaa] sm:$0xff]
      %v760 = vld [vmem:[%s640 + $0xb2] sm:$0xff]
      %v761 = vlaneseq
      %v762 = vshrl.u32 %v761, 7
      %v763 = vsub.s32 0, %v762
      %v764 = vrot.slane %v326, %v763
      %v765 = vmul.f32 %v745, %v764
      %v766 = vmul.f32 %v746, %v764
      %v767 = vmul.f32 %v747, %v764
      %v768 = vmul.f32 %v748, %v764
      %v769 = vmul.f32 %v749, %v764
      %v770 = vmul.f32 %v750, %v764
      %v771 = vmul.f32 %v751, %v764
      %v772 = vmul.f32 %v752, %v764
      %v773 = vmul.f32 %v753, %v764
      %v774 = vmul.f32 %v754, %v764
      %v775 = vmul.f32 %v755, %v764
      %v776 = vmul.f32 %v756, %v764
      %v777 = vmul.f32 %v757, %v764
      %v778 = vmul.f32 %v758, %v764
      %v779 = vmul.f32 %v759, %v764
      %v780 = vmul.f32 %v760, %v764
      %v781 = vadd.f32 %v729, %v765
      %v782 = vadd.f32 %v730, %v766
      %v783 = vadd.f32 %v731, %v767
      %v784 = vadd.f32 %v732, %v768
      %v785 = vadd.f32 %v733, %v769
      %v786 = vadd.f32 %v734, %v770
      %v787 = vadd.f32 %v735, %v771
      %v788 = vadd.f32 %v736, %v772
      %v789 = vadd.f32 %v737, %v773
      %v790 = vadd.f32 %v738, %v774
      %v791 = vadd.f32 %v739, %v775
      %v792 = vadd.f32 %v740, %v776
      %v793 = vadd.f32 %v741, %v777
      %v794 = vadd.f32 %v742, %v778
      %v795 = vadd.f32 %v743, %v779
      %v796 = vadd.f32 %v744, %v780
      %v798 = vlaneseq
      %v799 = vshrl.u32 %v798, 7
      %v800 = vsub.s32 0, %v799
      %v801 = vrot.slane %v315, %v800
      %v803 = vmul.f32 %v781, %v801
      %v804 = vmul.f32 %v782, %v801
      %v805 = vmul.f32 %v783, %v801
      %v806 = vmul.f32 %v784, %v801
      %v807 = vmul.f32 %v785, %v801
      %v808 = vmul.f32 %v786, %v801
      %v809 = vmul.f32 %v787, %v801
      %v810 = vmul.f32 %v788, %v801
      %v811 = vmul.f32 %v789, %v801
      %v812 = vmul.f32 %v790, %v801
      %v813 = vmul.f32 %v791, %v801
      %v814 = vmul.f32 %v792, %v801
      %v815 = vmul.f32 %v793, %v801
      %v816 = vmul.f32 %v794, %v801
      %v817 = vmul.f32 %v795, %v801
      %v818 = vmul.f32 %v796, %v801
      %v820 = vlaneseq
      %v821 = vshrl.u32 %v820, 7
      %v822 = vsub.s32 0, %v821
      %v823 = vrot.slane %v316, %v822
      %v825 = vadd.f32 %v803, %v823
      %v826 = vadd.f32 %v804, %v823
      %v827 = vadd.f32 %v805, %v823
      %v828 = vadd.f32 %v806, %v823
      %v829 = vadd.f32 %v807, %v823
      %v830 = vadd.f32 %v808, %v823
      %v831 = vadd.f32 %v809, %v823
      %v832 = vadd.f32 %v810, %v823
      %v833 = vadd.f32 %v811, %v823
      %v834 = vadd.f32 %v812, %v823
      %v835 = vadd.f32 %v813, %v823
      %v836 = vadd.f32 %v814, %v823
      %v837 = vadd.f32 %v815, %v823
      %v838 = vadd.f32 %v816, %v823
      %v839 = vadd.f32 %v817, %v823
      %v840 = vadd.f32 %v818, %v823
      %vm841 = vcmp.ge.f32.partialorder %v825, 0.0
      %vm842 = vcmp.ge.f32.partialorder %v826, 0.0
      %vm843 = vcmp.ge.f32.partialorder %v827, 0.0
      %vm844 = vcmp.ge.f32.partialorder %v828, 0.0
      %vm845 = vcmp.ge.f32.partialorder %v829, 0.0
      %vm846 = vcmp.ge.f32.partialorder %v830, 0.0
      %vm847 = vcmp.ge.f32.partialorder %v831, 0.0
      %vm848 = vcmp.ge.f32.partialorder %v832, 0.0
      %vm849 = vcmp.ge.f32.partialorder %v833, 0.0
      %vm850 = vcmp.ge.f32.partialorder %v834, 0.0
      %vm851 = vcmp.ge.f32.partialorder %v835, 0.0
      %vm852 = vcmp.ge.f32.partialorder %v836, 0.0
      %vm853 = vcmp.ge.f32.partialorder %v837, 0.0
      %vm854 = vcmp.ge.f32.partialorder %v838, 0.0
      %vm855 = vcmp.ge.f32.partialorder %v839, 0.0
      %vm856 = vcmp.ge.f32.partialorder %v840, 0.0
      %v858 = vlaneseq
      %v859 = vshrl.u32 %v858, 7
      %v860 = vsub.s32 0, %v859
      %v861 = vrot.slane %v317, %v860
      %v863 = vmul.f32 %v825, %v861
      %v864 = vmul.f32 %v826, %v861
      %v865 = vmul.f32 %v827, %v861
      %v866 = vmul.f32 %v828, %v861
      %v867 = vmul.f32 %v829, %v861
      %v868 = vmul.f32 %v830, %v861
      %v869 = vmul.f32 %v831, %v861
      %v870 = vmul.f32 %v832, %v861
      %v871 = vmul.f32 %v833, %v861
      %v872 = vmul.f32 %v834, %v861
      %v873 = vmul.f32 %v835, %v861
      %v874 = vmul.f32 %v836, %v861
      %v875 = vmul.f32 %v837, %v861
      %v876 = vmul.f32 %v838, %v861
      %v877 = vmul.f32 %v839, %v861
      %v878 = vmul.f32 %v840, %v861
      %v879 = vsel %vm841, %v825, %v863
      %v880 = vsel %vm842, %v826, %v864
      %v881 = vsel %vm843, %v827, %v865
      %v882 = vsel %vm844, %v828, %v866
      %v883 = vsel %vm845, %v829, %v867
      %v884 = vsel %vm846, %v830, %v868
      %v885 = vsel %vm847, %v831, %v869
      %v886 = vsel %vm848, %v832, %v870
      %v887 = vsel %vm849, %v833, %v871
      %v888 = vsel %vm850, %v834, %v872
      %v889 = vsel %vm851, %v835, %v873
      %v890 = vsel %vm852, %v836, %v874
      %v891 = vsel %vm853, %v837, %v875
      %v892 = vsel %vm854, %v838, %v876
      %v893 = vsel %vm855, %v839, %v877
      %v894 = vsel %vm856, %v840, %v878
      %895 = vst [vmem:[%s314] sm:$0xff] %v879
      %896 = vst [vmem:[%s314 + $0x8] sm:$0xff] %v880
      %897 = vst [vmem:[%s314 + $0x10] sm:$0xff] %v881
      %898 = vst [vmem:[%s314 + $0x18] sm:$0xff] %v882
      %899 = vst [vmem:[%s314 + $0x20] sm:$0xff] %v883
      %900 = vst [vmem:[%s314 + $0x28] sm:$0xff] %v884
      %901 = vst [vmem:[%s314 + $0x30] sm:$0xff] %v885
      %902 = vst [vmem:[%s314 + $0x38] sm:$0xff] %v886
      %903 = vst [vmem:[%s314 + $0x40] sm:$0xff] %v887
      %904 = vst [vmem:[%s314 + $0x48] sm:$0xff] %v888
      %905 = vst [vmem:[%s314 + $0x50] sm:$0xff] %v889
      %906 = vst [vmem:[%s314 + $0x58] sm:$0xff] %v890
      %907 = vst [vmem:[%s314 + $0x60] sm:$0xff] %v891
      %908 = vst [vmem:[%s314 + $0x68] sm:$0xff] %v892
      %909 = vst [vmem:[%s314 + $0x70] sm:$0xff] %v893
      %910 = vst [vmem:[%s314 + $0x78] sm:$0xff] %v894
      %s911 = scalar_lea.vmem %s293, 192
      %v912 = vld [vmem:[%s911] sm:$0xff]
      %v913 = vld [vmem:[%s911 + $0x8] sm:$0xff]
      %v914 = vld [vmem:[%s911 + $0x18] sm:$0xff]
      %v915 = vld [vmem:[%s911 + $0x20] sm:$0xff]
      %v916 = vld [vmem:[%s911 + $0x30] sm:$0xff]
      %v917 = vld [vmem:[%s911 + $0x38] sm:$0xff]
      %v918 = vld [vmem:[%s911 + $0x48] sm:$0xff]
      %v919 = vld [vmem:[%s911 + $0x50] sm:$0xff]
      %v920 = vld [vmem:[%s911 + $0x60] sm:$0xff]
      %v921 = vld [vmem:[%s911 + $0x68] sm:$0xff]
      %v922 = vld [vmem:[%s911 + $0x78] sm:$0xff]
      %v923 = vld [vmem:[%s911 + $0x80] sm:$0xff]
      %v924 = vld [vmem:[%s911 + $0x90] sm:$0xff]
      %v925 = vld [vmem:[%s911 + $0x98] sm:$0xff]
      %v926 = vld [vmem:[%s911 + $0xa8] sm:$0xff]
      %v927 = vld [vmem:[%s911 + $0xb0] sm:$0xff]
      %v928 = vmul.f32 %v912, %v346
      %v929 = vmul.f32 %v913, %v346
      %v930 = vmul.f32 %v914, %v346
      %v931 = vmul.f32 %v915, %v346
      %v932 = vmul.f32 %v916, %v346
      %v933 = vmul.f32 %v917, %v346
      %v934 = vmul.f32 %v918, %v346
      %v935 = vmul.f32 %v919, %v346
      %v936 = vmul.f32 %v920, %v346
      %v937 = vmul.f32 %v921, %v346
      %v938 = vmul.f32 %v922, %v346
      %v939 = vmul.f32 %v923, %v346
      %v940 = vmul.f32 %v924, %v346
      %v941 = vmul.f32 %v925, %v346
      %v942 = vmul.f32 %v926, %v346
      %v943 = vmul.f32 %v927, %v346
      %v944 = vadd.f32 %v928, 0.0
      %v945 = vadd.f32 %v929, 0.0
      %v946 = vadd.f32 %v930, 0.0
      %v947 = vadd.f32 %v931, 0.0
      %v948 = vadd.f32 %v932, 0.0
      %v949 = vadd.f32 %v933, 0.0
      %v950 = vadd.f32 %v934, 0.0
      %v951 = vadd.f32 %v935, 0.0
      %v952 = vadd.f32 %v936, 0.0
      %v953 = vadd.f32 %v937, 0.0
      %v954 = vadd.f32 %v938, 0.0
      %v955 = vadd.f32 %v939, 0.0
      %v956 = vadd.f32 %v940, 0.0
      %v957 = vadd.f32 %v941, 0.0
      %v958 = vadd.f32 %v942, 0.0
      %v959 = vadd.f32 %v943, 0.0
      %v960 = vld [vmem:[%s911 + $0x1] sm:$0xff]
      %v961 = vld [vmem:[%s911 + $0x9] sm:$0xff]
      %v962 = vld [vmem:[%s911 + $0x19] sm:$0xff]
      %v963 = vld [vmem:[%s911 + $0x21] sm:$0xff]
      %v964 = vld [vmem:[%s911 + $0x31] sm:$0xff]
      %v965 = vld [vmem:[%s911 + $0x39] sm:$0xff]
      %v966 = vld [vmem:[%s911 + $0x49] sm:$0xff]
      %v967 = vld [vmem:[%s911 + $0x51] sm:$0xff]
      %v968 = vld [vmem:[%s911 + $0x61] sm:$0xff]
      %v969 = vld [vmem:[%s911 + $0x69] sm:$0xff]
      %v970 = vld [vmem:[%s911 + $0x79] sm:$0xff]
      %v971 = vld [vmem:[%s911 + $0x81] sm:$0xff]
      %v972 = vld [vmem:[%s911 + $0x91] sm:$0xff]
      %v973 = vld [vmem:[%s911 + $0x99] sm:$0xff]
      %v974 = vld [vmem:[%s911 + $0xa9] sm:$0xff]
      %v975 = vld [vmem:[%s911 + $0xb1] sm:$0xff]
      %v976 = vmul.f32 %v960, %v398
      %v977 = vmul.f32 %v961, %v398
      %v978 = vmul.f32 %v962, %v398
      %v979 = vmul.f32 %v963, %v398
      %v980 = vmul.f32 %v964, %v398
      %v981 = vmul.f32 %v965, %v398
      %v982 = vmul.f32 %v966, %v398
      %v983 = vmul.f32 %v967, %v398
      %v984 = vmul.f32 %v968, %v398
      %v985 = vmul.f32 %v969, %v398
      %v986 = vmul.f32 %v970, %v398
      %v987 = vmul.f32 %v971, %v398
      %v988 = vmul.f32 %v972, %v398
      %v989 = vmul.f32 %v973, %v398
      %v990 = vmul.f32 %v974, %v398
      %v991 = vmul.f32 %v975, %v398
      %v992 = vadd.f32 %v944, %v976
      %v993 = vadd.f32 %v945, %v977
      %v994 = vadd.f32 %v946, %v978
      %v995 = vadd.f32 %v947, %v979
      %v996 = vadd.f32 %v948, %v980
      %v997 = vadd.f32 %v949, %v981
      %v998 = vadd.f32 %v950, %v982
      %v999 = vadd.f32 %v951, %v983
      %v1000 = vadd.f32 %v952, %v984
      %v1001 = vadd.f32 %v953, %v985
      %v1002 = vadd.f32 %v954, %v986
      %v1003 = vadd.f32 %v955, %v987
      %v1004 = vadd.f32 %v956, %v988
      %v1005 = vadd.f32 %v957, %v989
      %v1006 = vadd.f32 %v958, %v990
      %v1007 = vadd.f32 %v959, %v991
      %v1008 = vld [vmem:[%s911 + $0x2] sm:$0xff]
      %v1009 = vld [vmem:[%s911 + $0xa] sm:$0xff]
      %v1010 = vld [vmem:[%s911 + $0x1a] sm:$0xff]
      %v1011 = vld [vmem:[%s911 + $0x22] sm:$0xff]
      %v1012 = vld [vmem:[%s911 + $0x32] sm:$0xff]
      %v1013 = vld [vmem:[%s911 + $0x3a] sm:$0xff]
      %v1014 = vld [vmem:[%s911 + $0x4a] sm:$0xff]
      %v1015 = vld [vmem:[%s911 + $0x52] sm:$0xff]
      %v1016 = vld [vmem:[%s911 + $0x62] sm:$0xff]
      %v1017 = vld [vmem:[%s911 + $0x6a] sm:$0xff]
      %v1018 = vld [vmem:[%s911 + $0x7a] sm:$0xff]
      %v1019 = vld [vmem:[%s911 + $0x82] sm:$0xff]
      %v1020 = vld [vmem:[%s911 + $0x92] sm:$0xff]
      %v1021 = vld [vmem:[%s911 + $0x9a] sm:$0xff]
      %v1022 = vld [vmem:[%s911 + $0xaa] sm:$0xff]
      %v1023 = vld [vmem:[%s911 + $0xb2] sm:$0xff]
      %v1024 = vmul.f32 %v1008, %v450
      %v1025 = vmul.f32 %v1009, %v450
      %v1026 = vmul.f32 %v1010, %v450
      %v1027 = vmul.f32 %v1011, %v450
      %v1028 = vmul.f32 %v1012, %v450
      %v1029 = vmul.f32 %v1013, %v450
      %v1030 = vmul.f32 %v1014, %v450
      %v1031 = vmul.f32 %v1015, %v450
      %v1032 = vmul.f32 %v1016, %v450
      %v1033 = vmul.f32 %v1017, %v450
      %v1034 = vmul.f32 %v1018, %v450
      %v1035 = vmul.f32 %v1019, %v450
      %v1036 = vmul.f32 %v1020, %v450
      %v1037 = vmul.f32 %v1021, %v450
      %v1038 = vmul.f32 %v1022, %v450
      %v1039 = vmul.f32 %v1023, %v450
      %v1040 = vadd.f32 %v992, %v1024
      %v1041 = vadd.f32 %v993, %v1025
      %v1042 = vadd.f32 %v994, %v1026
      %v1043 = vadd.f32 %v995, %v1027
      %v1044 = vadd.f32 %v996, %v1028
      %v1045 = vadd.f32 %v997, %v1029
      %v1046 = vadd.f32 %v998, %v1030
      %v1047 = vadd.f32 %v999, %v1031
      %v1048 = vadd.f32 %v1000, %v1032
      %v1049 = vadd.f32 %v1001, %v1033
      %v1050 = vadd.f32 %v1002, %v1034
      %v1051 = vadd.f32 %v1003, %v1035
      %v1052 = vadd.f32 %v1004, %v1036
      %v1053 = vadd.f32 %v1005, %v1037
      %v1054 = vadd.f32 %v1006, %v1038
      %v1055 = vadd.f32 %v1007, %v1039
      %s1056 = scalar_lea.vmem %s293, 216
      %v1057 = vld [vmem:[%s1056] sm:$0xff]
      %v1058 = vld [vmem:[%s1056 + $0x8] sm:$0xff]
      %v1059 = vld [vmem:[%s1056 + $0x18] sm:$0xff]
      %v1060 = vld [vmem:[%s1056 + $0x20] sm:$0xff]
      %v1061 = vld [vmem:[%s1056 + $0x30] sm:$0xff]
      %v1062 = vld [vmem:[%s1056 + $0x38] sm:$0xff]
      %v1063 = vld [vmem:[%s1056 + $0x48] sm:$0xff]
      %v1064 = vld [vmem:[%s1056 + $0x50] sm:$0xff]
      %v1065 = vld [vmem:[%s1056 + $0x60] sm:$0xff]
      %v1066 = vld [vmem:[%s1056 + $0x68] sm:$0xff]
      %v1067 = vld [vmem:[%s1056 + $0x78] sm:$0xff]
      %v1068 = vld [vmem:[%s1056 + $0x80] sm:$0xff]
      %v1069 = vld [vmem:[%s1056 + $0x90] sm:$0xff]
      %v1070 = vld [vmem:[%s1056 + $0x98] sm:$0xff]
      %v1071 = vld [vmem:[%s1056 + $0xa8] sm:$0xff]
      %v1072 = vld [vmem:[%s1056 + $0xb0] sm:$0xff]
      %v1073 = vmul.f32 %v1057, %v503
      %v1074 = vmul.f32 %v1058, %v503
      %v1075 = vmul.f32 %v1059, %v503
      %v1076 = vmul.f32 %v1060, %v503
      %v1077 = vmul.f32 %v1061, %v503
      %v1078 = vmul.f32 %v1062, %v503
      %v1079 = vmul.f32 %v1063, %v503
      %v1080 = vmul.f32 %v1064, %v503
      %v1081 = vmul.f32 %v1065, %v503
      %v1082 = vmul.f32 %v1066, %v503
      %v1083 = vmul.f32 %v1067, %v503
      %v1084 = vmul.f32 %v1068, %v503
      %v1085 = vmul.f32 %v1069, %v503
      %v1086 = vmul.f32 %v1070, %v503
      %v1087 = vmul.f32 %v1071, %v503
      %v1088 = vmul.f32 %v1072, %v503
      %v1089 = vadd.f32 %v1040, %v1073
      %v1090 = vadd.f32 %v1041, %v1074
      %v1091 = vadd.f32 %v1042, %v1075
      %v1092 = vadd.f32 %v1043, %v1076
      %v1093 = vadd.f32 %v1044, %v1077
      %v1094 = vadd.f32 %v1045, %v1078
      %v1095 = vadd.f32 %v1046, %v1079
      %v1096 = vadd.f32 %v1047, %v1080
      %v1097 = vadd.f32 %v1048, %v1081
      %v1098 = vadd.f32 %v1049, %v1082
      %v1099 = vadd.f32 %v1050, %v1083
      %v1100 = vadd.f32 %v1051, %v1084
      %v1101 = vadd.f32 %v1052, %v1085
      %v1102 = vadd.f32 %v1053, %v1086
      %v1103 = vadd.f32 %v1054, %v1087
      %v1104 = vadd.f32 %v1055, %v1088
      %v1105 = vld [vmem:[%s1056 + $0x1] sm:$0xff]
      %v1106 = vld [vmem:[%s1056 + $0x9] sm:$0xff]
      %v1107 = vld [vmem:[%s1056 + $0x19] sm:$0xff]
      %v1108 = vld [vmem:[%s1056 + $0x21] sm:$0xff]
      %v1109 = vld [vmem:[%s1056 + $0x31] sm:$0xff]
      %v1110 = vld [vmem:[%s1056 + $0x39] sm:$0xff]
      %v1111 = vld [vmem:[%s1056 + $0x49] sm:$0xff]
      %v1112 = vld [vmem:[%s1056 + $0x51] sm:$0xff]
      %v1113 = vld [vmem:[%s1056 + $0x61] sm:$0xff]
      %v1114 = vld [vmem:[%s1056 + $0x69] sm:$0xff]
      %v1115 = vld [vmem:[%s1056 + $0x79] sm:$0xff]
      %v1116 = vld [vmem:[%s1056 + $0x81] sm:$0xff]
      %v1117 = vld [vmem:[%s1056 + $0x91] sm:$0xff]
      %v1118 = vld [vmem:[%s1056 + $0x99] sm:$0xff]
      %v1119 = vld [vmem:[%s1056 + $0xa9] sm:$0xff]
      %v1120 = vld [vmem:[%s1056 + $0xb1] sm:$0xff]
      %v1121 = vmul.f32 %v1105, %v555
      %v1122 = vmul.f32 %v1106, %v555
      %v1123 = vmul.f32 %v1107, %v555
      %v1124 = vmul.f32 %v1108, %v555
      %v1125 = vmul.f32 %v1109, %v555
      %v1126 = vmul.f32 %v1110, %v555
      %v1127 = vmul.f32 %v1111, %v555
      %v1128 = vmul.f32 %v1112, %v555
      %v1129 = vmul.f32 %v1113, %v555
      %v1130 = vmul.f32 %v1114, %v555
      %v1131 = vmul.f32 %v1115, %v555
      %v1132 = vmul.f32 %v1116, %v555
      %v1133 = vmul.f32 %v1117, %v555
      %v1134 = vmul.f32 %v1118, %v555
      %v1135 = vmul.f32 %v1119, %v555
      %v1136 = vmul.f32 %v1120, %v555
      %v1137 = vadd.f32 %v1089, %v1121
      %v1138 = vadd.f32 %v1090, %v1122
      %v1139 = vadd.f32 %v1091, %v1123
      %v1140 = vadd.f32 %v1092, %v1124
      %v1141 = vadd.f32 %v1093, %v1125
      %v1142 = vadd.f32 %v1094, %v1126
      %v1143 = vadd.f32 %v1095, %v1127
      %v1144 = vadd.f32 %v1096, %v1128
      %v1145 = vadd.f32 %v1097, %v1129
      %v1146 = vadd.f32 %v1098, %v1130
      %v1147 = vadd.f32 %v1099, %v1131
      %v1148 = vadd.f32 %v1100, %v1132
      %v1149 = vadd.f32 %v1101, %v1133
      %v1150 = vadd.f32 %v1102, %v1134
      %v1151 = vadd.f32 %v1103, %v1135
      %v1152 = vadd.f32 %v1104, %v1136
      %v1153 = vld [vmem:[%s1056 + $0x2] sm:$0xff]
      %v1154 = vld [vmem:[%s1056 + $0xa] sm:$0xff]
      %v1155 = vld [vmem:[%s1056 + $0x1a] sm:$0xff]
      %v1156 = vld [vmem:[%s1056 + $0x22] sm:$0xff]
      %v1157 = vld [vmem:[%s1056 + $0x32] sm:$0xff]
      %v1158 = vld [vmem:[%s1056 + $0x3a] sm:$0xff]
      %v1159 = vld [vmem:[%s1056 + $0x4a] sm:$0xff]
      %v1160 = vld [vmem:[%s1056 + $0x52] sm:$0xff]
      %v1161 = vld [vmem:[%s1056 + $0x62] sm:$0xff]
      %v1162 = vld [vmem:[%s1056 + $0x6a] sm:$0xff]
      %v1163 = vld [vmem:[%s1056 + $0x7a] sm:$0xff]
      %v1164 = vld [vmem:[%s1056 + $0x82] sm:$0xff]
      %v1165 = vld [vmem:[%s1056 + $0x92] sm:$0xff]
      %v1166 = vld [vmem:[%s1056 + $0x9a] sm:$0xff]
      %v1167 = vld [vmem:[%s1056 + $0xaa] sm:$0xff]
      %v1168 = vld [vmem:[%s1056 + $0xb2] sm:$0xff]
      %v1169 = vmul.f32 %v1153, %v607
      %v1170 = vmul.f32 %v1154, %v607
      %v1171 = vmul.f32 %v1155, %v607
      %v1172 = vmul.f32 %v1156, %v607
      %v1173 = vmul.f32 %v1157, %v607
      %v1174 = vmul.f32 %v1158, %v607
      %v1175 = vmul.f32 %v1159, %v607
      %v1176 = vmul.f32 %v1160, %v607
      %v1177 = vmul.f32 %v1161, %v607
      %v1178 = vmul.f32 %v1162, %v607
      %v1179 = vmul.f32 %v1163, %v607
      %v1180 = vmul.f32 %v1164, %v607
      %v1181 = vmul.f32 %v1165, %v607
      %v1182 = vmul.f32 %v1166, %v607
      %v1183 = vmul.f32 %v1167, %v607
      %v1184 = vmul.f32 %v1168, %v607
      %v1185 = vadd.f32 %v1137, %v1169
      %v1186 = vadd.f32 %v1138, %v1170
      %v1187 = vadd.f32 %v1139, %v1171
      %v1188 = vadd.f32 %v1140, %v1172
      %v1189 = vadd.f32 %v1141, %v1173
      %v1190 = vadd.f32 %v1142, %v1174
      %v1191 = vadd.f32 %v1143, %v1175
      %v1192 = vadd.f32 %v1144, %v1176
      %v1193 = vadd.f32 %v1145, %v1177
      %v1194 = vadd.f32 %v1146, %v1178
      %v1195 = vadd.f32 %v1147, %v1179
      %v1196 = vadd.f32 %v1148, %v1180
      %v1197 = vadd.f32 %v1149, %v1181
      %v1198 = vadd.f32 %v1150, %v1182
      %v1199 = vadd.f32 %v1151, %v1183
      %v1200 = vadd.f32 %v1152, %v1184
      %s1201 = scalar_lea.vmem %s293, 240
      %v1202 = vld [vmem:[%s1201] sm:$0xff]
      %v1203 = vld [vmem:[%s1201 + $0x8] sm:$0xff]
      %v1204 = vld [vmem:[%s1201 + $0x18] sm:$0xff]
      %v1205 = vld [vmem:[%s1201 + $0x20] sm:$0xff]
      %v1206 = vld [vmem:[%s1201 + $0x30] sm:$0xff]
      %v1207 = vld [vmem:[%s1201 + $0x38] sm:$0xff]
      %v1208 = vld [vmem:[%s1201 + $0x48] sm:$0xff]
      %v1209 = vld [vmem:[%s1201 + $0x50] sm:$0xff]
      %v1210 = vld [vmem:[%s1201 + $0x60] sm:$0xff]
      %v1211 = vld [vmem:[%s1201 + $0x68] sm:$0xff]
      %v1212 = vld [vmem:[%s1201 + $0x78] sm:$0xff]
      %v1213 = vld [vmem:[%s1201 + $0x80] sm:$0xff]
      %v1214 = vld [vmem:[%s1201 + $0x90] sm:$0xff]
      %v1215 = vld [vmem:[%s1201 + $0x98] sm:$0xff]
      %v1216 = vld [vmem:[%s1201 + $0xa8] sm:$0xff]
      %v1217 = vld [vmem:[%s1201 + $0xb0] sm:$0xff]
      %v1218 = vmul.f32 %v1202, %v660
      %v1219 = vmul.f32 %v1203, %v660
      %v1220 = vmul.f32 %v1204, %v660
      %v1221 = vmul.f32 %v1205, %v660
      %v1222 = vmul.f32 %v1206, %v660
      %v1223 = vmul.f32 %v1207, %v660
      %v1224 = vmul.f32 %v1208, %v660
      %v1225 = vmul.f32 %v1209, %v660
      %v1226 = vmul.f32 %v1210, %v660
      %v1227 = vmul.f32 %v1211, %v660
      %v1228 = vmul.f32 %v1212, %v660
      %v1229 = vmul.f32 %v1213, %v660
      %v1230 = vmul.f32 %v1214, %v660
      %v1231 = vmul.f32 %v1215, %v660
      %v1232 = vmul.f32 %v1216, %v660
      %v1233 = vmul.f32 %v1217, %v660
      %v1234 = vadd.f32 %v1185, %v1218
      %v1235 = vadd.f32 %v1186, %v1219
      %v1236 = vadd.f32 %v1187, %v1220
      %v1237 = vadd.f32 %v1188, %v1221
      %v1238 = vadd.f32 %v1189, %v1222
      %v1239 = vadd.f32 %v1190, %v1223
      %v1240 = vadd.f32 %v1191, %v1224
      %v1241 = vadd.f32 %v1192, %v1225
      %v1242 = vadd.f32 %v1193, %v1226
      %v1243 = vadd.f32 %v1194, %v1227
      %v1244 = vadd.f32 %v1195, %v1228
      %v1245 = vadd.f32 %v1196, %v1229
      %v1246 = vadd.f32 %v1197, %v1230
      %v1247 = vadd.f32 %v1198, %v1231
      %v1248 = vadd.f32 %v1199, %v1232
      %v1249 = vadd.f32 %v1200, %v1233
      %v1250 = vld [vmem:[%s1201 + $0x1] sm:$0xff]
      %v1251 = vld [vmem:[%s1201 + $0x9] sm:$0xff]
      %v1252 = vld [vmem:[%s1201 + $0x19] sm:$0xff]
      %v1253 = vld [vmem:[%s1201 + $0x21] sm:$0xff]
      %v1254 = vld [vmem:[%s1201 + $0x31] sm:$0xff]
      %v1255 = vld [vmem:[%s1201 + $0x39] sm:$0xff]
      %v1256 = vld [vmem:[%s1201 + $0x49] sm:$0xff]
      %v1257 = vld [vmem:[%s1201 + $0x51] sm:$0xff]
      %v1258 = vld [vmem:[%s1201 + $0x61] sm:$0xff]
      %v1259 = vld [vmem:[%s1201 + $0x69] sm:$0xff]
      %v1260 = vld [vmem:[%s1201 + $0x79] sm:$0xff]
      %v1261 = vld [vmem:[%s1201 + $0x81] sm:$0xff]
      %v1262 = vld [vmem:[%s1201 + $0x91] sm:$0xff]
      %v1263 = vld [vmem:[%s1201 + $0x99] sm:$0xff]
      %v1264 = vld [vmem:[%s1201 + $0xa9] sm:$0xff]
      %v1265 = vld [vmem:[%s1201 + $0xb1] sm:$0xff]
      %v1266 = vmul.f32 %v1250, %v712
      %v1267 = vmul.f32 %v1251, %v712
      %v1268 = vmul.f32 %v1252, %v712
      %v1269 = vmul.f32 %v1253, %v712
      %v1270 = vmul.f32 %v1254, %v712
      %v1271 = vmul.f32 %v1255, %v712
      %v1272 = vmul.f32 %v1256, %v712
      %v1273 = vmul.f32 %v1257, %v712
      %v1274 = vmul.f32 %v1258, %v712
      %v1275 = vmul.f32 %v1259, %v712
      %v1276 = vmul.f32 %v1260, %v712
      %v1277 = vmul.f32 %v1261, %v712
      %v1278 = vmul.f32 %v1262, %v712
      %v1279 = vmul.f32 %v1263, %v712
      %v1280 = vmul.f32 %v1264, %v712
      %v1281 = vmul.f32 %v1265, %v712
      %v1282 = vadd.f32 %v1234, %v1266
      %v1283 = vadd.f32 %v1235, %v1267
      %v1284 = vadd.f32 %v1236, %v1268
      %v1285 = vadd.f32 %v1237, %v1269
      %v1286 = vadd.f32 %v1238, %v1270
      %v1287 = vadd.f32 %v1239, %v1271
      %v1288 = vadd.f32 %v1240, %v1272
      %v1289 = vadd.f32 %v1241, %v1273
      %v1290 = vadd.f32 %v1242, %v1274
      %v1291 = vadd.f32 %v1243, %v1275
      %v1292 = vadd.f32 %v1244, %v1276
      %v1293 = vadd.f32 %v1245, %v1277
      %v1294 = vadd.f32 %v1246, %v1278
      %v1295 = vadd.f32 %v1247, %v1279
      %v1296 = vadd.f32 %v1248, %v1280
      %v1297 = vadd.f32 %v1249, %v1281
      %v1298 = vld [vmem:[%s1201 + $0x2] sm:$0xff]
      %v1299 = vld [vmem:[%s1201 + $0xa] sm:$0xff]
      %v1300 = vld [vmem:[%s1201 + $0x1a] sm:$0xff]
      %v1301 = vld [vmem:[%s1201 + $0x22] sm:$0xff]
      %v1302 = vld [vmem:[%s1201 + $0x32] sm:$0xff]
      %v1303 = vld [vmem:[%s1201 + $0x3a] sm:$0xff]
      %v1304 = vld [vmem:[%s1201 + $0x4a] sm:$0xff]
      %v1305 = vld [vmem:[%s1201 + $0x52] sm:$0xff]
      %v1306 = vld [vmem:[%s1201 + $0x62] sm:$0xff]
      %v1307 = vld [vmem:[%s1201 + $0x6a] sm:$0xff]
      %v1308 = vld [vmem:[%s1201 + $0x7a] sm:$0xff]
      %v1309 = vld [vmem:[%s1201 + $0x82] sm:$0xff]
      %v1310 = vld [vmem:[%s1201 + $0x92] sm:$0xff]
      %v1311 = vld [vmem:[%s1201 + $0x9a] sm:$0xff]
      %v1312 = vld [vmem:[%s1201 + $0xaa] sm:$0xff]
      %v1313 = vld [vmem:[%s1201 + $0xb2] sm:$0xff]
      %v1314 = vmul.f32 %v1298, %v764
      %v1315 = vmul.f32 %v1299, %v764
      %v1316 = vmul.f32 %v1300, %v764
      %v1317 = vmul.f32 %v1301, %v764
      %v1318 = vmul.f32 %v1302, %v764
      %v1319 = vmul.f32 %v1303, %v764
      %v1320 = vmul.f32 %v1304, %v764
      %v1321 = vmul.f32 %v1305, %v764
      %v1322 = vmul.f32 %v1306, %v764
      %v1323 = vmul.f32 %v1307, %v764
      %v1324 = vmul.f32 %v1308, %v764
      %v1325 = vmul.f32 %v1309, %v764
      %v1326 = vmul.f32 %v1310, %v764
      %v1327 = vmul.f32 %v1311, %v764
      %v1328 = vmul.f32 %v1312, %v764
      %v1329 = vmul.f32 %v1313, %v764
      %v1330 = vadd.f32 %v1282, %v1314
      %v1331 = vadd.f32 %v1283, %v1315
      %v1332 = vadd.f32 %v1284, %v1316
      %v1333 = vadd.f32 %v1285, %v1317
      %v1334 = vadd.f32 %v1286, %v1318
      %v1335 = vadd.f32 %v1287, %v1319
      %v1336 = vadd.f32 %v1288, %v1320
      %v1337 = vadd.f32 %v1289, %v1321
      %v1338 = vadd.f32 %v1290, %v1322
      %v1339 = vadd.f32 %v1291, %v1323
      %v1340 = vadd.f32 %v1292, %v1324
      %v1341 = vadd.f32 %v1293, %v1325
      %v1342 = vadd.f32 %v1294, %v1326
      %v1343 = vadd.f32 %v1295, %v1327
      %v1344 = vadd.f32 %v1296, %v1328
      %v1345 = vadd.f32 %v1297, %v1329
      %v1346 = vmul.f32 %v1330, %v801
      %v1347 = vmul.f32 %v1331, %v801
      %v1348 = vmul.f32 %v1332, %v801
      %v1349 = vmul.f32 %v1333, %v801
      %v1350 = vmul.f32 %v1334, %v801
      %v1351 = vmul.f32 %v1335, %v801
      %v1352 = vmul.f32 %v1336, %v801
      %v1353 = vmul.f32 %v1337, %v801
      %v1354 = vmul.f32 %v1338, %v801
      %v1355 = vmul.f32 %v1339, %v801
      %v1356 = vmul.f32 %v1340, %v801
      %v1357 = vmul.f32 %v1341, %v801
      %v1358 = vmul.f32 %v1342, %v801
      %v1359 = vmul.f32 %v1343, %v801
      %v1360 = vmul.f32 %v1344, %v801
      %v1361 = vmul.f32 %v1345, %v801
      %v1362 = vadd.f32 %v1346, %v823
      %v1363 = vadd.f32 %v1347, %v823
      %v1364 = vadd.f32 %v1348, %v823
      %v1365 = vadd.f32 %v1349, %v823
      %v1366 = vadd.f32 %v1350, %v823
      %v1367 = vadd.f32 %v1351, %v823
      %v1368 = vadd.f32 %v1352, %v823
      %v1369 = vadd.f32 %v1353, %v823
      %v1370 = vadd.f32 %v1354, %v823
      %v1371 = vadd.f32 %v1355, %v823
      %v1372 = vadd.f32 %v1356, %v823
      %v1373 = vadd.f32 %v1357, %v823
      %v1374 = vadd.f32 %v1358, %v823
      %v1375 = vadd.f32 %v1359, %v823
      %v1376 = vadd.f32 %v1360, %v823
      %v1377 = vadd.f32 %v1361, %v823
      %vm1378 = vcmp.ge.f32.partialorder %v1362, 0.0
      %vm1379 = vcmp.ge.f32.partialorder %v1363, 0.0
      %vm1380 = vcmp.ge.f32.partialorder %v1364, 0.0
      %vm1381 = vcmp.ge.f32.partialorder %v1365, 0.0
      %vm1382 = vcmp.ge.f32.partialorder %v1366, 0.0
      %vm1383 = vcmp.ge.f32.partialorder %v1367, 0.0
      %vm1384 = vcmp.ge.f32.partialorder %v1368, 0.0
      %vm1385 = vcmp.ge.f32.partialorder %v1369, 0.0
      %vm1386 = vcmp.ge.f32.partialorder %v1370, 0.0
      %vm1387 = vcmp.ge.f32.partialorder %v1371, 0.0
      %vm1388 = vcmp.ge.f32.partialorder %v1372, 0.0
      %vm1389 = vcmp.ge.f32.partialorder %v1373, 0.0
      %vm1390 = vcmp.ge.f32.partialorder %v1374, 0.0
      %vm1391 = vcmp.ge.f32.partialorder %v1375, 0.0
      %vm1392 = vcmp.ge.f32.partialorder %v1376, 0.0
      %vm1393 = vcmp.ge.f32.partialorder %v1377, 0.0
      %v1394 = vmul.f32 %v1362, %v861
      %v1395 = vmul.f32 %v1363, %v861
      %v1396 = vmul.f32 %v1364, %v861
      %v1397 = vmul.f32 %v1365, %v861
      %v1398 = vmul.f32 %v1366, %v861
      %v1399 = vmul.f32 %v1367, %v861
      %v1400 = vmul.f32 %v1368, %v861
      %v1401 = vmul.f32 %v1369, %v861
      %v1402 = vmul.f32 %v1370, %v861
      %v1403 = vmul.f32 %v1371, %v861
      %v1404 = vmul.f32 %v1372, %v861
      %v1405 = vmul.f32 %v1373, %v861
      %v1406 = vmul.f32 %v1374, %v861
      %v1407 = vmul.f32 %v1375, %v861
      %v1408 = vmul.f32 %v1376, %v861
      %v1409 = vmul.f32 %v1377, %v861
      %v1410 = vsel %vm1378, %v1362, %v1394
      %v1411 = vsel %vm1379, %v1363, %v1395
      %v1412 = vsel %vm1380, %v1364, %v1396
      %v1413 = vsel %vm1381, %v1365, %v1397
      %v1414 = vsel %vm1382, %v1366, %v1398
      %v1415 = vsel %vm1383, %v1367, %v1399
      %v1416 = vsel %vm1384, %v1368, %v1400
      %v1417 = vsel %vm1385, %v1369, %v1401
      %v1418 = vsel %vm1386, %v1370, %v1402
      %v1419 = vsel %vm1387, %v1371, %v1403
      %v1420 = vsel %vm1388, %v1372, %v1404
      %v1421 = vsel %vm1389, %v1373, %v1405
      %v1422 = vsel %vm1390, %v1374, %v1406
      %v1423 = vsel %vm1391, %v1375, %v1407
      %v1424 = vsel %vm1392, %v1376, %v1408
      %v1425 = vsel %vm1393, %v1377, %v1409
      %s1426 = scalar_lea.vmem %s314, 128
      %1427 = vst [vmem:[%s1426] sm:$0xff] %v1410
      %1428 = vst [vmem:[%s1426 + $0x8] sm:$0xff] %v1411
      %1429 = vst [vmem:[%s1426 + $0x10] sm:$0xff] %v1412
      %1430 = vst [vmem:[%s1426 + $0x18] sm:$0xff] %v1413
      %1431 = vst [vmem:[%s1426 + $0x20] sm:$0xff] %v1414
      %1432 = vst [vmem:[%s1426 + $0x28] sm:$0xff] %v1415
      %1433 = vst [vmem:[%s1426 + $0x30] sm:$0xff] %v1416
      %1434 = vst [vmem:[%s1426 + $0x38] sm:$0xff] %v1417
      %1435 = vst [vmem:[%s1426 + $0x40] sm:$0xff] %v1418
      %1436 = vst [vmem:[%s1426 + $0x48] sm:$0xff] %v1419
      %1437 = vst [vmem:[%s1426 + $0x50] sm:$0xff] %v1420
      %1438 = vst [vmem:[%s1426 + $0x58] sm:$0xff] %v1421
      %1439 = vst [vmem:[%s1426 + $0x60] sm:$0xff] %v1422
      %1440 = vst [vmem:[%s1426 + $0x68] sm:$0xff] %v1423
      %1441 = vst [vmem:[%s1426 + $0x70] sm:$0xff] %v1424
      %1442 = vst [vmem:[%s1426 + $0x78] sm:$0xff] %v1425
      %p1443 = scmp.lt.s32.totalorder %s20, 1
      %s1444 = scalar_select %p1443, %s20, 1
      %p1445 = scmp.lt.s32.totalorder %s21, 0
      %s1446 = scalar_select %p1445, %s21, 0
      %s1447 = smul.addr %s1444, 32
      %s1448 = sadd.s32 %s1446, %s1447
      %s1449 = smul.addr %s1448, 8
      %s1450 = scalar_lea.vmem %s5, %s1449
      // Predicated region
      $region41: #{dw_residual.4} parent=39 // pred_check
        %p1451 = pneg %p180
      $region42: #{dw_residual.4} parent=39 // pred_check_branch
        %1453 = sbr.rel (%p1451) target = $region44
      $region43: #{dw_residual.4} parent=39 // pred_region
        _
      $region44: #{dw_residual.4} parent=39 // pred_fallthru
        _
    $region40: #{dw_residual.4} parent=5 // pred_fallthru
      _
    %p1454 = scmp.le.s32.totalorder 2, %s11
    // Predicated region
    $region45: #{dw_residual.4} parent=5 // pred_check
      %p1455 = pneg %p1454
    $region46: #{dw_residual.4} parent=5 // pred_check_branch
      %1457 = sbr.rel (%p1455) target = $region48
    $region47: #{dw_residual.4} parent=5 // pred_region
      %s1458 = ssub.s32 %s11, 2
      // Predicated region
      $region49: #{dw_residual.4} parent=47 // pred_check
        %p1459 = pneg %p186
      $region50: #{dw_residual.4} parent=47 // pred_check_branch
        %1461 = sbr.rel (%p1459) target = $region52
      $region51: #{dw_residual.4} parent=47 // pred_region
        %p1462 = scmp.lt.s32.totalorder %s22, 1
        %s1463 = scalar_select %p1462, %s22, 1
        %p1464 = scmp.lt.s32.totalorder %s23, 0
        %s1465 = scalar_select %p1464, %s23, 0
        %s1466 = smul.addr %s1463, 32
        %s1467 = sadd.s32 %s1465, %s1466
        %s1468 = smul.addr %s1467, 8
        %s1469 = scalar_lea.vmem %s5, %s1468
      $region52: #{dw_residual.4} parent=47 // pred_fallthru
        _
    $region48: #{dw_residual.4} parent=5 // pred_fallthru
      _
  $region6: #{dw_residual.4} parent=0 // loop_footer
    %s15 = sadd.s32 1, %s11
  $region7: #{dw_residual.4} parent=0 // loop_footer_branch
    %10 = sbr.rel target = $region3
  $region8: #{dw_residual.4} parent=0 // loop_exit
    _

</llo_original>
